<compile_context>
chip_gen: v7x
topology: tpu7x:2x2x1
jax: 0.10.0
libtpu: 0.0.40
codegen_flags: <defaults>
</compile_context>

<pallas_src>
import functools

import jax
import jax.numpy as jnp
from jax import lax
from jax.experimental import pallas as pl
from jax.experimental.pallas import tpu as pltpu


IN_CHNLS = 9
EMBED_DIM = 16
WBSET_NUM = 3
MLP_RATIO = 4
HIDDEN = EMBED_DIM * MLP_RATIO          # 64
SCALE = 1.0 / (EMBED_DIM ** 0.5)

# Packed parameter slabs (row offsets are multiples of 8 -> clean sublane slices)
W_SLAB_ROWS = 168                        # weights:  (168, 64) f32
B_SLAB_ROWS = 232                        # biases/LN: (232, 1) f32


def _ln_cf(x, g, b, eps=1e-5):
    """LayerNorm over the channel axis (axis 0) of a channels-first (C, T) tile."""
    mu = jnp.mean(x, axis=0, keepdims=True)
    var = jnp.mean((x - mu) ** 2, axis=0, keepdims=True)
    return (x - mu) * lax.rsqrt(var + eps) * g + b


def pdflab_kernel(
    x_q_ref,                 # (1, 9, TQ)  input tile for the query rows
    x_kv_ref,                # (1, 9, TK)  input tile for the current KV rows
    w_ref,                   # (168, 64)   packed weight slab
    b_ref,                   # (232, 1)    packed bias / LayerNorm slab
    out_ref,                 # (1, 3, TQ)  blended output
    w_out_ref,               # (1, 3, TQ)  blending weights
    hq_ref,                  # (16, TQ) f32   token-projection residual (channels-first)
    qT_ref,                  # (TQ, 16) bf16  pre-scaled Q (tokens-first)
    m_ref,                   # (TQ, 1)  f32   running max
    l_ref,                   # (TQ, 1)  f32   running denominator
    acc_ref,                 # (TQ, 16) f32   attention accumulator
):
    ki = pl.program_id(2)
    nkv = pl.num_programs(2)

    Wm = w_ref[...]
    Bm = b_ref[...]
    w_in, b_in = Wm[0:16, 0:9], Bm[0:16]
    ln1_g, ln1_b = Bm[168:184], Bm[184:200]

    # ---------------- per-query-tile init (once per q tile) ----------------
    @pl.when(ki == 0)
    def _init():
        x_q = x_q_ref[0]                                                   # (9, TQ)
        h_q = jnp.dot(w_in, x_q, preferred_element_type=jnp.float32) + b_in
        hq_ref[...] = h_q                                                  # (16, TQ)
        hn = _ln_cf(h_q, ln1_g, ln1_b)
        q = jnp.dot(Wm[16:32, 0:16], hn,
                    preferred_element_type=jnp.float32) + Bm[16:32]        # (16, TQ)
        qT_ref[...] = (q * SCALE).T.astype(jnp.bfloat16)                   # (TQ, 16)
        m_ref[...] = jnp.full_like(m_ref, -jnp.inf)
        l_ref[...] = jnp.zeros_like(l_ref)
        acc_ref[...] = jnp.zeros_like(acc_ref)

    # ---------------- KV tile: projection + fused K/V ----------------------
    x_kv = x_kv_ref[0]                                                     # (9, TK)
    h_kv = jnp.dot(w_in, x_kv, preferred_element_type=jnp.float32) + b_in
    hn_kv = _ln_cf(h_kv, ln1_g, ln1_b)
    kv = jnp.dot(Wm[32:64, 0:16], hn_kv,
                 preferred_element_type=jnp.float32) + Bm[32:64]           # (32, TK)
    k = kv[0:16].astype(jnp.bfloat16)                                      # (16, TK)
    v = kv[16:32].astype(jnp.bfloat16)                                     # (16, TK)

    # ---------------- flash-attention online-softmax step ------------------
    qT = qT_ref[...]                                                       # (TQ, 16) bf16
    s = jnp.dot(qT, k, preferred_element_type=jnp.float32)                 # (TQ, TK)
    m_prev = m_ref[...]
    m_new = jnp.maximum(m_prev, jnp.max(s, axis=-1, keepdims=True))        # (TQ, 1)
    alpha = jnp.exp(m_prev - m_new)
    p = jnp.exp(s - m_new)                                                 # (TQ, TK)
    l_ref[...] = alpha * l_ref[...] + jnp.sum(p, axis=-1, keepdims=True)
    acc_ref[...] = alpha * acc_ref[...] + lax.dot_general(
        p.astype(jnp.bfloat16), v, (((1,), (1,)), ((), ())),
        preferred_element_type=jnp.float32)                                # (TQ, 16)
    m_ref[...] = m_new

    # ---------------- epilogue: out-proj, MLP, head, WB blend --------------
    @pl.when(ki == nkv - 1)
    def _finalize():
        ctx_t = acc_ref[...] * pl.reciprocal(l_ref[...], approx=True)      # (TQ, 16)
        # W_o @ ctx^T  (NT form) -> channels-first (16, TQ)
        ctx = lax.dot_general(Wm[64:80, 0:16], ctx_t,
                              (((1,), (1,)), ((), ())),
                              preferred_element_type=jnp.float32) + Bm[64:80]
        h = hq_ref[...] + ctx                                              # (16, TQ)

        hn2 = _ln_cf(h, Bm[200:216], Bm[216:232])
        mm = jax.nn.gelu(
            jnp.dot(Wm[80:144, 0:16], hn2,
                    preferred_element_type=jnp.float32) + Bm[80:144],
            approximate=True)                                              # (64, TQ)
        mm = jnp.dot(Wm[144:160, 0:64], mm,
                     preferred_element_type=jnp.float32) + Bm[144:160]     # (16, TQ)
        h = h + mm

        logits = jnp.dot(Wm[160:163, 0:16], h,
                         preferred_element_type=jnp.float32) + Bm[160:163]  # (3, TQ)
        lmax = jnp.max(logits, axis=0, keepdims=True)
        e = jnp.exp(logits - lmax)
        wgt = e * pl.reciprocal(jnp.sum(e, axis=0, keepdims=True), approx=True)

        x_q = x_q_ref[0]                                                   # (9, TQ)
        out_ref[0] = (wgt[0:1] * x_q[0:3]
                      + wgt[1:2] * x_q[3:6]
                      + wgt[2:3] * x_q[6:9])                               # (3, TQ)
        w_out_ref[0] = wgt


# ---------------------------------------------------------------------------
# Parameters
# ---------------------------------------------------------------------------
def init_params(key):
    ks = jax.random.split(key, 20)
    E, Hd, C, S = EMBED_DIM, HIDDEN, IN_CHNLS, WBSET_NUM

    def w(k, o, i):
        return 0.1 * jax.random.normal(k, (o, i), jnp.float32)

    def b(k, n):
        return 0.05 * jax.random.normal(k, (n,), jnp.float32)

    return {
        "w_in": w(ks[0], E, C), "b_in": b(ks[1], E),
        "ln1_g": 1.0 + 0.05 * jax.random.normal(ks[2], (E,), jnp.float32),
        "ln1_b": b(ks[3], E),
        "wq": w(ks[4], E, E), "bq": b(ks[5], E),
        "wk": w(ks[6], E, E), "bk": b(ks[7], E),
        "wv": w(ks[8], E, E), "bv": b(ks[9], E),
        "wo": w(ks[10], E, E), "bo": b(ks[11], E),
        "ln2_g": 1.0 + 0.05 * jax.random.normal(ks[12], (E,), jnp.float32),
        "ln2_b": b(ks[13], E),
        "wm1": w(ks[14], Hd, E), "bm1": b(ks[15], Hd),
        "wm2": w(ks[16], E, Hd), "bm2": b(ks[17], E),
        "wh": w(ks[18], S, E), "bh": b(ks[19], S),
    }


def pack_params(p):
    """Pack the 20 tiny parameter tensors into two contiguous slabs."""
    w = jnp.zeros((W_SLAB_ROWS, 64), jnp.float32)
    w = w.at[0:16, 0:9].set(p["w_in"])
    w = w.at[16:32, 0:16].set(p["wq"])
    w = w.at[32:48, 0:16].set(p["wk"])
    w = w.at[48:64, 0:16].set(p["wv"])
    w = w.at[64:80, 0:16].set(p["wo"])
    w = w.at[80:144, 0:16].set(p["wm1"])
    w = w.at[144:160, 0:64].set(p["wm2"])
    w = w.at[160:163, 0:16].set(p["wh"])

    b = jnp.zeros((B_SLAB_ROWS, 1), jnp.float32)
    b = b.at[0:16, 0].set(p["b_in"])
    b = b.at[16:32, 0].set(p["bq"])
    b = b.at[32:48, 0].set(p["bk"])
    b = b.at[48:64, 0].set(p["bv"])
    b = b.at[64:80, 0].set(p["bo"])
    b = b.at[80:144, 0].set(p["bm1"])
    b = b.at[144:160, 0].set(p["bm2"])
    b = b.at[160:163, 0].set(p["bh"])
    b = b.at[168:184, 0].set(p["ln1_g"])
    b = b.at[184:200, 0].set(p["ln1_b"])
    b = b.at[200:216, 0].set(p["ln2_g"])
    b = b.at[216:232, 0].set(p["ln2_b"])
    return w, b


def _pick_tile(n):
    for t in (512, 256, 128):
        if n % t == 0:
            return t
    return n


# ---------------------------------------------------------------------------
# Wrapper
# ---------------------------------------------------------------------------
@functools.partial(jax.jit, static_argnames=("tile_n",))
def pdflab_net_forward(x, w_slab, b_slab, tile_n=None):
    """x: (B, 9, H, W) float32 NCHW. Returns (out_PDFLab, PDFLab_W), both NCHW."""
    B, C, H, W = x.shape
    N = H * W
    tn = _pick_tile(N) if tile_n is None else tile_n
    assert N % tn == 0, "token count must be divisible by the tile size"
    nt = N // tn

    x_cf = x.reshape(B, C, N)            # channels-first tokens: pure reshape, no copy

    in_specs = [
        pl.BlockSpec((1, C, tn), lambda b, qi, ki: (b, 0, qi)),        # x (query tile)
        pl.BlockSpec((1, C, tn), lambda b, qi, ki: (b, 0, ki)),        # x (kv tile)
        pl.BlockSpec((W_SLAB_ROWS, 64), lambda b, qi, ki: (0, 0)),     # weight slab
        pl.BlockSpec((B_SLAB_ROWS, 1), lambda b, qi, ki: (0, 0)),      # bias / LN slab
    ]
    out_specs = (
        pl.BlockSpec((1, 3, tn), lambda b, qi, ki: (b, 0, qi)),
        pl.BlockSpec((1, WBSET_NUM, tn), lambda b, qi, ki: (b, 0, qi)),
    )
    out_shape = (
        jax.ShapeDtypeStruct((B, 3, N), jnp.float32),
        jax.ShapeDtypeStruct((B, WBSET_NUM, N), jnp.float32),
    )
    scratch = [
        pltpu.VMEM((EMBED_DIM, tn), jnp.float32),     # projection residual
        pltpu.VMEM((tn, EMBED_DIM), jnp.bfloat16),    # pre-scaled Q
        pltpu.VMEM((tn, 1), jnp.float32),             # running max
        pltpu.VMEM((tn, 1), jnp.float32),             # running denominator
        pltpu.VMEM((tn, EMBED_DIM), jnp.float32),     # attention accumulator
    ]

    flops = (4 * B * N * N * EMBED_DIM
             + 2 * B * N * nt * (IN_CHNLS * EMBED_DIM + 2 * EMBED_DIM * EMBED_DIM)
             + 2 * B * N * (IN_CHNLS * EMBED_DIM + 2 * EMBED_DIM * EMBED_DIM
                            + 2 * EMBED_DIM * HIDDEN + EMBED_DIM * WBSET_NUM))
    cost = pl.CostEstimate(
        flops=int(flops),
        transcendentals=int(B * N * N + B * N * (HIDDEN + 8)),
        bytes_accessed=int(4 * (B * N * (C + 3 + WBSET_NUM)
                                + W_SLAB_ROWS * 64 + B_SLAB_ROWS)),
    )

    out_cf, w_cf = pl.pallas_call(
        pdflab_kernel,
        out_shape=out_shape,
        grid_spec=pltpu.PrefetchScalarGridSpec(
            num_scalar_prefetch=0,
            grid=(B, nt, nt),
            in_specs=in_specs,
            out_specs=out_specs,
            scratch_shapes=scratch,
        ),
        compiler_params=pltpu.CompilerParams(
            dimension_semantics=("parallel", "parallel", "arbitrary"),
            vmem_limit_bytes=32 * 1024 * 1024,
        ),
        cost_estimate=cost,
    )(x_cf, x_cf, w_slab, b_slab)

    out_PDFLab = out_cf.reshape(B, 3, H, W)
    PDFLab_W = w_cf.reshape(B, WBSET_NUM, H, W)
    return out_PDFLab, PDFLab_W


# ---------------------------------------------------------------------------
# Pure-JAX reference (same reduced forward, f32 throughout)
# ---------------------------------------------------------------------------
def pdflab_reference(x, p):
    B, C, H, W = x.shape
    N = H * W
    xt = jnp.transpose(x.reshape(B, C, N), (0, 2, 1))                    # (B, N, 9)

    def ln(z, g, bb):
        mu = jnp.mean(z, -1, keepdims=True)
        var = jnp.mean((z - mu) ** 2, -1, keepdims=True)
        return (z - mu) * lax.rsqrt(var + 1e-5) * g + bb

    h = xt @ p["w_in"].T + p["b_in"]
    hn = ln(h, p["ln1_g"], p["ln1_b"])
    q = hn @ p["wq"].T + p["bq"]
    k = hn @ p["wk"].T + p["bk"]
    v = hn @ p["wv"].T + p["bv"]
    s = jnp.einsum("bqe,bke->bqk", q, k) * SCALE
    a = jax.nn.softmax(s, axis=-1)
    ctx = jnp.einsum("bqk,bke->bqe", a, v) @ p["wo"].T + p["bo"]
    h = h + ctx
    hn = ln(h, p["ln2_g"], p["ln2_b"])
    m = jax.nn.gelu(hn @ p["wm1"].T + p["bm1"], approximate=True)
    h = h + m @ p["wm2"].T + p["bm2"]
    logits = h @ p["wh"].T + p["bh"]
    wgt = jax.nn.softmax(logits, axis=-1)                                # (B, N, 3)
    out = (wgt[..., 0:1] * xt[..., 0:3] + wgt[..., 1:2] * xt[..., 3:6]
           + wgt[..., 2:3] * xt[..., 6:9])
    out = jnp.transpose(out, (0, 2, 1)).reshape(B, 3, H, W)
    wmap = jnp.transpose(wgt, (0, 2, 1)).reshape(B, WBSET_NUM, H, W)
    return out, wmap


if __name__ == "__main__":
    key = jax.random.PRNGKey(0)
    kx, kp = jax.random.split(key)

    B, C, H, W = 2, IN_CHNLS, 16, 16
    x = jax.random.uniform(kx, (B, C, H, W), jnp.float32)
    params = init_params(kp)
    w_slab, b_slab = pack_params(params)

    # tile_n=128 -> grid (B, 2, 2): exercises the parallel q-tile axis and the
    # multi-tile online-softmax accumulation over the KV axis.
    out_PDFLab, PDFLab_W = pdflab_net_forward(x, w_slab, b_slab, tile_n=128)
    jax.block_until_ready((out_PDFLab, PDFLab_W))

    ref_out, ref_w = pdflab_reference(x, params)

    assert out_PDFLab.shape == (B, 3, H, W)
    assert PDFLab_W.shape == (B, WBSET_NUM, H, W)
    assert bool(jnp.all(jnp.isfinite(out_PDFLab)))
    assert bool(jnp.all(jnp.isfinite(PDFLab_W)))
    # blending weights are a softmax -> sum to ~1 per pixel (approx reciprocal)
    assert bool(jnp.allclose(jnp.sum(PDFLab_W, axis=1), 1.0, atol=2e-2))
    err_o = float(jnp.max(jnp.abs(out_PDFLab - ref_out)))
    err_w = float(jnp.max(jnp.abs(PDFLab_W - ref_w)))
    assert err_o < 3e-2 and err_w < 3e-2, (err_o, err_w)

    print("KERNEL_OK")
</pallas_src>

<mosaic_0001>
module attributes {stable_mosaic.version = 11 : i64} {
  func.func @pdflab_kernel(%arg0: i32, %arg1: i32, %arg2: i32, %arg3: memref<1x9x128xf32, #tpu.memory_space<vmem>>, %arg4: memref<1x9x128xf32, #tpu.memory_space<vmem>>, %arg5: memref<168x64xf32, #tpu.memory_space<vmem>>, %arg6: memref<232x1xf32, #tpu.memory_space<vmem>>, %arg7: memref<1x3x128xf32, #tpu.memory_space<vmem>>, %arg8: memref<1x3x128xf32, #tpu.memory_space<vmem>>, %arg9: memref<16x128xf32, #tpu.memory_space<vmem>>, %arg10: memref<128x16xbf16, #tpu.memory_space<vmem>>, %arg11: memref<128x1xf32, #tpu.memory_space<vmem>>, %arg12: memref<128x1xf32, #tpu.memory_space<vmem>>, %arg13: memref<128x16xf32, #tpu.memory_space<vmem>>) attributes {dimension_semantics = [#tpu.dimension_semantics<parallel>, #tpu.dimension_semantics<parallel>, #tpu.dimension_semantics<arbitrary>], iteration_bounds = array<i64: 2, 2, 2>, scalar_prefetch = 0 : i64, scratch_operands = 5 : i64, tpu.core_type = #tpu.core_type<tc>, window_params = [{transform_indices = @transform_0, window_bounds = array<i64: 1, 9, 128>}, {transform_indices = @transform_1, window_bounds = array<i64: 1, 9, 128>}, {pipeline_mode = #tpu.pipeline_mode<synchronous>, transform_indices = @transform_2, window_bounds = array<i64: 168, 64>}, {pipeline_mode = #tpu.pipeline_mode<synchronous>, transform_indices = @transform_3, window_bounds = array<i64: 232, 1>}, {transform_indices = @transform_4, window_bounds = array<i64: 1, 3, 128>}, {transform_indices = @transform_5, window_bounds = array<i64: 1, 3, 128>}]} {
    %c0 = arith.constant 0 : index
    %c0_0 = arith.constant 0 : index
    %0 = vector.load %arg5[%c0, %c0_0] : memref<168x64xf32, #tpu.memory_space<vmem>>, vector<168x64xf32>
    %c0_1 = arith.constant 0 : index
    %c0_2 = arith.constant 0 : index
    %1 = vector.load %arg6[%c0_1, %c0_2] : memref<232x1xf32, #tpu.memory_space<vmem>>, vector<232x1xf32>
    %2 = vector.extract_strided_slice %0 {offsets = [0, 0], sizes = [16, 9], strides = [1, 1]} : vector<168x64xf32> to vector<16x9xf32>
    %3 = vector.extract_strided_slice %1 {offsets = [0, 0], sizes = [16, 1], strides = [1, 1]} : vector<232x1xf32> to vector<16x1xf32>
    %4 = vector.extract_strided_slice %1 {offsets = [168, 0], sizes = [16, 1], strides = [1, 1]} : vector<232x1xf32> to vector<16x1xf32>
    %5 = vector.extract_strided_slice %1 {offsets = [184, 0], sizes = [16, 1], strides = [1, 1]} : vector<232x1xf32> to vector<16x1xf32>
    %c0_i32 = arith.constant 0 : i32
    %6 = arith.cmpi eq, %arg2, %c0_i32 : i32
    %7 = arith.extui %6 : i1 to i32
    %c0_i32_3 = arith.constant 0 : i32
    %8 = arith.cmpi ne, %7, %c0_i32_3 : i32
    scf.if %8 {
      %c0_32 = arith.constant 0 : index
      %c0_33 = arith.constant 0 : index
      %c0_34 = arith.constant 0 : index
      %73 = vector.load %arg3[%c0_32, %c0_33, %c0_34] : memref<1x9x128xf32, #tpu.memory_space<vmem>>, vector<1x9x128xf32>
      %74 = vector.shape_cast %73 : vector<1x9x128xf32> to vector<9x128xf32>
      %cst_35 = arith.constant dense<0.000000e+00> : vector<16x128xf32>
      %75 = tpu.matmul %2, %74, %cst_35 {dimension_numbers = #tpu.dot_dimension_numbers<[1], [0], [0], [1], [0, 0, 1, 1], [], []>} : vector<16x9xf32>, vector<9x128xf32>, vector<16x128xf32> -> vector<16x128xf32>
      %76 = vector.broadcast %3 : vector<16x1xf32> to vector<16x128xf32>
      %77 = arith.addf %75, %76 : vector<16x128xf32>
      %c0_36 = arith.constant 0 : index
      %c0_37 = arith.constant 0 : index
      %78 = vector.load %arg9[%c0_36, %c0_37] : memref<16x128xf32, #tpu.memory_space<vmem>>, vector<16x128xf32>
      tpu.vector_store %arg9[%c0_36, %c0_37], %77 {strides = array<i32>} : memref<16x128xf32, #tpu.memory_space<vmem>>, vector<16x128xf32>,
      %cst_38 = arith.constant dense<0.000000e+00> : vector<128xf32>
      %79 = vector.multi_reduction <add>, %77, %cst_38 [0] : vector<16x128xf32> to vector<128xf32>
      %80 = vector.shape_cast %79 : vector<128xf32> to vector<1x128xf32>
      %cst_39 = arith.constant 1.600000e+01 : f32
      %81 = vector.broadcast %cst_39 : f32 to vector<1x128xf32>
      %82 = arith.divf %80, %81 : vector<1x128xf32>
      %83 = vector.broadcast %82 : vector<1x128xf32> to vector<16x128xf32>
      %84 = arith.subf %77, %83 : vector<16x128xf32>
      %85 = arith.mulf %84, %84 : vector<16x128xf32>
      %cst_40 = arith.constant dense<0.000000e+00> : vector<128xf32>
      %86 = vector.multi_reduction <add>, %85, %cst_40 [0] : vector<16x128xf32> to vector<128xf32>
      %87 = vector.shape_cast %86 : vector<128xf32> to vector<1x128xf32>
      %cst_41 = arith.constant 1.600000e+01 : f32
      %88 = vector.broadcast %cst_41 : f32 to vector<1x128xf32>
      %89 = arith.divf %87, %88 : vector<1x128xf32>
      %90 = vector.broadcast %82 : vector<1x128xf32> to vector<16x128xf32>
      %91 = arith.subf %77, %90 : vector<16x128xf32>
      %cst_42 = arith.constant 9.99999974E-6 : f32
      %92 = vector.broadcast %cst_42 : f32 to vector<1x128xf32>
      %93 = arith.addf %89, %92 : vector<1x128xf32>
      %94 = math.rsqrt %93 : vector<1x128xf32>
      %95 = vector.broadcast %94 : vector<1x128xf32> to vector<16x128xf32>
      %96 = arith.mulf %91, %95 : vector<16x128xf32>
      %97 = vector.broadcast %4 : vector<16x1xf32> to vector<16x128xf32>
      %98 = arith.mulf %96, %97 : vector<16x128xf32>
      %99 = vector.broadcast %5 : vector<16x1xf32> to vector<16x128xf32>
      %100 = arith.addf %98, %99 : vector<16x128xf32>
      %101 = vector.extract_strided_slice %0 {offsets = [16, 0], sizes = [16, 16], strides = [1, 1]} : vector<168x64xf32> to vector<16x16xf32>
      %cst_43 = arith.constant dense<0.000000e+00> : vector<16x128xf32>
      %102 = tpu.matmul %101, %100, %cst_43 {dimension_numbers = #tpu.dot_dimension_numbers<[1], [0], [0], [1], [0, 0, 1, 1], [], []>} : vector<16x16xf32>, vector<16x128xf32>, vector<16x128xf32> -> vector<16x128xf32>
      %103 = vector.extract_strided_slice %1 {offsets = [16, 0], sizes = [16, 1], strides = [1, 1]} : vector<232x1xf32> to vector<16x1xf32>
      %104 = vector.broadcast %103 : vector<16x1xf32> to vector<16x128xf32>
      %105 = arith.addf %102, %104 : vector<16x128xf32>
      %cst_44 = arith.constant 2.500000e-01 : f32
      %106 = vector.broadcast %cst_44 : f32 to vector<16x128xf32>
      %107 = arith.mulf %105, %106 : vector<16x128xf32>
      %108 = tpu.transpose %107, [1, 0] : vector<16x128xf32> -> vector<128x16xf32>
      %109 = arith.truncf %108 : vector<128x16xf32> to vector<128x16xbf16>
      %c0_45 = arith.constant 0 : index
      %c0_46 = arith.constant 0 : index
      %110 = vector.load %arg10[%c0_45, %c0_46] : memref<128x16xbf16, #tpu.memory_space<vmem>>, vector<128x16xbf16>
      tpu.vector_store %arg10[%c0_45, %c0_46], %109 {strides = array<i32>} : memref<128x16xbf16, #tpu.memory_space<vmem>>, vector<128x16xbf16>,
      %cst_47 = arith.constant 0xFF800000 : f32
      %111 = vector.broadcast %cst_47 : f32 to vector<128x1xf32>
      %c0_48 = arith.constant 0 : index
      %c0_49 = arith.constant 0 : index
      %112 = vector.load %arg11[%c0_48, %c0_49] : memref<128x1xf32, #tpu.memory_space<vmem>>, vector<128x1xf32>
      tpu.vector_store %arg11[%c0_48, %c0_49], %111 {strides = array<i32>} : memref<128x1xf32, #tpu.memory_space<vmem>>, vector<128x1xf32>,
      %cst_50 = arith.constant 0.000000e+00 : f32
      %113 = vector.broadcast %cst_50 : f32 to vector<128x1xf32>
      %c0_51 = arith.constant 0 : index
      %c0_52 = arith.constant 0 : index
      %114 = vector.load %arg12[%c0_51, %c0_52] : memref<128x1xf32, #tpu.memory_space<vmem>>, vector<128x1xf32>
      tpu.vector_store %arg12[%c0_51, %c0_52], %113 {strides = array<i32>} : memref<128x1xf32, #tpu.memory_space<vmem>>, vector<128x1xf32>,
      %cst_53 = arith.constant 0.000000e+00 : f32
      %115 = vector.broadcast %cst_53 : f32 to vector<128x16xf32>
      %c0_54 = arith.constant 0 : index
      %c0_55 = arith.constant 0 : index
      %116 = vector.load %arg13[%c0_54, %c0_55] : memref<128x16xf32, #tpu.memory_space<vmem>>, vector<128x16xf32>
      tpu.vector_store %arg13[%c0_54, %c0_55], %115 {strides = array<i32>} : memref<128x16xf32, #tpu.memory_space<vmem>>, vector<128x16xf32>,
    } else {
    }
    %c0_4 = arith.constant 0 : index
    %c0_5 = arith.constant 0 : index
    %c0_6 = arith.constant 0 : index
    %9 = vector.load %arg4[%c0_4, %c0_5, %c0_6] : memref<1x9x128xf32, #tpu.memory_space<vmem>>, vector<1x9x128xf32>
    %10 = vector.shape_cast %9 : vector<1x9x128xf32> to vector<9x128xf32>
    %cst = arith.constant dense<0.000000e+00> : vector<16x128xf32>
    %11 = tpu.matmul %2, %10, %cst {dimension_numbers = #tpu.dot_dimension_numbers<[1], [0], [0], [1], [0, 0, 1, 1], [], []>} : vector<16x9xf32>, vector<9x128xf32>, vector<16x128xf32> -> vector<16x128xf32>
    %12 = vector.broadcast %3 : vector<16x1xf32> to vector<16x128xf32>
    %13 = arith.addf %11, %12 : vector<16x128xf32>
    %cst_7 = arith.constant dense<0.000000e+00> : vector<128xf32>
    %14 = vector.multi_reduction <add>, %13, %cst_7 [0] : vector<16x128xf32> to vector<128xf32>
    %15 = vector.shape_cast %14 : vector<128xf32> to vector<1x128xf32>
    %cst_8 = arith.constant 1.600000e+01 : f32
    %16 = vector.broadcast %cst_8 : f32 to vector<1x128xf32>
    %17 = arith.divf %15, %16 : vector<1x128xf32>
    %18 = vector.broadcast %17 : vector<1x128xf32> to vector<16x128xf32>
    %19 = arith.subf %13, %18 : vector<16x128xf32>
    %20 = arith.mulf %19, %19 : vector<16x128xf32>
    %cst_9 = arith.constant dense<0.000000e+00> : vector<128xf32>
    %21 = vector.multi_reduction <add>, %20, %cst_9 [0] : vector<16x128xf32> to vector<128xf32>
    %22 = vector.shape_cast %21 : vector<128xf32> to vector<1x128xf32>
    %cst_10 = arith.constant 1.600000e+01 : f32
    %23 = vector.broadcast %cst_10 : f32 to vector<1x128xf32>
    %24 = arith.divf %22, %23 : vector<1x128xf32>
    %25 = vector.broadcast %17 : vector<1x128xf32> to vector<16x128xf32>
    %26 = arith.subf %13, %25 : vector<16x128xf32>
    %cst_11 = arith.constant 9.99999974E-6 : f32
    %27 = vector.broadcast %cst_11 : f32 to vector<1x128xf32>
    %28 = arith.addf %24, %27 : vector<1x128xf32>
    %29 = math.rsqrt %28 : vector<1x128xf32>
    %30 = vector.broadcast %29 : vector<1x128xf32> to vector<16x128xf32>
    %31 = arith.mulf %26, %30 : vector<16x128xf32>
    %32 = vector.broadcast %4 : vector<16x1xf32> to vector<16x128xf32>
    %33 = arith.mulf %31, %32 : vector<16x128xf32>
    %34 = vector.broadcast %5 : vector<16x1xf32> to vector<16x128xf32>
    %35 = arith.addf %33, %34 : vector<16x128xf32>
    %36 = vector.extract_strided_slice %0 {offsets = [32, 0], sizes = [32, 16], strides = [1, 1]} : vector<168x64xf32> to vector<32x16xf32>
    %cst_12 = arith.constant dense<0.000000e+00> : vector<32x128xf32>
    %37 = tpu.matmul %36, %35, %cst_12 {dimension_numbers = #tpu.dot_dimension_numbers<[1], [0], [0], [1], [0, 0, 1, 1], [], []>} : vector<32x16xf32>, vector<16x128xf32>, vector<32x128xf32> -> vector<32x128xf32>
    %38 = vector.extract_strided_slice %1 {offsets = [32, 0], sizes = [32, 1], strides = [1, 1]} : vector<232x1xf32> to vector<32x1xf32>
    %39 = vector.broadcast %38 : vector<32x1xf32> to vector<32x128xf32>
    %40 = arith.addf %37, %39 : vector<32x128xf32>
    %41 = vector.extract_strided_slice %40 {offsets = [0, 0], sizes = [16, 128], strides = [1, 1]} : vector<32x128xf32> to vector<16x128xf32>
    %42 = arith.truncf %41 : vector<16x128xf32> to vector<16x128xbf16>
    %43 = vector.extract_strided_slice %40 {offsets = [16, 0], sizes = [16, 128], strides = [1, 1]} : vector<32x128xf32> to vector<16x128xf32>
    %44 = arith.truncf %43 : vector<16x128xf32> to vector<16x128xbf16>
    %c0_13 = arith.constant 0 : index
    %c0_14 = arith.constant 0 : index
    %45 = vector.load %arg10[%c0_13, %c0_14] : memref<128x16xbf16, #tpu.memory_space<vmem>>, vector<128x16xbf16>
    %cst_15 = arith.constant dense<0.000000e+00> : vector<128x128xf32>
    %46 = tpu.matmul %45, %42, %cst_15 {dimension_numbers = #tpu.dot_dimension_numbers<[1], [0], [0], [1], [0, 0, 1, 1], [], []>} : vector<128x16xbf16>, vector<16x128xbf16>, vector<128x128xf32> -> vector<128x128xf32>
    %c0_16 = arith.constant 0 : index
    %c0_17 = arith.constant 0 : index
    %47 = vector.load %arg11[%c0_16, %c0_17] : memref<128x1xf32, #tpu.memory_space<vmem>>, vector<128x1xf32>
    %cst_18 = arith.constant dense<0xFF800000> : vector<128xf32>
    %48 = vector.multi_reduction <maximumf>, %46, %cst_18 [1] : vector<128x128xf32> to vector<128xf32>
    %49 = vector.shape_cast %48 : vector<128xf32> to vector<128x1xf32>
    %50 = arith.maximumf %47, %49 : vector<128x1xf32>
    %51 = arith.subf %47, %50 : vector<128x1xf32>
    %52 = math.exp %51 : vector<128x1xf32>
    %53 = vector.broadcast %50 : vector<128x1xf32> to vector<128x128xf32>
    %54 = arith.subf %46, %53 : vector<128x128xf32>
    %55 = math.exp %54 : vector<128x128xf32>
    %c0_19 = arith.constant 0 : index
    %c0_20 = arith.constant 0 : index
    %56 = vector.load %arg12[%c0_19, %c0_20] : memref<128x1xf32, #tpu.memory_space<vmem>>, vector<128x1xf32>
    %57 = arith.mulf %52, %56 : vector<128x1xf32>
    %cst_21 = arith.constant dense<0.000000e+00> : vector<128xf32>
    %58 = vector.multi_reduction <add>, %55, %cst_21 [1] : vector<128x128xf32> to vector<128xf32>
    %59 = vector.shape_cast %58 : vector<128xf32> to vector<128x1xf32>
    %60 = arith.addf %57, %59 : vector<128x1xf32>
    %c0_22 = arith.constant 0 : index
    %c0_23 = arith.constant 0 : index
    %61 = vector.load %arg12[%c0_22, %c0_23] : memref<128x1xf32, #tpu.memory_space<vmem>>, vector<128x1xf32>
    tpu.vector_store %arg12[%c0_22, %c0_23], %60 {strides = array<i32>} : memref<128x1xf32, #tpu.memory_space<vmem>>, vector<128x1xf32>,
    %c0_24 = arith.constant 0 : index
    %c0_25 = arith.constant 0 : index
    %62 = vector.load %arg13[%c0_24, %c0_25] : memref<128x16xf32, #tpu.memory_space<vmem>>, vector<128x16xf32>
    %63 = vector.broadcast %52 : vector<128x1xf32> to vector<128x16xf32>
    %64 = arith.mulf %63, %62 : vector<128x16xf32>
    %65 = arith.truncf %55 : vector<128x128xf32> to vector<128x128xbf16>
    %cst_26 = arith.constant dense<0.000000e+00> : vector<128x16xf32>
    %66 = tpu.matmul %65, %44, %cst_26 {dimension_numbers = #tpu.dot_dimension_numbers<[1], [1], [0], [0], [0, 0, 1, 0], [], []>} : vector<128x128xbf16>, vector<16x128xbf16>, vector<128x16xf32> -> vector<128x16xf32>
    %67 = arith.addf %64, %66 : vector<128x16xf32>
    %c0_27 = arith.constant 0 : index
    %c0_28 = arith.constant 0 : index
    %68 = vector.load %arg13[%c0_27, %c0_28] : memref<128x16xf32, #tpu.memory_space<vmem>>, vector<128x16xf32>
    tpu.vector_store %arg13[%c0_27, %c0_28], %67 {strides = array<i32>} : memref<128x16xf32, #tpu.memory_space<vmem>>, vector<128x16xf32>,
    %c0_29 = arith.constant 0 : index
    %c0_30 = arith.constant 0 : index
    %69 = vector.load %arg11[%c0_29, %c0_30] : memref<128x1xf32, #tpu.memory_space<vmem>>, vector<128x1xf32>
    tpu.vector_store %arg11[%c0_29, %c0_30], %50 {strides = array<i32>} : memref<128x1xf32, #tpu.memory_space<vmem>>, vector<128x1xf32>,
    %c1_i32 = arith.constant 1 : i32
    %70 = arith.cmpi eq, %arg2, %c1_i32 : i32
    %71 = arith.extui %70 : i1 to i32
    %c0_i32_31 = arith.constant 0 : i32
    %72 = arith.cmpi ne, %71, %c0_i32_31 : i32
    scf.if %72 {
      %c0_32 = arith.constant 0 : index
      %c0_33 = arith.constant 0 : index
      %73 = vector.load %arg13[%c0_32, %c0_33] : memref<128x16xf32, #tpu.memory_space<vmem>>, vector<128x16xf32>
      %c0_34 = arith.constant 0 : index
      %c0_35 = arith.constant 0 : index
      %74 = vector.load %arg12[%c0_34, %c0_35] : memref<128x1xf32, #tpu.memory_space<vmem>>, vector<128x1xf32>
      %75 = tpu.reciprocal %74 {approx = true} : vector<128x1xf32> -> vector<128x1xf32>
      %76 = vector.broadcast %75 : vector<128x1xf32> to vector<128x16xf32>
      %77 = arith.mulf %73, %76 : vector<128x16xf32>
      %78 = vector.extract_strided_slice %0 {offsets = [64, 0], sizes = [16, 16], strides = [1, 1]} : vector<168x64xf32> to vector<16x16xf32>
      %cst_36 = arith.constant dense<0.000000e+00> : vector<16x128xf32>
      %79 = tpu.matmul %78, %77, %cst_36 {dimension_numbers = #tpu.dot_dimension_numbers<[1], [1], [0], [0], [0, 0, 1, 0], [], []>} : vector<16x16xf32>, vector<128x16xf32>, vector<16x128xf32> -> vector<16x128xf32>
      %80 = vector.extract_strided_slice %1 {offsets = [64, 0], sizes = [16, 1], strides = [1, 1]} : vector<232x1xf32> to vector<16x1xf32>
      %81 = vector.broadcast %80 : vector<16x1xf32> to vector<16x128xf32>
      %82 = arith.addf %79, %81 : vector<16x128xf32>
      %c0_37 = arith.constant 0 : index
      %c0_38 = arith.constant 0 : index
      %83 = vector.load %arg9[%c0_37, %c0_38] : memref<16x128xf32, #tpu.memory_space<vmem>>, vector<16x128xf32>
      %84 = arith.addf %83, %82 : vector<16x128xf32>
      %85 = vector.extract_strided_slice %1 {offsets = [200, 0], sizes = [16, 1], strides = [1, 1]} : vector<232x1xf32> to vector<16x1xf32>
      %86 = vector.extract_strided_slice %1 {offsets = [216, 0], sizes = [16, 1], strides = [1, 1]} : vector<232x1xf32> to vector<16x1xf32>
      %cst_39 = arith.constant dense<0.000000e+00> : vector<128xf32>
      %87 = vector.multi_reduction <add>, %84, %cst_39 [0] : vector<16x128xf32> to vector<128xf32>
      %88 = vector.shape_cast %87 : vector<128xf32> to vector<1x128xf32>
      %cst_40 = arith.constant 1.600000e+01 : f32
      %89 = vector.broadcast %cst_40 : f32 to vector<1x128xf32>
      %90 = arith.divf %88, %89 : vector<1x128xf32>
      %91 = vector.broadcast %90 : vector<1x128xf32> to vector<16x128xf32>
      %92 = arith.subf %84, %91 : vector<16x128xf32>
      %93 = arith.mulf %92, %92 : vector<16x128xf32>
      %cst_41 = arith.constant dense<0.000000e+00> : vector<128xf32>
      %94 = vector.multi_reduction <add>, %93, %cst_41 [0] : vector<16x128xf32> to vector<128xf32>
      %95 = vector.shape_cast %94 : vector<128xf32> to vector<1x128xf32>
      %cst_42 = arith.constant 1.600000e+01 : f32
      %96 = vector.broadcast %cst_42 : f32 to vector<1x128xf32>
      %97 = arith.divf %95, %96 : vector<1x128xf32>
      %98 = vector.broadcast %90 : vector<1x128xf32> to vector<16x128xf32>
      %99 = arith.subf %84, %98 : vector<16x128xf32>
      %cst_43 = arith.constant 9.99999974E-6 : f32
      %100 = vector.broadcast %cst_43 : f32 to vector<1x128xf32>
      %101 = arith.addf %97, %100 : vector<1x128xf32>
      %102 = math.rsqrt %101 : vector<1x128xf32>
      %103 = vector.broadcast %102 : vector<1x128xf32> to vector<16x128xf32>
      %104 = arith.mulf %99, %103 : vector<16x128xf32>
      %105 = vector.broadcast %85 : vector<16x1xf32> to vector<16x128xf32>
      %106 = arith.mulf %104, %105 : vector<16x128xf32>
      %107 = vector.broadcast %86 : vector<16x1xf32> to vector<16x128xf32>
      %108 = arith.addf %106, %107 : vector<16x128xf32>
      %109 = vector.extract_strided_slice %0 {offsets = [80, 0], sizes = [64, 16], strides = [1, 1]} : vector<168x64xf32> to vector<64x16xf32>
      %cst_44 = arith.constant dense<0.000000e+00> : vector<64x128xf32>
      %110 = tpu.matmul %109, %108, %cst_44 {dimension_numbers = #tpu.dot_dimension_numbers<[1], [0], [0], [1], [0, 0, 1, 1], [], []>} : vector<64x16xf32>, vector<16x128xf32>, vector<64x128xf32> -> vector<64x128xf32>
      %111 = vector.extract_strided_slice %1 {offsets = [80, 0], sizes = [64, 1], strides = [1, 1]} : vector<232x1xf32> to vector<64x1xf32>
      %112 = vector.broadcast %111 : vector<64x1xf32> to vector<64x128xf32>
      %113 = arith.addf %110, %112 : vector<64x128xf32>
      %114 = arith.mulf %113, %113 : vector<64x128xf32>
      %115 = arith.mulf %113, %114 : vector<64x128xf32>
      %cst_45 = arith.constant 4.471500e-02 : f32
      %116 = vector.broadcast %cst_45 : f32 to vector<64x128xf32>
      %117 = arith.mulf %116, %115 : vector<64x128xf32>
      %118 = arith.addf %113, %117 : vector<64x128xf32>
      %cst_46 = arith.constant 0.797884583 : f32
      %119 = vector.broadcast %cst_46 : f32 to vector<64x128xf32>
      %120 = arith.mulf %119, %118 : vector<64x128xf32>
      %121 = math.tanh %120 : vector<64x128xf32>
      %cst_47 = arith.constant 1.000000e+00 : f32
      %122 = vector.broadcast %cst_47 : f32 to vector<64x128xf32>
      %123 = arith.addf %122, %121 : vector<64x128xf32>
      %cst_48 = arith.constant 5.000000e-01 : f32
      %124 = vector.broadcast %cst_48 : f32 to vector<64x128xf32>
      %125 = arith.mulf %124, %123 : vector<64x128xf32>
      %126 = arith.mulf %113, %125 : vector<64x128xf32>
      %127 = vector.extract_strided_slice %0 {offsets = [144, 0], sizes = [16, 64], strides = [1, 1]} : vector<168x64xf32> to vector<16x64xf32>
      %cst_49 = arith.constant dense<0.000000e+00> : vector<16x128xf32>
      %128 = tpu.matmul %127, %126, %cst_49 {dimension_numbers = #tpu.dot_dimension_numbers<[1], [0], [0], [1], [0, 0, 1, 1], [], []>} : vector<16x64xf32>, vector<64x128xf32>, vector<16x128xf32> -> vector<16x128xf32>
      %129 = vector.extract_strided_slice %1 {offsets = [144, 0], sizes = [16, 1], strides = [1, 1]} : vector<232x1xf32> to vector<16x1xf32>
      %130 = vector.broadcast %129 : vector<16x1xf32> to vector<16x128xf32>
      %131 = arith.addf %128, %130 : vector<16x128xf32>
      %132 = arith.addf %84, %131 : vector<16x128xf32>
      %133 = vector.extract_strided_slice %0 {offsets = [160, 0], sizes = [3, 16], strides = [1, 1]} : vector<168x64xf32> to vector<3x16xf32>
      %cst_50 = arith.constant dense<0.000000e+00> : vector<3x128xf32>
      %134 = tpu.matmul %133, %132, %cst_50 {dimension_numbers = #tpu.dot_dimension_numbers<[1], [0], [0], [1], [0, 0, 1, 1], [], []>} : vector<3x16xf32>, vector<16x128xf32>, vector<3x128xf32> -> vector<3x128xf32>
      %135 = vector.extract_strided_slice %1 {offsets = [160, 0], sizes = [3, 1], strides = [1, 1]} : vector<232x1xf32> to vector<3x1xf32>
      %136 = vector.broadcast %135 : vector<3x1xf32> to vector<3x128xf32>
      %137 = arith.addf %134, %136 : vector<3x128xf32>
      %cst_51 = arith.constant dense<0xFF800000> : vector<128xf32>
      %138 = vector.multi_reduction <maximumf>, %137, %cst_51 [0] : vector<3x128xf32> to vector<128xf32>
      %139 = vector.shape_cast %138 : vector<128xf32> to vector<1x128xf32>
      %140 = vector.broadcast %139 : vector<1x128xf32> to vector<3x128xf32>
      %141 = arith.subf %137, %140 : vector<3x128xf32>
      %142 = math.exp %141 : vector<3x128xf32>
      %cst_52 = arith.constant dense<0.000000e+00> : vector<128xf32>
      %143 = vector.multi_reduction <add>, %142, %cst_52 [0] : vector<3x128xf32> to vector<128xf32>
      %144 = vector.shape_cast %143 : vector<128xf32> to vector<1x128xf32>
      %145 = tpu.reciprocal %144 {approx = true} : vector<1x128xf32> -> vector<1x128xf32>
      %146 = vector.broadcast %145 : vector<1x128xf32> to vector<3x128xf32>
      %147 = arith.mulf %142, %146 : vector<3x128xf32>
      %c0_53 = arith.constant 0 : index
      %c0_54 = arith.constant 0 : index
      %c0_55 = arith.constant 0 : index
      %148 = vector.load %arg3[%c0_53, %c0_54, %c0_55] : memref<1x9x128xf32, #tpu.memory_space<vmem>>, vector<1x9x128xf32>
      %149 = vector.shape_cast %148 : vector<1x9x128xf32> to vector<9x128xf32>
      %150 = vector.extract_strided_slice %147 {offsets = [0, 0], sizes = [1, 128], strides = [1, 1]} : vector<3x128xf32> to vector<1x128xf32>
      %151 = vector.extract_strided_slice %149 {offsets = [0, 0], sizes = [3, 128], strides = [1, 1]} : vector<9x128xf32> to vector<3x128xf32>
      %152 = vector.broadcast %150 : vector<1x128xf32> to vector<3x128xf32>
      %153 = arith.mulf %152, %151 : vector<3x128xf32>
      %154 = vector.extract_strided_slice %147 {offsets = [1, 0], sizes = [1, 128], strides = [1, 1]} : vector<3x128xf32> to vector<1x128xf32>
      %155 = vector.extract_strided_slice %149 {offsets = [3, 0], sizes = [3, 128], strides = [1, 1]} : vector<9x128xf32> to vector<3x128xf32>
      %156 = vector.broadcast %154 : vector<1x128xf32> to vector<3x128xf32>
      %157 = arith.mulf %156, %155 : vector<3x128xf32>
      %158 = arith.addf %153, %157 : vector<3x128xf32>
      %159 = vector.extract_strided_slice %147 {offsets = [2, 0], sizes = [1, 128], strides = [1, 1]} : vector<3x128xf32> to vector<1x128xf32>
      %160 = vector.extract_strided_slice %149 {offsets = [6, 0], sizes = [3, 128], strides = [1, 1]} : vector<9x128xf32> to vector<3x128xf32>
      %161 = vector.broadcast %159 : vector<1x128xf32> to vector<3x128xf32>
      %162 = arith.mulf %161, %160 : vector<3x128xf32>
      %163 = arith.addf %158, %162 : vector<3x128xf32>
      %c0_56 = arith.constant 0 : index
      %c0_57 = arith.constant 0 : index
      %c0_58 = arith.constant 0 : index
      %164 = vector.load %arg7[%c0_56, %c0_57, %c0_58] : memref<1x3x128xf32, #tpu.memory_space<vmem>>, vector<1x3x128xf32>
      %165 = vector.shape_cast %164 : vector<1x3x128xf32> to vector<3x128xf32>
      %166 = vector.shape_cast %163 : vector<3x128xf32> to vector<1x3x128xf32>
      tpu.vector_store %arg7[%c0_56, %c0_57, %c0_58], %166 {strides = array<i32>} : memref<1x3x128xf32, #tpu.memory_space<vmem>>, vector<1x3x128xf32>,
      %c0_59 = arith.constant 0 : index
      %c0_60 = arith.constant 0 : index
      %c0_61 = arith.constant 0 : index
      %167 = vector.load %arg8[%c0_59, %c0_60, %c0_61] : memref<1x3x128xf32, #tpu.memory_space<vmem>>, vector<1x3x128xf32>
      %168 = vector.shape_cast %167 : vector<1x3x128xf32> to vector<3x128xf32>
      %169 = vector.shape_cast %147 : vector<3x128xf32> to vector<1x3x128xf32>
      tpu.vector_store %arg8[%c0_59, %c0_60, %c0_61], %169 {strides = array<i32>} : memref<1x3x128xf32, #tpu.memory_space<vmem>>, vector<1x3x128xf32>,
    } else {
    }
    return
  }
  func.func @transform_0(%arg0: i32, %arg1: i32, %arg2: i32) -> (i32, i32, i32) {
    %c0_i32 = arith.constant 0 : i32
    %c0_i32_0 = arith.constant 0 : i32
    return %arg0, %c0_i32, %arg1 : i32, i32, i32
  }
  func.func @transform_1(%arg0: i32, %arg1: i32, %arg2: i32) -> (i32, i32, i32) {
    %c0_i32 = arith.constant 0 : i32
    %c0_i32_0 = arith.constant 0 : i32
    return %arg0, %c0_i32, %arg2 : i32, i32, i32
  }
  func.func @transform_2(%arg0: i32, %arg1: i32, %arg2: i32) -> (i32, i32) {
    %c0_i32 = arith.constant 0 : i32
    %c0_i32_0 = arith.constant 0 : i32
    %c0_i32_1 = arith.constant 0 : i32
    return %c0_i32, %c0_i32_0 : i32, i32
  }
  func.func @transform_3(%arg0: i32, %arg1: i32, %arg2: i32) -> (i32, i32) {
    %c0_i32 = arith.constant 0 : i32
    %c0_i32_0 = arith.constant 0 : i32
    %c0_i32_1 = arith.constant 0 : i32
    return %c0_i32, %c0_i32_0 : i32, i32
  }
  func.func @transform_4(%arg0: i32, %arg1: i32, %arg2: i32) -> (i32, i32, i32) {
    %c0_i32 = arith.constant 0 : i32
    %c0_i32_0 = arith.constant 0 : i32
    return %arg0, %c0_i32, %arg1 : i32, i32, i32
  }
  func.func @transform_5(%arg0: i32, %arg1: i32, %arg2: i32) -> (i32, i32, i32) {
    %c0_i32 = arith.constant 0 : i32
    %c0_i32_0 = arith.constant 0 : i32
    return %arg0, %c0_i32, %arg1 : i32, i32, i32
  }
}

</mosaic_0001>

<llo_original>
// kernel: pdflab_net_forward.1
$region0: #{pdflab_net_forward.1}
  #allocation0 [shape = 'u32[]', space=smem, size = 0x4, offset = 0x4, fixed_abs, tag = 'smem constant byte address 0x4 - core index']
  #allocation1 [shape = 'u32[144,128]{1,0:T(1,128)}', space=vmem, size = 0x12000, scoped, tag = 'internal scratch']
  #allocation2 [shape = 'f32[16,128]{1,0:T(8,128)}', space=vmem, size = 0x2000, scoped, tag = 'scratch operand']
  #allocation3 [shape = 'bf16[128,16]{1,0:T(16,128)(2,1)}', space=vmem, size = 0x8000, scoped, tag = 'scratch operand']
  #allocation4 [shape = 'f32[128,1]{1,0:T(8,128)}', space=vmem, size = 0x10000, scoped, tag = 'scratch operand']
  #allocation5 [shape = 'f32[128,1]{1,0:T(8,128)}', space=vmem, size = 0x10000, scoped, tag = 'scratch operand']
  #allocation6 [shape = 'f32[128,16]{1,0:T(8,128)}', space=vmem, size = 0x10000, scoped, tag = 'scratch operand']
  %s0 = inlined_call_operand.vmem [shape: f32[2,9,256], index: 0, kind: input, shape index: {}, may-alias: {0,1}]
  %s1 = inlined_call_operand.vmem [shape: f32[2,9,256], index: 1, kind: input, shape index: {}, may-alias: {0,1}]
  %s2 = inlined_call_operand.vmem [shape: f32[168,64], index: 2, kind: input, shape index: {}]
  %s3 = inlined_call_operand.vmem [shape: f32[232,1], index: 3, kind: input, shape index: {}]
  %s4 = inlined_call_operand.vmem [shape: f32[2,3,256], index: 4, kind: output, shape index: {0}]
  %s5 = inlined_call_operand.vmem [shape: f32[2,3,256], index: 5, kind: output, shape index: {1}]
  %6 = xla_tuple %s4, %s5
  %s7 = sld [smem:[#allocation0]]
  $region141: #{pdflab_net_forward.1} parent=0
    _
  %s9 = ssub.s32 1, %s7
  %s10 = scalar_select 0, %s9, %s7
  $region1: #{pdflab_net_forward.1} parent=0
    #allocation7 [shape = 'u8[16384]{0}', space=vmem, size = 0x4000, scoped, tag = 'input window, operand 0']
    #allocation8 [shape = 'u8[16384]{0}', space=vmem, size = 0x4000, scoped, tag = 'input window, operand 1']
    loop: start=0, step=1, limit=10
    $region2: #{pdflab_net_forward.1} parent=1 // loop_pre_header
      _
    $region3: #{pdflab_net_forward.1} parent=1 // loop_header
      %s12 = sphi 0, %s16
      %p13 = scmp.ge.s32.totalorder %s12, 10
      %s19 = sphi 0, %s38
      %s20 = sphi 0, %s34
      %s21 = sphi 0, %s30
      %s22 = sphi 0, %s19
      %s23 = sphi 0, %s20
      %s24 = sphi 0, %s21
      %s25 = sphi 0, %s22
      %s26 = sphi 0, %s23
      %s27 = sphi 0, %s24
      %s43 = sphi 0, %s45
      %s46 = sphi 0, %s43
      %s47 = sphi 0, %s46
      %s63 = sphi 0, %s47
      %s71 = sphi 0, %s73
      %s74 = sphi 0, %s71
      %s75 = sphi 0, %s74
      %s91 = sphi 0, %s75
      %s95 = sphi 0, %s95
      %s97 = sphi 0, %s95
      %s98 = sphi 0, %s97
      %s112 = sphi 0, %s98
      %s116 = sphi 0, %s116
      %s118 = sphi 0, %s116
      %s119 = sphi 0, %s118
      %s133 = sphi 0, %s119
      %s141 = sphi 0, %s143
      %s144 = sphi 0, %s141
      %s145 = sphi 0, %s144
      %s161 = sphi 0, %s145
      %s169 = sphi 0, %s171
      %s172 = sphi 0, %s169
      %s173 = sphi 0, %s172
      %s189 = sphi 0, %s173
    $region4: #{pdflab_net_forward.1} parent=1 // loop_header_branch
      %15 = sbr.rel (%p13) target = $region8
    $region5: #{pdflab_net_forward.1} parent=1 // loop_body
      %s17 = ssub.s32 %s12, 1
      %s18 = ssub.s32 %s12, 2
      %s28 = sadd.s32 1, %s21
      %p29 = scmp.ge.s32.totalorder %s28, 2
      %s30 = scalar_select %p29, 0, %s28
      %s31 = sadd.s32 1, %s20
      %s32 = scalar_select %p29, %s31, %s20
      %p33 = scmp.ge.s32.totalorder %s32, 2
      %s34 = scalar_select %p33, 0, %s32
      %s35 = sadd.s32 1, %s19
      %s36 = scalar_select %p33, %s35, %s19
      %p37 = scmp.ge.s32.totalorder %s36, 2
      %s38 = scalar_select %p37, 0, %s36
      %s39 = ssub.s32 %s19, %s38
      %s40 = ssub.s32 %s20, %s34
      %s41 = sor.u32 %s39, %s40
      %p42 = scmp.eq.s32.totalorder %s41, 0
      %s44 = sadd.s32 %s43, 1
      %s45 = scalar_select %p42, %s43, %s44
      %p48 = pneg %p42
      %p49 = scmp.eq.s32.totalorder %s12, 7
      %p50 = por %p48, %p49
      %p51 = scmp.ne.s32.totalorder %s43, %s46
      %p52 = scmp.eq.s32.totalorder %s12, 0
      %p53 = por %p51, %p52
      %p54 = scmp.ne.s32.totalorder %s43, %s46
      %p55 = scmp.eq.s32.totalorder %s17, 7
      %p56 = por %p54, %p55
      %p57 = scmp.ne.s32.totalorder %s46, %s47
      %p58 = scmp.eq.s32.totalorder %s17, 0
      %p59 = por %p57, %p58
      %p60 = scmp.ne.s32.totalorder %s46, %s47
      %p61 = scmp.eq.s32.totalorder %s18, 7
      %p62 = por %p60, %p61
      %p64 = scmp.ne.s32.totalorder %s47, %s63
      %p65 = scmp.eq.s32.totalorder %s18, 0
      %p66 = por %p64, %p65
      %s67 = ssub.s32 %s19, %s38
      %s68 = ssub.s32 %s21, %s30
      %s69 = sor.u32 %s67, %s68
      %p70 = scmp.eq.s32.totalorder %s69, 0
      %s72 = sadd.s32 %s71, 1
      %s73 = scalar_select %p70, %s71, %s72
      %p76 = pneg %p70
      %p77 = scmp.eq.s32.totalorder %s12, 7
      %p78 = por %p76, %p77
      %p79 = scmp.ne.s32.totalorder %s71, %s74
      %p80 = scmp.eq.s32.totalorder %s12, 0
      %p81 = por %p79, %p80
      %p82 = scmp.ne.s32.totalorder %s71, %s74
      %p83 = scmp.eq.s32.totalorder %s17, 7
      %p84 = por %p82, %p83
      %p85 = scmp.ne.s32.totalorder %s74, %s75
      %p86 = scmp.eq.s32.totalorder %s17, 0
      %p87 = por %p85, %p86
      %p88 = scmp.ne.s32.totalorder %s74, %s75
      %p89 = scmp.eq.s32.totalorder %s18, 7
      %p90 = por %p88, %p89
      %p92 = scmp.ne.s32.totalorder %s75, %s91
      %p93 = scmp.eq.s32.totalorder %s18, 0
      %p94 = por %p92, %p93
      %s96 = sadd.s32 %s95, 1
      %p99 = scmp.eq.s32.totalorder %s12, 7
      %p100 = scmp.ne.s32.totalorder %s95, %s97
      %p101 = scmp.eq.s32.totalorder %s12, 0
      %p102 = por %p100, %p101
      %p103 = scmp.ne.s32.totalorder %s95, %s97
      %p104 = scmp.eq.s32.totalorder %s17, 7
      %p105 = por %p103, %p104
      %p106 = scmp.ne.s32.totalorder %s97, %s98
      %p107 = scmp.eq.s32.totalorder %s17, 0
      %p108 = por %p106, %p107
      %p109 = scmp.ne.s32.totalorder %s97, %s98
      %p110 = scmp.eq.s32.totalorder %s18, 7
      %p111 = por %p109, %p110
      %p113 = scmp.ne.s32.totalorder %s98, %s112
      %p114 = scmp.eq.s32.totalorder %s18, 0
      %p115 = por %p113, %p114
      %s117 = sadd.s32 %s116, 1
      %p120 = scmp.eq.s32.totalorder %s12, 7
      %p121 = scmp.ne.s32.totalorder %s116, %s118
      %p122 = scmp.eq.s32.totalorder %s12, 0
      %p123 = por %p121, %p122
      %p124 = scmp.ne.s32.totalorder %s116, %s118
      %p125 = scmp.eq.s32.totalorder %s17, 7
      %p126 = por %p124, %p125
      %p127 = scmp.ne.s32.totalorder %s118, %s119
      %p128 = scmp.eq.s32.totalorder %s17, 0
      %p129 = por %p127, %p128
      %p130 = scmp.ne.s32.totalorder %s118, %s119
      %p131 = scmp.eq.s32.totalorder %s18, 7
      %p132 = por %p130, %p131
      %p134 = scmp.ne.s32.totalorder %s119, %s133
      %p135 = scmp.eq.s32.totalorder %s18, 0
      %p136 = por %p134, %p135
      %s137 = ssub.s32 %s19, %s38
      %s138 = ssub.s32 %s20, %s34
      %s139 = sor.u32 %s137, %s138
      %p140 = scmp.eq.s32.totalorder %s139, 0
      %s142 = sadd.s32 %s141, 1
      %s143 = scalar_select %p140, %s141, %s142
      %p146 = pneg %p140
      %p147 = scmp.eq.s32.totalorder %s12, 7
      %p148 = por %p146, %p147
      %p149 = scmp.ne.s32.totalorder %s141, %s144
      %p150 = scmp.eq.s32.totalorder %s12, 0
      %p151 = por %p149, %p150
      %p152 = scmp.ne.s32.totalorder %s141, %s144
      %p153 = scmp.eq.s32.totalorder %s17, 7
      %p154 = por %p152, %p153
      %p155 = scmp.ne.s32.totalorder %s144, %s145
      %p156 = scmp.eq.s32.totalorder %s17, 0
      %p157 = por %p155, %p156
      %p158 = scmp.ne.s32.totalorder %s144, %s145
      %p159 = scmp.eq.s32.totalorder %s18, 7
      %p160 = por %p158, %p159
      %p162 = scmp.ne.s32.totalorder %s145, %s161
      %p163 = scmp.eq.s32.totalorder %s18, 0
      %p164 = por %p162, %p163
      %s165 = ssub.s32 %s19, %s38
      %s166 = ssub.s32 %s20, %s34
      %s167 = sor.u32 %s165, %s166
      %p168 = scmp.eq.s32.totalorder %s167, 0
      %s170 = sadd.s32 %s169, 1
      %s171 = scalar_select %p168, %s169, %s170
      %p174 = pneg %p168
      %p175 = scmp.eq.s32.totalorder %s12, 7
      %p176 = por %p174, %p175
      %p177 = scmp.ne.s32.totalorder %s169, %s172
      %p178 = scmp.eq.s32.totalorder %s12, 0
      %p179 = por %p177, %p178
      %p180 = scmp.ne.s32.totalorder %s169, %s172
      %p181 = scmp.eq.s32.totalorder %s17, 7
      %p182 = por %p180, %p181
      %p183 = scmp.ne.s32.totalorder %s172, %s173
      %p184 = scmp.eq.s32.totalorder %s17, 0
      %p185 = por %p183, %p184
      %p186 = scmp.ne.s32.totalorder %s172, %s173
      %p187 = scmp.eq.s32.totalorder %s18, 7
      %p188 = por %p186, %p187
      %p190 = scmp.ne.s32.totalorder %s173, %s189
      %p191 = scmp.eq.s32.totalorder %s18, 0
      %p192 = por %p190, %p191
      %p193 = scmp.le.s32.totalorder 1, %s12
      %p194 = scmp.lt.s32.totalorder %s12, 9
      %p195 = pnand %p193, %p194
      %p196 = pneg %p195
      // Predicated region
      $region9: #{pdflab_net_forward.1} parent=5 // pred_check
        _
      $region10: #{pdflab_net_forward.1} parent=5 // pred_check_branch
        %198 = sbr.rel (%p195) target = $region12
      $region11: #{pdflab_net_forward.1} parent=5 // pred_region
        %s199 = ssub.s32 %s12, 1
        // Predicated region
        $region13: #{pdflab_net_forward.1} parent=11 // pred_check
          %p200 = pneg %p108
        $region14: #{pdflab_net_forward.1} parent=11 // pred_check_branch
          %202 = sbr.rel (%p200) target = $region16
        $region15: #{pdflab_net_forward.1} parent=11 // pred_region
          _
        $region16: #{pdflab_net_forward.1} parent=11 // pred_fallthru
          _
        // Predicated region
        $region17: #{pdflab_net_forward.1} parent=11 // pred_check
          %p203 = pneg %p129
        $region18: #{pdflab_net_forward.1} parent=11 // pred_check_branch
          %205 = sbr.rel (%p203) target = $region20
        $region19: #{pdflab_net_forward.1} parent=11 // pred_region
          _
        $region20: #{pdflab_net_forward.1} parent=11 // pred_fallthru
          _
      $region12: #{pdflab_net_forward.1} parent=5 // pred_fallthru
        _
      %p206 = scmp.lt.s32.totalorder %s12, 8
      // Predicated region
      $region21: #{pdflab_net_forward.1} parent=5 // pred_check
        %p207 = pneg %p206
      $region22: #{pdflab_net_forward.1} parent=5 // pred_check_branch
        %209 = sbr.rel (%p207) target = $region24
      $region23: #{pdflab_net_forward.1} parent=5 // pred_region
        // Predicated region
        $region25: #{pdflab_net_forward.1} parent=23 // pred_check
          %p210 = pneg %p53
        $region26: #{pdflab_net_forward.1} parent=23 // pred_check_branch
          %212 = sbr.rel (%p210) target = $region28
        $region27: #{pdflab_net_forward.1} parent=23 // pred_region
          %s213 = sand.u32 %s43, 1
          %s214 = sand.u32 %s43, 1
          %s215 = smul.addr %s214, 16
          %s216 = scalar_lea.vmem [#allocation7], %s215
          %s217 = smul.addr %s19, 4
          %s218 = sadd.s32 %s20, %s217
          %s219 = smul.addr %s218, 8
          %s220 = scalar_lea.vmem %s0, %s219
          // Predicated region
          $region29: #{pdflab_net_forward.1} parent=27 // pred_check
            _
          $region30: #{pdflab_net_forward.1} parent=27 // pred_check_branch
            %222 = sbr.rel (0) target = $region32
          $region31: #{pdflab_net_forward.1} parent=27 // pred_region
            // Predicated region
            $region33: #{pdflab_net_forward.1} parent=31 // pred_check
              _
            $region34: #{pdflab_net_forward.1} parent=31 // pred_check_branch
              %224 = sbr.rel (0) target = $region36
            $region35: #{pdflab_net_forward.1} parent=31 // pred_region
              // Predicated region
              $region48: #{pdflab_net_forward.1} parent=35 // pred_check
                _
              $region49: #{pdflab_net_forward.1} parent=35 // pred_check_branch
                %241 = sbr.rel (0) target = $region51
              $region50: #{pdflab_net_forward.1} parent=35 // pred_region
                loop: start=0, step=1, limit=1
                $region52: #{pdflab_net_forward.1} parent=50 // loop_pre_header
                  _
                $region53: #{pdflab_net_forward.1} parent=50 // loop_header
                  %s243 = sphi 0, %s247
                  %p244 = scmp.ge.s32.totalorder %s243, 1
                  %s248 = sphi %s220, %s220
                  %s249 = sphi %s216, %s216
                $region54: #{pdflab_net_forward.1} parent=50 // loop_header_branch
                  %246 = sbr.rel (%p244) target = $region58
                $region55: #{pdflab_net_forward.1} parent=50 // loop_body
                  %v250 = vld [vmem:[%s248] sm:$0xff]
                  %251 = vst [vmem:[%s249] sm:$0xff] %v250
                  %v252 = vld [vmem:[%s248 + $0x10] sm:$0xff]
                  %253 = vst [vmem:[%s249 + $0x8] sm:$0xff] %v252
                $region56: #{pdflab_net_forward.1} parent=50 // loop_footer
                  %s247 = sadd.s32 1, %s243
                $region57: #{pdflab_net_forward.1} parent=50 // loop_footer_branch
                  %242 = sbr.rel target = $region53
                $region58: #{pdflab_net_forward.1} parent=50 // loop_exit
                  _
              $region51: #{pdflab_net_forward.1} parent=35 // pred_fallthru
                _
              // Predicated region
              $region59: #{pdflab_net_forward.1} parent=35 // pred_check
                _
              $region60: #{pdflab_net_forward.1} parent=35 // pred_check_branch
                %255 = sbr.rel target = $region62
              $region61: #{pdflab_net_forward.1} parent=35 // pred_region
                _
              $region62: #{pdflab_net_forward.1} parent=35 // pred_fallthru
                _
            $region36: #{pdflab_net_forward.1} parent=31 // pred_fallthru
              _
            // Predicated region
            $region37: #{pdflab_net_forward.1} parent=31 // pred_check
              _
            $region38: #{pdflab_net_forward.1} parent=31 // pred_check_branch
              %226 = sbr.rel target = $region40
            $region39: #{pdflab_net_forward.1} parent=31 // pred_region
              loop: start=0, step=1, limit=1
              $region41: #{pdflab_net_forward.1} parent=39 // loop_pre_header
                _
              $region42: #{pdflab_net_forward.1} parent=39 // loop_header
                %s229 = sphi 0, %s233
                %p230 = scmp.ge.s32.totalorder %s229, 1
                %s234 = sphi %s220, %s220
                %s235 = sphi %s216, %s216
              $region43: #{pdflab_net_forward.1} parent=39 // loop_header_branch
                %232 = sbr.rel (%p230) target = $region47
              $region44: #{pdflab_net_forward.1} parent=39 // loop_body
                %v236 = vld [vmem:[%s234] sm:$0xff]
                %237 = vst [vmem:[%s235] sm:$0xff] %v236
                %v238 = vld [vmem:[%s234 + $0x10] sm:$0xff]
                %239 = vst [vmem:[%s235 + $0x8] sm:$0xff] %v238
              $region45: #{pdflab_net_forward.1} parent=39 // loop_footer
                %s233 = sadd.s32 1, %s229
              $region46: #{pdflab_net_forward.1} parent=39 // loop_footer_branch
                %228 = sbr.rel target = $region42
              $region47: #{pdflab_net_forward.1} parent=39 // loop_exit
                _
            $region40: #{pdflab_net_forward.1} parent=31 // pred_fallthru
              _
          $region32: #{pdflab_net_forward.1} parent=27 // pred_fallthru
            _
          %256 = vnop
        $region28: #{pdflab_net_forward.1} parent=23 // pred_fallthru
          _
        // Predicated region
        $region63: #{pdflab_net_forward.1} parent=23 // pred_check
          %p257 = pneg %p81
        $region64: #{pdflab_net_forward.1} parent=23 // pred_check_branch
          %259 = sbr.rel (%p257) target = $region66
        $region65: #{pdflab_net_forward.1} parent=23 // pred_region
          %s260 = sand.u32 %s71, 1
          %s261 = sand.u32 %s71, 1
          %s262 = smul.addr %s261, 16
          %s263 = scalar_lea.vmem [#allocation8], %s262
          %s264 = smul.addr %s19, 4
          %s265 = sadd.s32 %s21, %s264
          %s266 = smul.addr %s265, 8
          %s267 = scalar_lea.vmem %s1, %s266
          // Predicated region
          $region67: #{pdflab_net_forward.1} parent=65 // pred_check
            _
          $region68: #{pdflab_net_forward.1} parent=65 // pred_check_branch
            %269 = sbr.rel (0) target = $region70
          $region69: #{pdflab_net_forward.1} parent=65 // pred_region
            // Predicated region
            $region71: #{pdflab_net_forward.1} parent=69 // pred_check
              _
            $region72: #{pdflab_net_forward.1} parent=69 // pred_check_branch
              %271 = sbr.rel (0) target = $region74
            $region73: #{pdflab_net_forward.1} parent=69 // pred_region
              // Predicated region
              $region86: #{pdflab_net_forward.1} parent=73 // pred_check
                _
              $region87: #{pdflab_net_forward.1} parent=73 // pred_check_branch
                %288 = sbr.rel (0) target = $region89
              $region88: #{pdflab_net_forward.1} parent=73 // pred_region
                loop: start=0, step=1, limit=1
                $region90: #{pdflab_net_forward.1} parent=88 // loop_pre_header
                  _
                $region91: #{pdflab_net_forward.1} parent=88 // loop_header
                  %s290 = sphi 0, %s294
                  %p291 = scmp.ge.s32.totalorder %s290, 1
                  %s295 = sphi %s267, %s267
                  %s296 = sphi %s263, %s263
                $region92: #{pdflab_net_forward.1} parent=88 // loop_header_branch
                  %293 = sbr.rel (%p291) target = $region96
                $region93: #{pdflab_net_forward.1} parent=88 // loop_body
                  %v297 = vld [vmem:[%s295] sm:$0xff]
                  %298 = vst [vmem:[%s296] sm:$0xff] %v297
                  %v299 = vld [vmem:[%s295 + $0x10] sm:$0xff]
                  %300 = vst [vmem:[%s296 + $0x8] sm:$0xff] %v299
                $region94: #{pdflab_net_forward.1} parent=88 // loop_footer
                  %s294 = sadd.s32 1, %s290
                $region95: #{pdflab_net_forward.1} parent=88 // loop_footer_branch
                  %289 = sbr.rel target = $region91
                $region96: #{pdflab_net_forward.1} parent=88 // loop_exit
                  _
              $region89: #{pdflab_net_forward.1} parent=73 // pred_fallthru
                _
              // Predicated region
              $region97: #{pdflab_net_forward.1} parent=73 // pred_check
                _
              $region98: #{pdflab_net_forward.1} parent=73 // pred_check_branch
                %302 = sbr.rel target = $region100
              $region99: #{pdflab_net_forward.1} parent=73 // pred_region
                _
              $region100: #{pdflab_net_forward.1} parent=73 // pred_fallthru
                _
            $region74: #{pdflab_net_forward.1} parent=69 // pred_fallthru
              _
            // Predicated region
            $region75: #{pdflab_net_forward.1} parent=69 // pred_check
              _
            $region76: #{pdflab_net_forward.1} parent=69 // pred_check_branch
              %273 = sbr.rel target = $region78
            $region77: #{pdflab_net_forward.1} parent=69 // pred_region
              loop: start=0, step=1, limit=1
              $region79: #{pdflab_net_forward.1} parent=77 // loop_pre_header
                _
              $region80: #{pdflab_net_forward.1} parent=77 // loop_header
                %s276 = sphi 0, %s280
                %p277 = scmp.ge.s32.totalorder %s276, 1
                %s281 = sphi %s267, %s267
                %s282 = sphi %s263, %s263
              $region81: #{pdflab_net_forward.1} parent=77 // loop_header_branch
                %279 = sbr.rel (%p277) target = $region85
              $region82: #{pdflab_net_forward.1} parent=77 // loop_body
                %v283 = vld [vmem:[%s281] sm:$0xff]
                %284 = vst [vmem:[%s282] sm:$0xff] %v283
                %v285 = vld [vmem:[%s281 + $0x10] sm:$0xff]
                %286 = vst [vmem:[%s282 + $0x8] sm:$0xff] %v285
              $region83: #{pdflab_net_forward.1} parent=77 // loop_footer
                %s280 = sadd.s32 1, %s276
              $region84: #{pdflab_net_forward.1} parent=77 // loop_footer_branch
                %275 = sbr.rel target = $region80
              $region85: #{pdflab_net_forward.1} parent=77 // loop_exit
                _
            $region78: #{pdflab_net_forward.1} parent=69 // pred_fallthru
              _
          $region70: #{pdflab_net_forward.1} parent=65 // pred_fallthru
            _
          %303 = vnop
        $region66: #{pdflab_net_forward.1} parent=23 // pred_fallthru
          _
      $region24: #{pdflab_net_forward.1} parent=5 // pred_fallthru
        _
      %p304 = scmp.le.s32.totalorder 1, %s12
      %p305 = scmp.lt.s32.totalorder %s12, 9
      %p306 = pnand %p304, %p305
      %p307 = pneg %p306
      // Predicated region
      $region101: #{pdflab_net_forward.1} parent=5 // pred_check
        _
      $region102: #{pdflab_net_forward.1} parent=5 // pred_check_branch
        %309 = sbr.rel (%p306) target = $region104
      $region103: #{pdflab_net_forward.1} parent=5 // pred_region
        %s310 = ssub.s32 %s12, 1
        %s311 = sand.u32 %s46, 1
        %s312 = sand.u32 %s46, 1
        %s313 = smul.addr %s312, 16
        %s314 = scalar_lea.vmem [#allocation7], %s313
        // Predicated region
        $region105: #{pdflab_net_forward.1} parent=103 // pred_check
          %p315 = pneg %p59
        $region106: #{pdflab_net_forward.1} parent=103 // pred_check_branch
          %317 = sbr.rel (%p315) target = $region108
        $region107: #{pdflab_net_forward.1} parent=103 // pred_region
          _
        $region108: #{pdflab_net_forward.1} parent=103 // pred_fallthru
          _
        %s318 = sand.u32 %s74, 1
        %s319 = sand.u32 %s74, 1
        %s320 = smul.addr %s319, 16
        %s321 = scalar_lea.vmem [#allocation8], %s320
        // Predicated region
        $region109: #{pdflab_net_forward.1} parent=103 // pred_check
          %p322 = pneg %p87
        $region110: #{pdflab_net_forward.1} parent=103 // pred_check_branch
          %324 = sbr.rel (%p322) target = $region112
        $region111: #{pdflab_net_forward.1} parent=103 // pred_region
          _
        $region112: #{pdflab_net_forward.1} parent=103 // pred_fallthru
          _
        %s325 = sand.u32 %s46, 1
        %s326 = sand.u32 %s46, 1
        %s327 = smul.addr %s326, 16
        %s328 = scalar_lea.vmem [#allocation7], %s327
        %p329 = pneg %p59
        %p330 = pneg %p56
        %s331 = sand.u32 %s74, 1
        %s332 = sand.u32 %s74, 1
        %s333 = smul.addr %s332, 16
        %s334 = scalar_lea.vmem [#allocation8], %s333
        %p335 = pneg %p87
        %p336 = pneg %p84
        %p337 = pneg %p108
        %p338 = pneg %p105
        %p339 = pneg %p129
        %p340 = pneg %p126
        %p341 = pneg %p157
        %p342 = pneg %p154
        %p343 = scmp.lt.s32.totalorder %s22, 1
        %s344 = scalar_select %p343, %s22, 1
        %p345 = scmp.lt.s32.totalorder %s23, 1
        %s346 = scalar_select %p345, %s23, 1
        %s347 = smul.addr %s344, 2
        %s348 = sadd.s32 %s346, %s347
        %s349 = smul.addr %s348, 4
        %s350 = scalar_lea.vmem %s4, %s349
        %p351 = pneg %p185
        %p352 = pneg %p182
        %p353 = scmp.lt.s32.totalorder %s22, 1
        %s354 = scalar_select %p353, %s22, 1
        %p355 = scmp.lt.s32.totalorder %s23, 1
        %s356 = scalar_select %p355, %s23, 1
        %s357 = smul.addr %s354, 2
        %s358 = sadd.s32 %s356, %s357
        %s359 = smul.addr %s358, 4
        %s360 = scalar_lea.vmem %s5, %s359
        %p361 = scmp.lt.s32.totalorder %s22, 1
        %s362 = scalar_select %p361, %s22, 1
        %p363 = scmp.lt.s32.totalorder %s23, 1
        %s364 = scalar_select %p363, %s23, 1
        %s365 = smul.addr %s362, 2
        %s366 = sadd.s32 %s364, %s365
        %s367 = smul.addr %s366, 4
        %s368 = scalar_lea.vmem %s4, %s367
        %p369 = scmp.lt.s32.totalorder %s22, 1
        %s370 = scalar_select %p369, %s22, 1
        %p371 = scmp.lt.s32.totalorder %s23, 1
        %s372 = scalar_select %p371, %s23, 1
        %s373 = smul.addr %s370, 2
        %s374 = sadd.s32 %s372, %s373
        %s375 = smul.addr %s374, 4
        %s376 = scalar_lea.vmem %s5, %s375
        %v378 = vld [vmem:[%s2] sm:$0xff]
        %v379 = vld [vmem:[%s2 + $0x8] sm:$0xff]
        %v380 = vld [vmem:[%s2 + $0x10] sm:$0xff]
        %v381 = vld [vmem:[%s2 + $0x18] sm:$0xff]
        %v382 = vld [vmem:[%s2 + $0x20] sm:$0xff]
        %v383 = vld [vmem:[%s2 + $0x28] sm:$0xff]
        %v384 = vld [vmem:[%s2 + $0x30] sm:$0xff]
        %v385 = vld [vmem:[%s2 + $0x38] sm:$0xff]
        %v386 = vld [vmem:[%s2 + $0x40] sm:$0xff]
        %v387 = vld [vmem:[%s2 + $0x48] sm:$0xff]
        %v388 = vld [vmem:[%s2 + $0x50] sm:$0xff]
        %v389 = vld [vmem:[%s2 + $0x58] sm:$0xff]
        %v390 = vld [vmem:[%s2 + $0x60] sm:$0xff]
        %v391 = vld [vmem:[%s2 + $0x68] sm:$0xff]
        %v392 = vld [vmem:[%s2 + $0x70] sm:$0xff]
        %v393 = vld [vmem:[%s2 + $0x78] sm:$0xff]
        %v394 = vld [vmem:[%s2 + $0x80] sm:$0xff]
        %v395 = vld [vmem:[%s2 + $0x88] sm:$0xff]
        %v396 = vld [vmem:[%s2 + $0x90] sm:$0xff]
        %v397 = vld [vmem:[%s2 + $0x98] sm:$0xff]
        %v398 = vld [vmem:[%s2 + $0xa0] sm:$0xff]
        %v399 = vld [vmem:[%s3] sm:$0xff]
        %v400 = vld [vmem:[%s3 + $0x8] sm:$0xff]
        %v401 = vld [vmem:[%s3 + $0x10] sm:$0xff]
        %v402 = vld [vmem:[%s3 + $0x18] sm:$0xff]
        %v403 = vld [vmem:[%s3 + $0x20] sm:$0xff]
        %v404 = vld [vmem:[%s3 + $0x28] sm:$0xff]
        %v405 = vld [vmem:[%s3 + $0x30] sm:$0xff]
        %v406 = vld [vmem:[%s3 + $0x38] sm:$0xff]
        %v407 = vld [vmem:[%s3 + $0x40] sm:$0xff]
        %v408 = vld [vmem:[%s3 + $0x48] sm:$0xff]
        %v409 = vld [vmem:[%s3 + $0x50] sm:$0xff]
        %v410 = vld [vmem:[%s3 + $0x58] sm:$0xff]
        %v411 = vld [vmem:[%s3 + $0x60] sm:$0xff]
        %v412 = vld [vmem:[%s3 + $0x68] sm:$0xff]
        %v413 = vld [vmem:[%s3 + $0x70] sm:$0xff]
        %v414 = vld [vmem:[%s3 + $0x78] sm:$0xff]
        %v415 = vld [vmem:[%s3 + $0x80] sm:$0xff]
        %v416 = vld [vmem:[%s3 + $0x88] sm:$0xff]
        %v417 = vld [vmem:[%s3 + $0x90] sm:$0xff]
        %v418 = vld [vmem:[%s3 + $0x98] sm:$0xff]
        %v419 = vld [vmem:[%s3 + $0xa0] sm:$0xff]
        %v420 = vld [vmem:[%s3 + $0xa8] sm:$0xff]
        %v421 = vld [vmem:[%s3 + $0xb0] sm:$0xff]
        %v422 = vld [vmem:[%s3 + $0xb8] sm:$0xff]
        %v423 = vld [vmem:[%s3 + $0xc0] sm:$0xff]
        %v424 = vld [vmem:[%s3 + $0xc8] sm:$0xff]
        %v425 = vld [vmem:[%s3 + $0xd0] sm:$0xff]
        %v426 = vld [vmem:[%s3 + $0xd8] sm:$0xff]
        %v427 = vld [vmem:[%s3 + $0xe0] sm:$0xff]
        %p428 = scmp.eq.s32.totalorder %s24, 0
        // Predicated region
        $region113: #{pdflab_net_forward.1} parent=103 // pred_check
          %p429 = pneg %p428
        $region114: #{pdflab_net_forward.1} parent=103 // pred_check_branch
          %431 = sbr.rel (%p429) target = $region116
        $region115: #{pdflab_net_forward.1} parent=103 // pred_region
          %v432 = vld [vmem:[%s314] sm:$0xff]
          %v433 = vld [vmem:[%s314 + $0x8] sm:$0x1]
          %435 = vset.pattern.permute.xlu0 0
          %436 = vperm.xlu0 %435, %v399
          %v437 = vpop.permute.xlu0 %436
          %440 = vset.pattern.permute.xlu0 0
          %441 = vperm.xlu0 %440, %v400
          %v442 = vpop.permute.xlu0 %441
          %vm444 = vcmask 72704
          %v446 = vsel %vm444, %v378, 0
          %v449 = vsel %vm444, %v379, 0
          %vm451 = vcmask 1040384
          %v453 = vsel %vm451, %v433, 0
          %455 = vmatprep.subr.mxu0 0.0
          %456 = vmatpush1.msra.mxu0 %v432
          %457 = vmatprep.subr.mxu0 0.0
          %458 = vmatpush1.msra.mxu0 %v453
          %459 = vmatprep.subr.mxu0 0.0
          %460 = vmatpush1.msra.mxu0 0.0
          %461 = vmatprep.subr.mxu0 0.0
          %462 = vmatpush1.msra.mxu0 0.0
          %463 = vmatprep.subr.mxu0 0.0
          %464 = vmatpush1.msra.mxu0 0.0
          %465 = vmatprep.subr.mxu0 0.0
          %466 = vmatpush1.msra.mxu0 0.0
          %467 = vmatprep.subr.mxu0 0.0
          %468 = vmatpush1.msra.mxu0 0.0
          %469 = vmatprep.subr.mxu0 0.0
          %470 = vmatpush1.msra.mxu0 0.0
          %471 = vmatprep.subr.mxu0 0.0
          %472 = vmatpush1.msra.mxu0 0.0
          %473 = vmatprep.subr.mxu0 0.0
          %474 = vmatpush1.msra.mxu0 0.0
          %475 = vmatprep.subr.mxu0 0.0
          %476 = vmatpush1.msra.mxu0 0.0
          %477 = vmatprep.subr.mxu0 0.0
          %478 = vmatpush1.msra.mxu0 0.0
          %479 = vmatprep.subr.mxu0 0.0
          %480 = vmatpush1.msra.mxu0 0.0
          %481 = vmatprep.subr.mxu0 0.0
          %482 = vmatpush1.msra.mxu0 0.0
          %483 = vmatprep.subr.mxu0 0.0
          %484 = vmatpush1.msra.mxu0 0.0
          %485 = vmatprep.subr.mxu0 0.0
          %486 = vmatpush1.msra.mxu0 0.0
          %487 = vmatprep.subr.mxu0 0.0
          %488 = vmatpush1.msra.mxu0 0.0
          %489 = vmatprep.subr.mxu0 0.0
          %490 = vmatpush1.msra.mxu0 0.0
          %491 = vmatprep.subr.mxu0 0.0
          %492 = vmatpush1.msra.mxu0 0.0
          %493 = vmatprep.subr.mxu0 0.0
          %494 = vmatpush1.msra.mxu0 0.0
          %495 = vmatprep.subr.mxu0 0.0
          %496 = vmatpush1.msra.mxu0 0.0
          %497 = vmatprep.subr.mxu0 0.0
          %498 = vmatpush1.msra.mxu0 0.0
          %499 = vmatprep.subr.mxu0 0.0
          %500 = vmatpush1.msra.mxu0 0.0
          %501 = vmatprep.subr.mxu0 0.0
          %502 = vmatpush1.msra.mxu0 0.0
          %503 = vmatprep.subr.mxu0 0.0
          %504 = vmatpush1.msra.mxu0 0.0
          %505 = vmatprep.subr.mxu0 0.0
          %506 = vmatpush1.msra.mxu0 0.0
          %507 = vmatprep.subr.mxu0 0.0
          %508 = vmatpush1.msra.mxu0 0.0
          %509 = vmatprep.subr.mxu0 0.0
          %510 = vmatpush1.msra.mxu0 0.0
          %511 = vmatprep.subr.mxu0 0.0
          %512 = vmatpush1.msra.mxu0 0.0
          %513 = vmatprep.subr.mxu0 0.0
          %514 = vmatpush1.msra.mxu0 0.0
          %515 = vmatprep.subr.mxu0 0.0
          %516 = vmatpush1.msra.mxu0 0.0
          %517 = vmatprep.subr.mxu0 0.0
          %518 = vmatpush1.msra.mxu0 0.0
          %519 = vmatprep.mubr.f32.mxu0 0.0
          %520 = vmatmul.mubr.f32.gmra.mrb[0].mxu0 %v446
          %v521 = vpop.f32.mrb[0].mxu0
          %v522 = vadd.f32 %v437, %v521
          %v523 = vpop.f32.mrb[0].mxu0
          %524 = vmatprep.mubr.f32.mxu0 0.0
          %525 = vmatmul.mubr.f32.gmra.mrb[0].mxu0 %v449
          %v526 = vpop.f32.mrb[0].mxu0
          %v527 = vadd.f32 %v442, %v526
          %v528 = vpop.f32.mrb[0].mxu0
          %529 = vdwg.mxu0
          %530 = vst [vmem:[#allocation2] sm:$0xff] %v522
          %531 = vst [vmem:[#allocation2 + $0x8] sm:$0xff] %v527
          %v532 = vadd.f32 %v522, %v527
          %v533 = vrot.slane %v532, 4
          %v534 = vadd.f32 %v532, %v533
          %v535 = vrot.slane %v534, 2
          %v536 = vadd.f32 %v534, %v535
          %v537 = vrot.slane %v536, 1
          %v538 = vadd.f32 %v536, %v537
          %v539 = vrcp.pop 16.0
          %v540 = vmul.f32 %v538, %v539
          %v541 = vsub.f32 %v522, %v540
          %v542 = vsub.f32 %v527, %v540
          %v543 = vmul.f32 %v541, %v541
          %v544 = vmul.f32 %v542, %v542
          %v545 = vadd.f32 %v543, %v544
          %v546 = vrot.slane %v545, 4
          %v547 = vadd.f32 %v545, %v546
          %v548 = vrot.slane %v547, 2
          %v549 = vadd.f32 %v547, %v548
          %v550 = vrot.slane %v549, 1
          %v551 = vadd.f32 %v549, %v550
          %v552 = vmul.f32 %v551, %v539
          %v553 = vadd.f32 %v552, 1e-05
          %v554 = vrsqrt.pop %v553
          %v555 = vmul.f32 %v541, %v554
          %v556 = vmul.f32 %v542, %v554
          %558 = vset.pattern.permute.xlu0 0
          %559 = vperm.xlu0 %558, %v420
          %v560 = vpop.permute.xlu0 %559
          %563 = vset.pattern.permute.xlu0 0
          %564 = vperm.xlu0 %563, %v421
          %v565 = vpop.permute.xlu0 %564
          %v567 = vmul.f32 %v555, %v560
          %v568 = vmul.f32 %v556, %v565
          %570 = vset.pattern.permute.xlu0 0
          %571 = vperm.xlu0 %570, %v422
          %v572 = vpop.permute.xlu0 %571
          %575 = vset.pattern.permute.xlu0 0
          %576 = vperm.xlu0 %575, %v423
          %v577 = vpop.permute.xlu0 %576
          %v579 = vadd.f32 %v567, %v572
          %v580 = vadd.f32 %v568, %v577
          %582 = vset.pattern.permute.xlu0 0
          %583 = vperm.xlu0 %582, %v401
          %v584 = vpop.permute.xlu0 %583
          %587 = vset.pattern.permute.xlu0 0
          %588 = vperm.xlu0 %587, %v402
          %v589 = vpop.permute.xlu0 %588
          %vm591 = vcmask 130048
          %v593 = vsel %vm591, %v380, 0
          %v596 = vsel %vm591, %v381, 0
          %598 = vmatprep.subr.mxu0 0.0
          %599 = vmatpush1.msra.mxu0 %v579
          %600 = vmatprep.subr.mxu0 0.0
          %601 = vmatpush1.msra.mxu0 %v580
          %602 = vmatprep.subr.mxu0 0.0
          %603 = vmatpush1.msra.mxu0 0.0
          %604 = vmatprep.subr.mxu0 0.0
          %605 = vmatpush1.msra.mxu0 0.0
          %606 = vmatprep.subr.mxu0 0.0
          %607 = vmatpush1.msra.mxu0 0.0
          %608 = vmatprep.subr.mxu0 0.0
          %609 = vmatpush1.msra.mxu0 0.0
          %610 = vmatprep.subr.mxu0 0.0
          %611 = vmatpush1.msra.mxu0 0.0
          %612 = vmatprep.subr.mxu0 0.0
          %613 = vmatpush1.msra.mxu0 0.0
          %614 = vmatprep.subr.mxu0 0.0
          %615 = vmatpush1.msra.mxu0 0.0
          %616 = vmatprep.subr.mxu0 0.0
          %617 = vmatpush1.msra.mxu0 0.0
          %618 = vmatprep.subr.mxu0 0.0
          %619 = vmatpush1.msra.mxu0 0.0
          %620 = vmatprep.subr.mxu0 0.0
          %621 = vmatpush1.msra.mxu0 0.0
          %622 = vmatprep.subr.mxu0 0.0
          %623 = vmatpush1.msra.mxu0 0.0
          %624 = vmatprep.subr.mxu0 0.0
          %625 = vmatpush1.msra.mxu0 0.0
          %626 = vmatprep.subr.mxu0 0.0
          %627 = vmatpush1.msra.mxu0 0.0
          %628 = vmatprep.subr.mxu0 0.0
          %629 = vmatpush1.msra.mxu0 0.0
          %630 = vmatprep.subr.mxu0 0.0
          %631 = vmatpush1.msra.mxu0 0.0
          %632 = vmatprep.subr.mxu0 0.0
          %633 = vmatpush1.msra.mxu0 0.0
          %634 = vmatprep.subr.mxu0 0.0
          %635 = vmatpush1.msra.mxu0 0.0
          %636 = vmatprep.subr.mxu0 0.0
          %637 = vmatpush1.msra.mxu0 0.0
          %638 = vmatprep.subr.mxu0 0.0
          %639 = vmatpush1.msra.mxu0 0.0
          %640 = vmatprep.subr.mxu0 0.0
          %641 = vmatpush1.msra.mxu0 0.0
          %642 = vmatprep.subr.mxu0 0.0
          %643 = vmatpush1.msra.mxu0 0.0
          %644 = vmatprep.subr.mxu0 0.0
          %645 = vmatpush1.msra.mxu0 0.0
          %646 = vmatprep.subr.mxu0 0.0
          %647 = vmatpush1.msra.mxu0 0.0
          %648 = vmatprep.subr.mxu0 0.0
          %649 = vmatpush1.msra.mxu0 0.0
          %650 = vmatprep.subr.mxu0 0.0
          %651 = vmatpush1.msra.mxu0 0.0
          %652 = vmatprep.subr.mxu0 0.0
          %653 = vmatpush1.msra.mxu0 0.0
          %654 = vmatprep.subr.mxu0 0.0
          %655 = vmatpush1.msra.mxu0 0.0
          %656 = vmatprep.subr.mxu0 0.0
          %657 = vmatpush1.msra.mxu0 0.0
          %658 = vmatprep.subr.mxu0 0.0
          %659 = vmatpush1.msra.mxu0 0.0
          %660 = vmatprep.subr.mxu0 0.0
          %661 = vmatpush1.msra.mxu0 0.0
          %662 = vmatprep.mubr.f32.mxu0 0.0
          %663 = vmatmul.mubr.f32.gmra.mrb[0].mxu0 %v593
          %v664 = vpop.f32.mrb[0].mxu0
          %v665 = vadd.f32 %v584, %v664
          %v666 = vpop.f32.mrb[0].mxu0
          %667 = vmatprep.mubr.f32.mxu0 0.0
          %668 = vmatmul.mubr.f32.gmra.mrb[0].mxu0 %v596
          %v669 = vpop.f32.mrb[0].mxu0
          %v670 = vadd.f32 %v589, %v669
          %v671 = vpop.f32.mrb[0].mxu0
          %672 = vdwg.mxu0
          %v673 = vmul.f32 %v665, 0.25
          %v674 = vmul.f32 %v670, 0.25
          %675 = vxpose.xlu0.b32.start [1/16] %v673, 128
          %676 = vxpose.xlu0.b32.cont [2/16] %v674, 128
          %677 = vxpose.xlu0.b32.cont [3/16] 0.0, 128
          %678 = vxpose.xlu0.b32.cont [4/16] 0.0, 128
          %679 = vxpose.xlu0.b32.cont [5/16] 0.0, 128
          %680 = vxpose.xlu0.b32.cont [6/16] 0.0, 128
          %681 = vxpose.xlu0.b32.cont [7/16] 0.0, 128
          %682 = vxpose.xlu0.b32.cont [8/16] 0.0, 128
          %683 = vxpose.xlu0.b32.cont [9/16] 0.0, 128
          %684 = vxpose.xlu0.b32.cont [10/16] 0.0, 128
          %685 = vxpose.xlu0.b32.cont [11/16] 0.0, 128
          %686 = vxpose.xlu0.b32.cont [12/16] 0.0, 128
          %687 = vxpose.xlu0.b32.cont [13/16] 0.0, 128
          %688 = vxpose.xlu0.b32.cont [14/16] 0.0, 128
          %689 = vxpose.xlu0.b32.cont [15/16] 0.0, 128
          %690 = vxpose.xlu0.b32.end [16/16] 0.0, 128
          %v691 = vpop.trf.xlu0
          %v692 = vpop.trf.xlu0
          %v693 = vpop.trf.xlu0
          %v694 = vpop.trf.xlu0
          %v695 = vpop.trf.xlu0
          %v696 = vpop.trf.xlu0
          %v697 = vpop.trf.xlu0
          %v698 = vpop.trf.xlu0
          %v699 = vpop.trf.xlu0
          %v700 = vpop.trf.xlu0
          %v701 = vpop.trf.xlu0
          %v702 = vpop.trf.xlu0
          %v703 = vpop.trf.xlu0
          %v704 = vpop.trf.xlu0
          %v705 = vpop.trf.xlu0
          %v706 = vpop.trf.xlu0
          %v707 = vpack.c.bf16 %v692, %v691
          %v708 = vpack.c.bf16 %v694, %v693
          %v709 = vpack.c.bf16 %v696, %v695
          %v710 = vpack.c.bf16 %v698, %v697
          %v711 = vpack.c.bf16 %v700, %v699
          %v712 = vpack.c.bf16 %v702, %v701
          %v713 = vpack.c.bf16 %v704, %v703
          %v714 = vpack.c.bf16 %v706, %v705
          %715 = vst.msk [vmem:[#allocation3] sm:$0xff] %vm591, %v707
          %716 = vst.msk [vmem:[#allocation3 + $0x8] sm:$0xff] %vm591, %v708
          %717 = vst.msk [vmem:[#allocation3 + $0x10] sm:$0xff] %vm591, %v709
          %718 = vst.msk [vmem:[#allocation3 + $0x18] sm:$0xff] %vm591, %v710
          %719 = vst.msk [vmem:[#allocation3 + $0x20] sm:$0xff] %vm591, %v711
          %720 = vst.msk [vmem:[#allocation3 + $0x28] sm:$0xff] %vm591, %v712
          %721 = vst.msk [vmem:[#allocation3 + $0x30] sm:$0xff] %vm591, %v713
          %722 = vst.msk [vmem:[#allocation3 + $0x38] sm:$0xff] %vm591, %v714
          %vm723 = vcmask 7168
          %724 = vst.msk [vmem:[#allocation4] sm:$0xff] %vm723, -inf
          %725 = vst.msk [vmem:[#allocation4 + $0x8] sm:$0xff] %vm723, -inf
          %726 = vst.msk [vmem:[#allocation4 + $0x10] sm:$0xff] %vm723, -inf
          %727 = vst.msk [vmem:[#allocation4 + $0x18] sm:$0xff] %vm723, -inf
          %728 = vst.msk [vmem:[#allocation4 + $0x20] sm:$0xff] %vm723, -inf
          %729 = vst.msk [vmem:[#allocation4 + $0x28] sm:$0xff] %vm723, -inf
          %730 = vst.msk [vmem:[#allocation4 + $0x30] sm:$0xff] %vm723, -inf
          %731 = vst.msk [vmem:[#allocation4 + $0x38] sm:$0xff] %vm723, -inf
          %732 = vst.msk [vmem:[#allocation4 + $0x40] sm:$0xff] %vm723, -inf
          %733 = vst.msk [vmem:[#allocation4 + $0x48] sm:$0xff] %vm723, -inf
          %734 = vst.msk [vmem:[#allocation4 + $0x50] sm:$0xff] %vm723, -inf
          %735 = vst.msk [vmem:[#allocation4 + $0x58] sm:$0xff] %vm723, -inf
          %736 = vst.msk [vmem:[#allocation4 + $0x60] sm:$0xff] %vm723, -inf
          %737 = vst.msk [vmem:[#allocation4 + $0x68] sm:$0xff] %vm723, -inf
          %738 = vst.msk [vmem:[#allocation4 + $0x70] sm:$0xff] %vm723, -inf
          %739 = vst.msk [vmem:[#allocation4 + $0x78] sm:$0xff] %vm723, -inf
          %740 = vst.msk [vmem:[#allocation5] sm:$0xff] %vm723, 0.0
          %741 = vst.msk [vmem:[#allocation5 + $0x8] sm:$0xff] %vm723, 0.0
          %742 = vst.msk [vmem:[#allocation5 + $0x10] sm:$0xff] %vm723, 0.0
          %743 = vst.msk [vmem:[#allocation5 + $0x18] sm:$0xff] %vm723, 0.0
          %744 = vst.msk [vmem:[#allocation5 + $0x20] sm:$0xff] %vm723, 0.0
          %745 = vst.msk [vmem:[#allocation5 + $0x28] sm:$0xff] %vm723, 0.0
          %746 = vst.msk [vmem:[#allocation5 + $0x30] sm:$0xff] %vm723, 0.0
          %747 = vst.msk [vmem:[#allocation5 + $0x38] sm:$0xff] %vm723, 0.0
          %748 = vst.msk [vmem:[#allocation5 + $0x40] sm:$0xff] %vm723, 0.0
          %749 = vst.msk [vmem:[#allocation5 + $0x48] sm:$0xff] %vm723, 0.0
          %750 = vst.msk [vmem:[#allocation5 + $0x50] sm:$0xff] %vm723, 0.0
          %751 = vst.msk [vmem:[#allocation5 + $0x58] sm:$0xff] %vm723, 0.0
          %752 = vst.msk [vmem:[#allocation5 + $0x60] sm:$0xff] %vm723, 0.0
          %753 = vst.msk [vmem:[#allocation5 + $0x68] sm:$0xff] %vm723, 0.0
          %754 = vst.msk [vmem:[#allocation5 + $0x70] sm:$0xff] %vm723, 0.0
          %755 = vst.msk [vmem:[#allocation5 + $0x78] sm:$0xff] %vm723, 0.0
          %756 = vst.msk [vmem:[#allocation6] sm:$0xff] %vm591, 0.0
          %757 = vst.msk [vmem:[#allocation6 + $0x8] sm:$0xff] %vm591, 0.0
          %758 = vst.msk [vmem:[#allocation6 + $0x10] sm:$0xff] %vm591, 0.0
          %759 = vst.msk [vmem:[#allocation6 + $0x18] sm:$0xff] %vm591, 0.0
          %760 = vst.msk [vmem:[#allocation6 + $0x20] sm:$0xff] %vm591, 0.0
          %761 = vst.msk [vmem:[#allocation6 + $0x28] sm:$0xff] %vm591, 0.0
          %762 = vst.msk [vmem:[#allocation6 + $0x30] sm:$0xff] %vm591, 0.0
          %763 = vst.msk [vmem:[#allocation6 + $0x38] sm:$0xff] %vm591, 0.0
          %764 = vst.msk [vmem:[#allocation6 + $0x40] sm:$0xff] %vm591, 0.0
          %765 = vst.msk [vmem:[#allocation6 + $0x48] sm:$0xff] %vm591, 0.0
          %766 = vst.msk [vmem:[#allocation6 + $0x50] sm:$0xff] %vm591, 0.0
          %767 = vst.msk [vmem:[#allocation6 + $0x58] sm:$0xff] %vm591, 0.0
          %768 = vst.msk [vmem:[#allocation6 + $0x60] sm:$0xff] %vm591, 0.0
          %769 = vst.msk [vmem:[#allocation6 + $0x68] sm:$0xff] %vm591, 0.0
          %770 = vst.msk [vmem:[#allocation6 + $0x70] sm:$0xff] %vm591, 0.0
          %771 = vst.msk [vmem:[#allocation6 + $0x78] sm:$0xff] %vm591, 0.0
        $region116: #{pdflab_net_forward.1} parent=103 // pred_fallthru
          _
        %v772 = vld [vmem:[%s321] sm:$0xff]
        %v773 = vld [vmem:[%s321 + $0x8] sm:$0x1]
        %775 = vset.pattern.permute.xlu0 0
        %776 = vperm.xlu0 %775, %v399
        %v777 = vpop.permute.xlu0 %776
        %780 = vset.pattern.permute.xlu0 0
        %781 = vperm.xlu0 %780, %v400
        %v782 = vpop.permute.xlu0 %781
        %vm784 = vcmask 72704
        %v786 = vsel %vm784, %v378, 0
        %v789 = vsel %vm784, %v379, 0
        %vm791 = vcmask 1040384
        %v793 = vsel %vm791, %v773, 0
        %795 = vmatprep.subr.mxu0 0.0
        %796 = vmatpush1.msra.mxu0 %v772
        %797 = vmatprep.subr.mxu0 0.0
        %798 = vmatpush1.msra.mxu0 %v793
        %799 = vmatprep.subr.mxu0 0.0
        %800 = vmatpush1.msra.mxu0 0.0
        %801 = vmatprep.subr.mxu0 0.0
        %802 = vmatpush1.msra.mxu0 0.0
        %803 = vmatprep.subr.mxu0 0.0
        %804 = vmatpush1.msra.mxu0 0.0
        %805 = vmatprep.subr.mxu0 0.0
        %806 = vmatpush1.msra.mxu0 0.0
        %807 = vmatprep.subr.mxu0 0.0
        %808 = vmatpush1.msra.mxu0 0.0
        %809 = vmatprep.subr.mxu0 0.0
        %810 = vmatpush1.msra.mxu0 0.0
        %811 = vmatprep.subr.mxu0 0.0
        %812 = vmatpush1.msra.mxu0 0.0
        %813 = vmatprep.subr.mxu0 0.0
        %814 = vmatpush1.msra.mxu0 0.0
        %815 = vmatprep.subr.mxu0 0.0
        %816 = vmatpush1.msra.mxu0 0.0
        %817 = vmatprep.subr.mxu0 0.0
        %818 = vmatpush1.msra.mxu0 0.0
        %819 = vmatprep.subr.mxu0 0.0
        %820 = vmatpush1.msra.mxu0 0.0
        %821 = vmatprep.subr.mxu0 0.0
        %822 = vmatpush1.msra.mxu0 0.0
        %823 = vmatprep.subr.mxu0 0.0
        %824 = vmatpush1.msra.mxu0 0.0
        %825 = vmatprep.subr.mxu0 0.0
        %826 = vmatpush1.msra.mxu0 0.0
        %827 = vmatprep.subr.mxu0 0.0
        %828 = vmatpush1.msra.mxu0 0.0
        %829 = vmatprep.subr.mxu0 0.0
        %830 = vmatpush1.msra.mxu0 0.0
        %831 = vmatprep.subr.mxu0 0.0
        %832 = vmatpush1.msra.mxu0 0.0
        %833 = vmatprep.subr.mxu0 0.0
        %834 = vmatpush1.msra.mxu0 0.0
        %835 = vmatprep.subr.mxu0 0.0
        %836 = vmatpush1.msra.mxu0 0.0
        %837 = vmatprep.subr.mxu0 0.0
        %838 = vmatpush1.msra.mxu0 0.0
        %839 = vmatprep.subr.mxu0 0.0
        %840 = vmatpush1.msra.mxu0 0.0
        %841 = vmatprep.subr.mxu0 0.0
        %842 = vmatpush1.msra.mxu0 0.0
        %843 = vmatprep.subr.mxu0 0.0
        %844 = vmatpush1.msra.mxu0 0.0
        %845 = vmatprep.subr.mxu0 0.0
        %846 = vmatpush1.msra.mxu0 0.0
        %847 = vmatprep.subr.mxu0 0.0
        %848 = vmatpush1.msra.mxu0 0.0
        %849 = vmatprep.subr.mxu0 0.0
        %850 = vmatpush1.msra.mxu0 0.0
        %851 = vmatprep.subr.mxu0 0.0
        %852 = vmatpush1.msra.mxu0 0.0
        %853 = vmatprep.subr.mxu0 0.0
        %854 = vmatpush1.msra.mxu0 0.0
        %855 = vmatprep.subr.mxu0 0.0
        %856 = vmatpush1.msra.mxu0 0.0
        %857 = vmatprep.subr.mxu0 0.0
        %858 = vmatpush1.msra.mxu0 0.0
        %859 = vmatprep.mubr.f32.mxu0 0.0
        %860 = vmatmul.mubr.f32.gmra.mrb[0].mxu0 %v786
        %v861 = vpop.f32.mrb[0].mxu0
        %v862 = vadd.f32 %v777, %v861
        %v863 = vpop.f32.mrb[0].mxu0
        %864 = vmatprep.mubr.f32.mxu0 0.0
        %865 = vmatmul.mubr.f32.gmra.mrb[0].mxu0 %v789
        %v866 = vpop.f32.mrb[0].mxu0
        %v867 = vadd.f32 %v782, %v866
        %v868 = vpop.f32.mrb[0].mxu0
        %869 = vdwg.mxu0
        %v870 = vadd.f32 %v862, %v867
        %v871 = vrot.slane %v870, 4
        %v872 = vadd.f32 %v870, %v871
        %v873 = vrot.slane %v872, 2
        %v874 = vadd.f32 %v872, %v873
        %v875 = vrot.slane %v874, 1
        %v876 = vadd.f32 %v874, %v875
        %v877 = vrcp.pop 16.0
        %v878 = vmul.f32 %v876, %v877
        %v879 = vsub.f32 %v862, %v878
        %v880 = vsub.f32 %v867, %v878
        %v881 = vmul.f32 %v879, %v879
        %v882 = vmul.f32 %v880, %v880
        %v883 = vadd.f32 %v881, %v882
        %v884 = vrot.slane %v883, 4
        %v885 = vadd.f32 %v883, %v884
        %v886 = vrot.slane %v885, 2
        %v887 = vadd.f32 %v885, %v886
        %v888 = vrot.slane %v887, 1
        %v889 = vadd.f32 %v887, %v888
        %v890 = vmul.f32 %v889, %v877
        %v891 = vadd.f32 %v890, 1e-05
        %v892 = vrsqrt.pop %v891
        %v893 = vmul.f32 %v879, %v892
        %v894 = vmul.f32 %v880, %v892
        %896 = vset.pattern.permute.xlu0 0
        %897 = vperm.xlu0 %896, %v420
        %v898 = vpop.permute.xlu0 %897
        %901 = vset.pattern.permute.xlu0 0
        %902 = vperm.xlu0 %901, %v421
        %v903 = vpop.permute.xlu0 %902
        %v905 = vmul.f32 %v893, %v898
        %v906 = vmul.f32 %v894, %v903
        %908 = vset.pattern.permute.xlu0 0
        %909 = vperm.xlu0 %908, %v422
        %v910 = vpop.permute.xlu0 %909
        %913 = vset.pattern.permute.xlu0 0
        %914 = vperm.xlu0 %913, %v423
        %v915 = vpop.permute.xlu0 %914
        %v917 = vadd.f32 %v905, %v910
        %v918 = vadd.f32 %v906, %v915
        %920 = vset.pattern.permute.xlu0 0
        %921 = vperm.xlu0 %920, %v403
        %v922 = vpop.permute.xlu0 %921
        %925 = vset.pattern.permute.xlu0 0
        %926 = vperm.xlu0 %925, %v404
        %v927 = vpop.permute.xlu0 %926
        %930 = vset.pattern.permute.xlu0 0
        %931 = vperm.xlu0 %930, %v405
        %v932 = vpop.permute.xlu0 %931
        %935 = vset.pattern.permute.xlu0 0
        %936 = vperm.xlu0 %935, %v406
        %v937 = vpop.permute.xlu0 %936
        %vm939 = vcmask 130048
        %v941 = vsel %vm939, %v382, 0
        %v944 = vsel %vm939, %v383, 0
        %v947 = vsel %vm939, %v384, 0
        %v950 = vsel %vm939, %v385, 0
        %952 = vmatprep.subr.mxu0 0.0
        %953 = vmatpush1.msra.mxu0 %v917
        %954 = vmatprep.subr.mxu0 0.0
        %955 = vmatpush1.msra.mxu0 %v918
        %956 = vmatprep.subr.mxu0 0.0
        %957 = vmatpush1.msra.mxu0 0.0
        %958 = vmatprep.subr.mxu0 0.0
        %959 = vmatpush1.msra.mxu0 0.0
        %960 = vmatprep.subr.mxu0 0.0
        %961 = vmatpush1.msra.mxu0 0.0
        %962 = vmatprep.subr.mxu0 0.0
        %963 = vmatpush1.msra.mxu0 0.0
        %964 = vmatprep.subr.mxu0 0.0
        %965 = vmatpush1.msra.mxu0 0.0
        %966 = vmatprep.subr.mxu0 0.0
        %967 = vmatpush1.msra.mxu0 0.0
        %968 = vmatprep.subr.mxu0 0.0
        %969 = vmatpush1.msra.mxu0 0.0
        %970 = vmatprep.subr.mxu0 0.0
        %971 = vmatpush1.msra.mxu0 0.0
        %972 = vmatprep.subr.mxu0 0.0
        %973 = vmatpush1.msra.mxu0 0.0
        %974 = vmatprep.subr.mxu0 0.0
        %975 = vmatpush1.msra.mxu0 0.0
        %976 = vmatprep.subr.mxu0 0.0
        %977 = vmatpush1.msra.mxu0 0.0
        %978 = vmatprep.subr.mxu0 0.0
        %979 = vmatpush1.msra.mxu0 0.0
        %980 = vmatprep.subr.mxu0 0.0
        %981 = vmatpush1.msra.mxu0 0.0
        %982 = vmatprep.subr.mxu0 0.0
        %983 = vmatpush1.msra.mxu0 0.0
        %984 = vmatprep.subr.mxu0 0.0
        %985 = vmatpush1.msra.mxu0 0.0
        %986 = vmatprep.subr.mxu0 0.0
        %987 = vmatpush1.msra.mxu0 0.0
        %988 = vmatprep.subr.mxu0 0.0
        %989 = vmatpush1.msra.mxu0 0.0
        %990 = vmatprep.subr.mxu0 0.0
        %991 = vmatpush1.msra.mxu0 0.0
        %992 = vmatprep.subr.mxu0 0.0
        %993 = vmatpush1.msra.mxu0 0.0
        %994 = vmatprep.subr.mxu0 0.0
        %995 = vmatpush1.msra.mxu0 0.0
        %996 = vmatprep.subr.mxu0 0.0
        %997 = vmatpush1.msra.mxu0 0.0
        %998 = vmatprep.subr.mxu0 0.0
        %999 = vmatpush1.msra.mxu0 0.0
        %1000 = vmatprep.subr.mxu0 0.0
        %1001 = vmatpush1.msra.mxu0 0.0
        %1002 = vmatprep.subr.mxu0 0.0
        %1003 = vmatpush1.msra.mxu0 0.0
        %1004 = vmatprep.subr.mxu0 0.0
        %1005 = vmatpush1.msra.mxu0 0.0
        %1006 = vmatprep.subr.mxu0 0.0
        %1007 = vmatpush1.msra.mxu0 0.0
        %1008 = vmatprep.subr.mxu0 0.0
        %1009 = vmatpush1.msra.mxu0 0.0
        %1010 = vmatprep.subr.mxu0 0.0
        %1011 = vmatpush1.msra.mxu0 0.0
        %1012 = vmatprep.subr.mxu0 0.0
        %1013 = vmatpush1.msra.mxu0 0.0
        %1014 = vmatprep.subr.mxu0 0.0
        %1015 = vmatpush1.msra.mxu0 0.0
        %1016 = vmatprep.mubr.f32.mxu0 0.0
        %1017 = vmatmul.mubr.f32.gmra.mrb[0].mxu0 %v941
        %v1018 = vpop.f32.mrb[0].mxu0
        %v1019 = vadd.f32 %v922, %v1018
        %v1020 = vpop.f32.mrb[0].mxu0
        %1021 = vmatprep.mubr.f32.mxu0 0.0
        %1022 = vmatmul.mubr.f32.gmra.mrb[0].mxu0 %v944
        %v1023 = vpop.f32.mrb[0].mxu0
        %v1024 = vadd.f32 %v927, %v1023
        %v1025 = vpop.f32.mrb[0].mxu0
        %1026 = vmatprep.mubr.f32.mxu0 0.0
        %1027 = vmatmul.mubr.f32.gmra.mrb[0].mxu0 %v947
        %v1028 = vpop.f32.mrb[0].mxu0
        %v1029 = vadd.f32 %v932, %v1028
        %v1030 = vpop.f32.mrb[0].mxu0
        %1031 = vmatprep.mubr.f32.mxu0 0.0
        %1032 = vmatmul.mubr.f32.gmra.mrb[0].mxu0 %v950
        %v1033 = vpop.f32.mrb[0].mxu0
        %v1034 = vadd.f32 %v937, %v1033
        %v1035 = vpop.f32.mrb[0].mxu0
        %1036 = vdwg.mxu0
        %v1037 = vpack.c.bf16 %v1024, %v1019
        %v1038 = vpack.c.bf16 %v1034, %v1029
        %v1039 = vld [vmem:[#allocation3] sm:$0xff]
        %v1040 = vld [vmem:[#allocation3 + $0x8] sm:$0xff]
        %v1041 = vld [vmem:[#allocation3 + $0x10] sm:$0xff]
        %v1042 = vld [vmem:[#allocation3 + $0x18] sm:$0xff]
        %v1043 = vld [vmem:[#allocation3 + $0x20] sm:$0xff]
        %v1044 = vld [vmem:[#allocation3 + $0x28] sm:$0xff]
        %v1045 = vld [vmem:[#allocation3 + $0x30] sm:$0xff]
        %v1046 = vld [vmem:[#allocation3 + $0x38] sm:$0xff]
        %v1048 = vsel %vm939, %v1039, 0
        %v1051 = vsel %vm939, %v1040, 0
        %v1054 = vsel %vm939, %v1041, 0
        %v1057 = vsel %vm939, %v1042, 0
        %v1060 = vsel %vm939, %v1043, 0
        %v1063 = vsel %vm939, %v1044, 0
        %v1066 = vsel %vm939, %v1045, 0
        %v1069 = vsel %vm939, %v1046, 0
        %1071 = vmatprep.subr.bf16.mxu0 0
        %1072 = vmatpush1.bf16.msra.mxu0 %v1037
        %1073 = vmatprep.subr.bf16.mxu0 0
        %1074 = vmatpush1.bf16.msra.mxu0 0
        %1075 = vmatprep.subr.bf16.mxu0 0
        %1076 = vmatpush1.bf16.msra.mxu0 0
        %1077 = vmatprep.subr.bf16.mxu0 0
        %1078 = vmatpush1.bf16.msra.mxu0 0
        %1079 = vmatprep.subr.bf16.mxu0 0
        %1080 = vmatpush1.bf16.msra.mxu0 0
        %1081 = vmatprep.subr.bf16.mxu0 0
        %1082 = vmatpush1.bf16.msra.mxu0 0
        %1083 = vmatprep.subr.bf16.mxu0 0
        %1084 = vmatpush1.bf16.msra.mxu0 0
        %1085 = vmatprep.subr.bf16.mxu0 0
        %1086 = vmatpush1.bf16.msra.mxu0 0
        %1087 = vmatprep.subr.bf16.mxu0 0
        %1088 = vmatpush1.bf16.msra.mxu0 0
        %1089 = vmatprep.subr.bf16.mxu0 0
        %1090 = vmatpush1.bf16.msra.mxu0 0
        %1091 = vmatprep.subr.bf16.mxu0 0
        %1092 = vmatpush1.bf16.msra.mxu0 0
        %1093 = vmatprep.subr.bf16.mxu0 0
        %1094 = vmatpush1.bf16.msra.mxu0 0
        %1095 = vmatprep.subr.bf16.mxu0 0
        %1096 = vmatpush1.bf16.msra.mxu0 0
        %1097 = vmatprep.subr.bf16.mxu0 0
        %1098 = vmatpush1.bf16.msra.mxu0 0
        %1099 = vmatprep.subr.bf16.mxu0 0
        %1100 = vmatpush1.bf16.msra.mxu0 0
        %1101 = vmatprep.subr.bf16.mxu0 0
        %1102 = vmatpush1.bf16.msra.mxu0 0
        %1103 = vmatprep.mubr.bf16.mxu0 0
        %1104 = vmatmul.mubr.bf16.gmra.mrb[0].mxu0 %v1048
        %v1105 = vpop.f32.mrb[0].mxu0
        %v1106 = vadd.f32 0.0, %v1105
        %v1107 = vpop.f32.mrb[0].mxu0
        %v1108 = vpop.f32.mrb[0].mxu0
        %v1109 = vadd.f32 0.0, %v1108
        %v1110 = vpop.f32.mrb[0].mxu0
        %1111 = vmatprep.mubr.bf16.mxu0 0
        %1112 = vmatmul.mubr.bf16.gmra.mrb[0].mxu0 %v1051
        %v1113 = vpop.f32.mrb[0].mxu0
        %v1114 = vadd.f32 0.0, %v1113
        %v1115 = vpop.f32.mrb[0].mxu0
        %v1116 = vpop.f32.mrb[0].mxu0
        %v1117 = vadd.f32 0.0, %v1116
        %v1118 = vpop.f32.mrb[0].mxu0
        %1119 = vmatprep.mubr.bf16.mxu0 0
        %1120 = vmatmul.mubr.bf16.gmra.mrb[0].mxu0 %v1054
        %v1121 = vpop.f32.mrb[0].mxu0
        %v1122 = vadd.f32 0.0, %v1121
        %v1123 = vpop.f32.mrb[0].mxu0
        %v1124 = vpop.f32.mrb[0].mxu0
        %v1125 = vadd.f32 0.0, %v1124
        %v1126 = vpop.f32.mrb[0].mxu0
        %1127 = vmatprep.mubr.bf16.mxu0 0
        %1128 = vmatmul.mubr.bf16.gmra.mrb[0].mxu0 %v1057
        %v1129 = vpop.f32.mrb[0].mxu0
        %v1130 = vadd.f32 0.0, %v1129
        %v1131 = vpop.f32.mrb[0].mxu0
        %v1132 = vpop.f32.mrb[0].mxu0
        %v1133 = vadd.f32 0.0, %v1132
        %v1134 = vpop.f32.mrb[0].mxu0
        %1135 = vmatprep.mubr.bf16.mxu0 0
        %1136 = vmatmul.mubr.bf16.gmra.mrb[0].mxu0 %v1060
        %v1137 = vpop.f32.mrb[0].mxu0
        %v1138 = vadd.f32 0.0, %v1137
        %v1139 = vpop.f32.mrb[0].mxu0
        %v1140 = vpop.f32.mrb[0].mxu0
        %v1141 = vadd.f32 0.0, %v1140
        %v1142 = vpop.f32.mrb[0].mxu0
        %1143 = vmatprep.mubr.bf16.mxu0 0
        %1144 = vmatmul.mubr.bf16.gmra.mrb[0].mxu0 %v1063
        %v1145 = vpop.f32.mrb[0].mxu0
        %v1146 = vadd.f32 0.0, %v1145
        %v1147 = vpop.f32.mrb[0].mxu0
        %v1148 = vpop.f32.mrb[0].mxu0
        %v1149 = vadd.f32 0.0, %v1148
        %v1150 = vpop.f32.mrb[0].mxu0
        %1151 = vmatprep.mubr.bf16.mxu0 0
        %1152 = vmatmul.mubr.bf16.gmra.mrb[0].mxu0 %v1066
        %v1153 = vpop.f32.mrb[0].mxu0
        %v1154 = vadd.f32 0.0, %v1153
        %v1155 = vpop.f32.mrb[0].mxu0
        %v1156 = vpop.f32.mrb[0].mxu0
        %v1157 = vadd.f32 0.0, %v1156
        %v1158 = vpop.f32.mrb[0].mxu0
        %1159 = vmatprep.mubr.bf16.mxu0 0
        %1160 = vmatmul.mubr.bf16.gmra.mrb[0].mxu0 %v1069
        %v1161 = vpop.f32.mrb[0].mxu0
        %v1162 = vadd.f32 0.0, %v1161
        %v1163 = vpop.f32.mrb[0].mxu0
        %v1164 = vpop.f32.mrb[0].mxu0
        %v1165 = vadd.f32 0.0, %v1164
        %v1166 = vpop.f32.mrb[0].mxu0
        %1167 = vdwg.mxu0
        %v1168 = vld [vmem:[#allocation4] sm:$0xff]
        %v1169 = vld [vmem:[#allocation4 + $0x8] sm:$0xff]
        %v1170 = vld [vmem:[#allocation4 + $0x10] sm:$0xff]
        %v1171 = vld [vmem:[#allocation4 + $0x18] sm:$0xff]
        %v1172 = vld [vmem:[#allocation4 + $0x20] sm:$0xff]
        %v1173 = vld [vmem:[#allocation4 + $0x28] sm:$0xff]
        %v1174 = vld [vmem:[#allocation4 + $0x30] sm:$0xff]
        %v1175 = vld [vmem:[#allocation4 + $0x38] sm:$0xff]
        %v1176 = vld [vmem:[#allocation4 + $0x40] sm:$0xff]
        %v1177 = vld [vmem:[#allocation4 + $0x48] sm:$0xff]
        %v1178 = vld [vmem:[#allocation4 + $0x50] sm:$0xff]
        %v1179 = vld [vmem:[#allocation4 + $0x58] sm:$0xff]
        %v1180 = vld [vmem:[#allocation4 + $0x60] sm:$0xff]
        %v1181 = vld [vmem:[#allocation4 + $0x68] sm:$0xff]
        %v1182 = vld [vmem:[#allocation4 + $0x70] sm:$0xff]
        %v1183 = vld [vmem:[#allocation4 + $0x78] sm:$0xff]
        %1184 = vmax.xlane.f32.xlu0 %v1106
        %v1185 = vpop.xlane.xlu0 %1184
        %1186 = vmax.xlane.f32.xlu0 %v1109
        %v1187 = vpop.xlane.xlu0 %1186
        %1188 = vmax.xlane.f32.xlu0 %v1114
        %v1189 = vpop.xlane.xlu0 %1188
        %1190 = vmax.xlane.f32.xlu0 %v1117
        %v1191 = vpop.xlane.xlu0 %1190
        %1192 = vmax.xlane.f32.xlu0 %v1122
        %v1193 = vpop.xlane.xlu0 %1192
        %1194 = vmax.xlane.f32.xlu0 %v1125
        %v1195 = vpop.xlane.xlu0 %1194
        %1196 = vmax.xlane.f32.xlu0 %v1130
        %v1197 = vpop.xlane.xlu0 %1196
        %1198 = vmax.xlane.f32.xlu0 %v1133
        %v1199 = vpop.xlane.xlu0 %1198
        %1200 = vmax.xlane.f32.xlu0 %v1138
        %v1201 = vpop.xlane.xlu0 %1200
        %1202 = vmax.xlane.f32.xlu0 %v1141
        %v1203 = vpop.xlane.xlu0 %1202
        %1204 = vmax.xlane.f32.xlu0 %v1146
        %v1205 = vpop.xlane.xlu0 %1204
        %1206 = vmax.xlane.f32.xlu0 %v1149
        %v1207 = vpop.xlane.xlu0 %1206
        %1208 = vmax.xlane.f32.xlu0 %v1154
        %v1209 = vpop.xlane.xlu0 %1208
        %1210 = vmax.xlane.f32.xlu0 %v1157
        %v1211 = vpop.xlane.xlu0 %1210
        %1212 = vmax.xlane.f32.xlu0 %v1162
        %v1213 = vpop.xlane.xlu0 %1212
        %1214 = vmax.xlane.f32.xlu0 %v1165
        %v1215 = vpop.xlane.xlu0 %1214
        %v1216 = vmax.f32 %v1168, %v1185
        %v1217 = vmax.f32 %v1169, %v1187
        %v1218 = vmax.f32 %v1170, %v1189
        %v1219 = vmax.f32 %v1171, %v1191
        %v1220 = vmax.f32 %v1172, %v1193
        %v1221 = vmax.f32 %v1173, %v1195
        %v1222 = vmax.f32 %v1174, %v1197
        %v1223 = vmax.f32 %v1175, %v1199
        %v1224 = vmax.f32 %v1176, %v1201
        %v1225 = vmax.f32 %v1177, %v1203
        %v1226 = vmax.f32 %v1178, %v1205
        %v1227 = vmax.f32 %v1179, %v1207
        %v1228 = vmax.f32 %v1180, %v1209
        %v1229 = vmax.f32 %v1181, %v1211
        %v1230 = vmax.f32 %v1182, %v1213
        %v1231 = vmax.f32 %v1183, %v1215
        %v1232 = vsub.f32 %v1168, %v1216
        %v1233 = vsub.f32 %v1169, %v1217
        %v1234 = vsub.f32 %v1170, %v1218
        %v1235 = vsub.f32 %v1171, %v1219
        %v1236 = vsub.f32 %v1172, %v1220
        %v1237 = vsub.f32 %v1173, %v1221
        %v1238 = vsub.f32 %v1174, %v1222
        %v1239 = vsub.f32 %v1175, %v1223
        %v1240 = vsub.f32 %v1176, %v1224
        %v1241 = vsub.f32 %v1177, %v1225
        %v1242 = vsub.f32 %v1178, %v1226
        %v1243 = vsub.f32 %v1179, %v1227
        %v1244 = vsub.f32 %v1180, %v1228
        %v1245 = vsub.f32 %v1181, %v1229
        %v1246 = vsub.f32 %v1182, %v1230
        %v1247 = vsub.f32 %v1183, %v1231
        %v1248 = vmul.f32 %v1232, 1.442695
        %v1249 = vpow.pop %v1248
        %v1250 = vmul.f32 %v1233, 1.442695
        %v1251 = vpow.pop %v1250
        %v1252 = vmul.f32 %v1234, 1.442695
        %v1253 = vpow.pop %v1252
        %v1254 = vmul.f32 %v1235, 1.442695
        %v1255 = vpow.pop %v1254
        %v1256 = vmul.f32 %v1236, 1.442695
        %v1257 = vpow.pop %v1256
        %v1258 = vmul.f32 %v1237, 1.442695
        %v1259 = vpow.pop %v1258
        %v1260 = vmul.f32 %v1238, 1.442695
        %v1261 = vpow.pop %v1260
        %v1262 = vmul.f32 %v1239, 1.442695
        %v1263 = vpow.pop %v1262
        %v1264 = vmul.f32 %v1240, 1.442695
        %v1265 = vpow.pop %v1264
        %v1266 = vmul.f32 %v1241, 1.442695
        %v1267 = vpow.pop %v1266
        %v1268 = vmul.f32 %v1242, 1.442695
        %v1269 = vpow.pop %v1268
        %v1270 = vmul.f32 %v1243, 1.442695
        %v1271 = vpow.pop %v1270
        %v1272 = vmul.f32 %v1244, 1.442695
        %v1273 = vpow.pop %v1272
        %v1274 = vmul.f32 %v1245, 1.442695
        %v1275 = vpow.pop %v1274
        %v1276 = vmul.f32 %v1246, 1.442695
        %v1277 = vpow.pop %v1276
        %v1278 = vmul.f32 %v1247, 1.442695
        %v1279 = vpow.pop %v1278
        %1281 = vset.pattern.permute.xlu0 0
        %1282 = vperm.xlu0 %1281, %v1216
        %v1283 = vpop.permute.xlu0 %1282
        %1286 = vset.pattern.permute.xlu0 0
        %1287 = vperm.xlu0 %1286, %v1217
        %v1288 = vpop.permute.xlu0 %1287
        %1291 = vset.pattern.permute.xlu0 0
        %1292 = vperm.xlu0 %1291, %v1218
        %v1293 = vpop.permute.xlu0 %1292
        %1296 = vset.pattern.permute.xlu0 0
        %1297 = vperm.xlu0 %1296, %v1219
        %v1298 = vpop.permute.xlu0 %1297
        %1301 = vset.pattern.permute.xlu0 0
        %1302 = vperm.xlu0 %1301, %v1220
        %v1303 = vpop.permute.xlu0 %1302
        %1306 = vset.pattern.permute.xlu0 0
        %1307 = vperm.xlu0 %1306, %v1221
        %v1308 = vpop.permute.xlu0 %1307
        %1311 = vset.pattern.permute.xlu0 0
        %1312 = vperm.xlu0 %1311, %v1222
        %v1313 = vpop.permute.xlu0 %1312
        %1316 = vset.pattern.permute.xlu0 0
        %1317 = vperm.xlu0 %1316, %v1223
        %v1318 = vpop.permute.xlu0 %1317
        %1321 = vset.pattern.permute.xlu0 0
        %1322 = vperm.xlu0 %1321, %v1224
        %v1323 = vpop.permute.xlu0 %1322
        %1326 = vset.pattern.permute.xlu0 0
        %1327 = vperm.xlu0 %1326, %v1225
        %v1328 = vpop.permute.xlu0 %1327
        %1331 = vset.pattern.permute.xlu0 0
        %1332 = vperm.xlu0 %1331, %v1226
        %v1333 = vpop.permute.xlu0 %1332
        %1336 = vset.pattern.permute.xlu0 0
        %1337 = vperm.xlu0 %1336, %v1227
        %v1338 = vpop.permute.xlu0 %1337
        %1341 = vset.pattern.permute.xlu0 0
        %1342 = vperm.xlu0 %1341, %v1228
        %v1343 = vpop.permute.xlu0 %1342
        %1346 = vset.pattern.permute.xlu0 0
        %1347 = vperm.xlu0 %1346, %v1229
        %v1348 = vpop.permute.xlu0 %1347
        %1351 = vset.pattern.permute.xlu0 0
        %1352 = vperm.xlu0 %1351, %v1230
        %v1353 = vpop.permute.xlu0 %1352
        %1356 = vset.pattern.permute.xlu0 0
        %1357 = vperm.xlu0 %1356, %v1231
        %v1358 = vpop.permute.xlu0 %1357
        %v1360 = vsub.f32 %v1106, %v1283
        %v1361 = vsub.f32 %v1109, %v1288
        %v1362 = vsub.f32 %v1114, %v1293
        %v1363 = vsub.f32 %v1117, %v1298
        %v1364 = vsub.f32 %v1122, %v1303
        %v1365 = vsub.f32 %v1125, %v1308
        %v1366 = vsub.f32 %v1130, %v1313
        %v1367 = vsub.f32 %v1133, %v1318
        %v1368 = vsub.f32 %v1138, %v1323
        %v1369 = vsub.f32 %v1141, %v1328
        %v1370 = vsub.f32 %v1146, %v1333
        %v1371 = vsub.f32 %v1149, %v1338
        %v1372 = vsub.f32 %v1154, %v1343
        %v1373 = vsub.f32 %v1157, %v1348
        %v1374 = vsub.f32 %v1162, %v1353
        %v1375 = vsub.f32 %v1165, %v1358
        %v1376 = vmul.f32 %v1360, 1.442695
        %v1377 = vpow.pop %v1376
        %v1378 = vmul.f32 %v1361, 1.442695
        %v1379 = vpow.pop %v1378
        %v1380 = vmul.f32 %v1362, 1.442695
        %v1381 = vpow.pop %v1380
        %v1382 = vmul.f32 %v1363, 1.442695
        %v1383 = vpow.pop %v1382
        %v1384 = vmul.f32 %v1364, 1.442695
        %v1385 = vpow.pop %v1384
        %v1386 = vmul.f32 %v1365, 1.442695
        %v1387 = vpow.pop %v1386
        %v1388 = vmul.f32 %v1366, 1.442695
        %v1389 = vpow.pop %v1388
        %v1390 = vmul.f32 %v1367, 1.442695
        %v1391 = vpow.pop %v1390
        %v1392 = vmul.f32 %v1368, 1.442695
        %v1393 = vpow.pop %v1392
        %v1394 = vmul.f32 %v1369, 1.442695
        %v1395 = vpow.pop %v1394
        %v1396 = vmul.f32 %v1370, 1.442695
        %v1397 = vpow.pop %v1396
        %v1398 = vmul.f32 %v1371, 1.442695
        %v1399 = vpow.pop %v1398
        %v1400 = vmul.f32 %v1372, 1.442695
        %v1401 = vpow.pop %v1400
        %v1402 = vmul.f32 %v1373, 1.442695
        %v1403 = vpow.pop %v1402
        %v1404 = vmul.f32 %v1374, 1.442695
        %v1405 = vpow.pop %v1404
        %v1406 = vmul.f32 %v1375, 1.442695
        %v1407 = vpow.pop %v1406
        %v1408 = vld [vmem:[#allocation5] sm:$0xff]
        %v1409 = vld [vmem:[#allocation5 + $0x8] sm:$0xff]
        %v1410 = vld [vmem:[#allocation5 + $0x10] sm:$0xff]
        %v1411 = vld [vmem:[#allocation5 + $0x18] sm:$0xff]
        %v1412 = vld [vmem:[#allocation5 + $0x20] sm:$0xff]
        %v1413 = vld [vmem:[#allocation5 + $0x28] sm:$0xff]
        %v1414 = vld [vmem:[#allocation5 + $0x30] sm:$0xff]
        %v1415 = vld [vmem:[#allocation5 + $0x38] sm:$0xff]
        %v1416 = vld [vmem:[#allocation5 + $0x40] sm:$0xff]
        %v1417 = vld [vmem:[#allocation5 + $0x48] sm:$0xff]
        %v1418 = vld [vmem:[#allocation5 + $0x50] sm:$0xff]
        %v1419 = vld [vmem:[#allocation5 + $0x58] sm:$0xff]
        %v1420 = vld [vmem:[#allocation5 + $0x60] sm:$0xff]
        %v1421 = vld [vmem:[#allocation5 + $0x68] sm:$0xff]
        %v1422 = vld [vmem:[#allocation5 + $0x70] sm:$0xff]
        %v1423 = vld [vmem:[#allocation5 + $0x78] sm:$0xff]
        %v1424 = vmul.f32 %v1249, %v1408
        %v1425 = vmul.f32 %v1251, %v1409
        %v1426 = vmul.f32 %v1253, %v1410
        %v1427 = vmul.f32 %v1255, %v1411
        %v1428 = vmul.f32 %v1257, %v1412
        %v1429 = vmul.f32 %v1259, %v1413
        %v1430 = vmul.f32 %v1261, %v1414
        %v1431 = vmul.f32 %v1263, %v1415
        %v1432 = vmul.f32 %v1265, %v1416
        %v1433 = vmul.f32 %v1267, %v1417
        %v1434 = vmul.f32 %v1269, %v1418
        %v1435 = vmul.f32 %v1271, %v1419
        %v1436 = vmul.f32 %v1273, %v1420
        %v1437 = vmul.f32 %v1275, %v1421
        %v1438 = vmul.f32 %v1277, %v1422
        %v1439 = vmul.f32 %v1279, %v1423
        %1440 = vadd.xlane.f32.xlu0 %v1377
        %v1441 = vpop.xlane.xlu0 %1440
        %1442 = vadd.xlane.f32.xlu0 %v1379
        %v1443 = vpop.xlane.xlu0 %1442
        %1444 = vadd.xlane.f32.xlu0 %v1381
        %v1445 = vpop.xlane.xlu0 %1444
        %1446 = vadd.xlane.f32.xlu0 %v1383
        %v1447 = vpop.xlane.xlu0 %1446
        %1448 = vadd.xlane.f32.xlu0 %v1385
        %v1449 = vpop.xlane.xlu0 %1448
        %1450 = vadd.xlane.f32.xlu0 %v1387
        %v1451 = vpop.xlane.xlu0 %1450
        %1452 = vadd.xlane.f32.xlu0 %v1389
        %v1453 = vpop.xlane.xlu0 %1452
        %1454 = vadd.xlane.f32.xlu0 %v1391
        %v1455 = vpop.xlane.xlu0 %1454
        %1456 = vadd.xlane.f32.xlu0 %v1393
        %v1457 = vpop.xlane.xlu0 %1456
        %1458 = vadd.xlane.f32.xlu0 %v1395
        %v1459 = vpop.xlane.xlu0 %1458
        %1460 = vadd.xlane.f32.xlu0 %v1397
        %v1461 = vpop.xlane.xlu0 %1460
        %1462 = vadd.xlane.f32.xlu0 %v1399
        %v1463 = vpop.xlane.xlu0 %1462
        %1464 = vadd.xlane.f32.xlu0 %v1401
        %v1465 = vpop.xlane.xlu0 %1464
        %1466 = vadd.xlane.f32.xlu0 %v1403
        %v1467 = vpop.xlane.xlu0 %1466
        %1468 = vadd.xlane.f32.xlu0 %v1405
        %v1469 = vpop.xlane.xlu0 %1468
        %1470 = vadd.xlane.f32.xlu0 %v1407
        %v1471 = vpop.xlane.xlu0 %1470
        %v1472 = vadd.f32 %v1424, %v1441
        %v1473 = vadd.f32 %v1425, %v1443
        %v1474 = vadd.f32 %v1426, %v1445
        %v1475 = vadd.f32 %v1427, %v1447
        %v1476 = vadd.f32 %v1428, %v1449
        %v1477 = vadd.f32 %v1429, %v1451
        %v1478 = vadd.f32 %v1430, %v1453
        %v1479 = vadd.f32 %v1431, %v1455
        %v1480 = vadd.f32 %v1432, %v1457
        %v1481 = vadd.f32 %v1433, %v1459
        %v1482 = vadd.f32 %v1434, %v1461
        %v1483 = vadd.f32 %v1435, %v1463
        %v1484 = vadd.f32 %v1436, %v1465
        %v1485 = vadd.f32 %v1437, %v1467
        %v1486 = vadd.f32 %v1438, %v1469
        %v1487 = vadd.f32 %v1439, %v1471
        %vm1488 = vcmask 7168
        %1489 = vst.msk [vmem:[#allocation5] sm:$0xff] %vm1488, %v1472
        %1490 = vst.msk [vmem:[#allocation5 + $0x8] sm:$0xff] %vm1488, %v1473
        %1491 = vst.msk [vmem:[#allocation5 + $0x10] sm:$0xff] %vm1488, %v1474
        %1492 = vst.msk [vmem:[#allocation5 + $0x18] sm:$0xff] %vm1488, %v1475
        %1493 = vst.msk [vmem:[#allocation5 + $0x20] sm:$0xff] %vm1488, %v1476
        %1494 = vst.msk [vmem:[#allocation5 + $0x28] sm:$0xff] %vm1488, %v1477
        %1495 = vst.msk [vmem:[#allocation5 + $0x30] sm:$0xff] %vm1488, %v1478
        %1496 = vst.msk [vmem:[#allocation5 + $0x38] sm:$0xff] %vm1488, %v1479
        %1497 = vst.msk [vmem:[#allocation5 + $0x40] sm:$0xff] %vm1488, %v1480
        %1498 = vst.msk [vmem:[#allocation5 + $0x48] sm:$0xff] %vm1488, %v1481
        %1499 = vst.msk [vmem:[#allocation5 + $0x50] sm:$0xff] %vm1488, %v1482
        %1500 = vst.msk [vmem:[#allocation5 + $0x58] sm:$0xff] %vm1488, %v1483
        %1501 = vst.msk [vmem:[#allocation5 + $0x60] sm:$0xff] %vm1488, %v1484
        %1502 = vst.msk [vmem:[#allocation5 + $0x68] sm:$0xff] %vm1488, %v1485
        %1503 = vst.msk [vmem:[#allocation5 + $0x70] sm:$0xff] %vm1488, %v1486
        %1504 = vst.msk [vmem:[#allocation5 + $0x78] sm:$0xff] %vm1488, %v1487
        %v1505 = vld [vmem:[#allocation6] sm:$0xff]
        %v1506 = vld [vmem:[#allocation6 + $0x8] sm:$0xff]
        %v1507 = vld [vmem:[#allocation6 + $0x10] sm:$0xff]
        %v1508 = vld [vmem:[#allocation6 + $0x18] sm:$0xff]
        %v1509 = vld [vmem:[#allocation6 + $0x20] sm:$0xff]
        %v1510 = vld [vmem:[#allocation6 + $0x28] sm:$0xff]
        %v1511 = vld [vmem:[#allocation6 + $0x30] sm:$0xff]
        %v1512 = vld [vmem:[#allocation6 + $0x38] sm:$0xff]
        %v1513 = vld [vmem:[#allocation6 + $0x40] sm:$0xff]
        %v1514 = vld [vmem:[#allocation6 + $0x48] sm:$0xff]
        %v1515 = vld [vmem:[#allocation6 + $0x50] sm:$0xff]
        %v1516 = vld [vmem:[#allocation6 + $0x58] sm:$0xff]
        %v1517 = vld [vmem:[#allocation6 + $0x60] sm:$0xff]
        %v1518 = vld [vmem:[#allocation6 + $0x68] sm:$0xff]
        %v1519 = vld [vmem:[#allocation6 + $0x70] sm:$0xff]
        %v1520 = vld [vmem:[#allocation6 + $0x78] sm:$0xff]
        %1522 = vset.pattern.permute.xlu0 0
        %1523 = vperm.xlu0 %1522, %v1249
        %v1524 = vpop.permute.xlu0 %1523
        %1527 = vset.pattern.permute.xlu0 0
        %1528 = vperm.xlu0 %1527, %v1251
        %v1529 = vpop.permute.xlu0 %1528
        %1532 = vset.pattern.permute.xlu0 0
        %1533 = vperm.xlu0 %1532, %v1253
        %v1534 = vpop.permute.xlu0 %1533
        %1537 = vset.pattern.permute.xlu0 0
        %1538 = vperm.xlu0 %1537, %v1255
        %v1539 = vpop.permute.xlu0 %1538
        %1542 = vset.pattern.permute.xlu0 0
        %1543 = vperm.xlu0 %1542, %v1257
        %v1544 = vpop.permute.xlu0 %1543
        %1547 = vset.pattern.permute.xlu0 0
        %1548 = vperm.xlu0 %1547, %v1259
        %v1549 = vpop.permute.xlu0 %1548
        %1552 = vset.pattern.permute.xlu0 0
        %1553 = vperm.xlu0 %1552, %v1261
        %v1554 = vpop.permute.xlu0 %1553
        %1557 = vset.pattern.permute.xlu0 0
        %1558 = vperm.xlu0 %1557, %v1263
        %v1559 = vpop.permute.xlu0 %1558
        %1562 = vset.pattern.permute.xlu0 0
        %1563 = vperm.xlu0 %1562, %v1265
        %v1564 = vpop.permute.xlu0 %1563
        %1567 = vset.pattern.permute.xlu0 0
        %1568 = vperm.xlu0 %1567, %v1267
        %v1569 = vpop.permute.xlu0 %1568
        %1572 = vset.pattern.permute.xlu0 0
        %1573 = vperm.xlu0 %1572, %v1269
        %v1574 = vpop.permute.xlu0 %1573
        %1577 = vset.pattern.permute.xlu0 0
        %1578 = vperm.xlu0 %1577, %v1271
        %v1579 = vpop.permute.xlu0 %1578
        %1582 = vset.pattern.permute.xlu0 0
        %1583 = vperm.xlu0 %1582, %v1273
        %v1584 = vpop.permute.xlu0 %1583
        %1587 = vset.pattern.permute.xlu0 0
        %1588 = vperm.xlu0 %1587, %v1275
        %v1589 = vpop.permute.xlu0 %1588
        %1592 = vset.pattern.permute.xlu0 0
        %1593 = vperm.xlu0 %1592, %v1277
        %v1594 = vpop.permute.xlu0 %1593
        %1597 = vset.pattern.permute.xlu0 0
        %1598 = vperm.xlu0 %1597, %v1279
        %v1599 = vpop.permute.xlu0 %1598
        %v1601 = vmul.f32 %v1524, %v1505
        %v1602 = vmul.f32 %v1529, %v1506
        %v1603 = vmul.f32 %v1534, %v1507
        %v1604 = vmul.f32 %v1539, %v1508
        %v1605 = vmul.f32 %v1544, %v1509
        %v1606 = vmul.f32 %v1549, %v1510
        %v1607 = vmul.f32 %v1554, %v1511
        %v1608 = vmul.f32 %v1559, %v1512
        %v1609 = vmul.f32 %v1564, %v1513
        %v1610 = vmul.f32 %v1569, %v1514
        %v1611 = vmul.f32 %v1574, %v1515
        %v1612 = vmul.f32 %v1579, %v1516
        %v1613 = vmul.f32 %v1584, %v1517
        %v1614 = vmul.f32 %v1589, %v1518
        %v1615 = vmul.f32 %v1594, %v1519
        %v1616 = vmul.f32 %v1599, %v1520
        %v1617 = vpack.c.bf16 %v1379, %v1377
        %v1618 = vpack.c.bf16 %v1383, %v1381
        %v1619 = vpack.c.bf16 %v1387, %v1385
        %v1620 = vpack.c.bf16 %v1391, %v1389
        %v1621 = vpack.c.bf16 %v1395, %v1393
        %v1622 = vpack.c.bf16 %v1399, %v1397
        %v1623 = vpack.c.bf16 %v1403, %v1401
        %v1624 = vpack.c.bf16 %v1407, %v1405
        %1625 = vmatprep.subr.bf16.mxu0 0
        %1626 = vmatpush1.bf16.xpose.msra.mxu0 %v1038
        %1627 = vmatprep.subr.bf16.mxu0 0
        %1628 = vmatpush1.bf16.xpose.msra.mxu0 0
        %1629 = vmatprep.subr.bf16.mxu0 0
        %1630 = vmatpush1.bf16.xpose.msra.mxu0 0
        %1631 = vmatprep.subr.bf16.mxu0 0
        %1632 = vmatpush1.bf16.xpose.msra.mxu0 0
        %1633 = vmatprep.subr.bf16.mxu0 0
        %1634 = vmatpush1.bf16.xpose.msra.mxu0 0
        %1635 = vmatprep.subr.bf16.mxu0 0
        %1636 = vmatpush1.bf16.xpose.msra.mxu0 0
        %1637 = vmatprep.subr.bf16.mxu0 0
        %1638 = vmatpush1.bf16.xpose.msra.mxu0 0
        %1639 = vmatprep.subr.bf16.mxu0 0
        %1640 = vmatpush1.bf16.xpose.msra.mxu0 0
        %1641 = vmatprep.subr.bf16.mxu0 0
        %1642 = vmatpush1.bf16.xpose.msra.mxu0 0
        %1643 = vmatprep.subr.bf16.mxu0 0
        %1644 = vmatpush1.bf16.xpose.msra.mxu0 0
        %1645 = vmatprep.subr.bf16.mxu0 0
        %1646 = vmatpush1.bf16.xpose.msra.mxu0 0
        %1647 = vmatprep.subr.bf16.mxu0 0
        %1648 = vmatpush1.bf16.xpose.msra.mxu0 0
        %1649 = vmatprep.subr.bf16.mxu0 0
        %1650 = vmatpush1.bf16.xpose.msra.mxu0 0
        %1651 = vmatprep.subr.bf16.mxu0 0
        %1652 = vmatpush1.bf16.xpose.msra.mxu0 0
        %1653 = vmatprep.subr.bf16.mxu0 0
        %1654 = vmatpush1.bf16.xpose.msra.mxu0 0
        %1655 = vmatprep.subr.bf16.mxu0 0
        %1656 = vmatpush1.bf16.xpose.msra.mxu0 0
        %1657 = vmatprep.mubr.bf16.mxu0 0
        %1658 = vmatmul.mubr.bf16.gmra.mrb[0].mxu0 %v1617
        %v1659 = vpop.f32.mrb[0].mxu0
        %v1660 = vadd.f32 0.0, %v1659
        %v1661 = vpop.f32.mrb[0].mxu0
        %v1662 = vpop.f32.mrb[0].mxu0
        %v1663 = vadd.f32 0.0, %v1662
        %v1664 = vpop.f32.mrb[0].mxu0
        %1665 = vmatprep.mubr.bf16.mxu0 0
        %1666 = vmatmul.mubr.bf16.gmra.mrb[0].mxu0 %v1618
        %v1667 = vpop.f32.mrb[0].mxu0
        %v1668 = vadd.f32 0.0, %v1667
        %v1669 = vpop.f32.mrb[0].mxu0
        %v1670 = vpop.f32.mrb[0].mxu0
        %v1671 = vadd.f32 0.0, %v1670
        %v1672 = vpop.f32.mrb[0].mxu0
        %1673 = vmatprep.mubr.bf16.mxu0 0
        %1674 = vmatmul.mubr.bf16.gmra.mrb[0].mxu0 %v1619
        %v1675 = vpop.f32.mrb[0].mxu0
        %v1676 = vadd.f32 0.0, %v1675
        %v1677 = vpop.f32.mrb[0].mxu0
        %v1678 = vpop.f32.mrb[0].mxu0
        %v1679 = vadd.f32 0.0, %v1678
        %v1680 = vpop.f32.mrb[0].mxu0
        %1681 = vmatprep.mubr.bf16.mxu0 0
        %1682 = vmatmul.mubr.bf16.gmra.mrb[0].mxu0 %v1620
        %v1683 = vpop.f32.mrb[0].mxu0
        %v1684 = vadd.f32 0.0, %v1683
        %v1685 = vpop.f32.mrb[0].mxu0
        %v1686 = vpop.f32.mrb[0].mxu0
        %v1687 = vadd.f32 0.0, %v1686
        %v1688 = vpop.f32.mrb[0].mxu0
        %1689 = vmatprep.mubr.bf16.mxu0 0
        %1690 = vmatmul.mubr.bf16.gmra.mrb[0].mxu0 %v1621
        %v1691 = vpop.f32.mrb[0].mxu0
        %v1692 = vadd.f32 0.0, %v1691
        %v1693 = vpop.f32.mrb[0].mxu0
        %v1694 = vpop.f32.mrb[0].mxu0
        %v1695 = vadd.f32 0.0, %v1694
        %v1696 = vpop.f32.mrb[0].mxu0
        %1697 = vmatprep.mubr.bf16.mxu0 0
        %1698 = vmatmul.mubr.bf16.gmra.mrb[0].mxu0 %v1622
        %v1699 = vpop.f32.mrb[0].mxu0
        %v1700 = vadd.f32 0.0, %v1699
        %v1701 = vpop.f32.mrb[0].mxu0
        %v1702 = vpop.f32.mrb[0].mxu0
        %v1703 = vadd.f32 0.0, %v1702
        %v1704 = vpop.f32.mrb[0].mxu0
        %1705 = vmatprep.mubr.bf16.mxu0 0
        %1706 = vmatmul.mubr.bf16.gmra.mrb[0].mxu0 %v1623
        %v1707 = vpop.f32.mrb[0].mxu0
        %v1708 = vadd.f32 0.0, %v1707
        %v1709 = vpop.f32.mrb[0].mxu0
        %v1710 = vpop.f32.mrb[0].mxu0
        %v1711 = vadd.f32 0.0, %v1710
        %v1712 = vpop.f32.mrb[0].mxu0
        %1713 = vmatprep.mubr.bf16.mxu0 0
        %1714 = vmatmul.mubr.bf16.gmra.mrb[0].mxu0 %v1624
        %v1715 = vpop.f32.mrb[0].mxu0
        %v1716 = vadd.f32 0.0, %v1715
        %v1717 = vpop.f32.mrb[0].mxu0
        %v1718 = vpop.f32.mrb[0].mxu0
        %v1719 = vadd.f32 0.0, %v1718
        %v1720 = vpop.f32.mrb[0].mxu0
        %1721 = vdwg.mxu0
        %v1722 = vadd.f32 %v1601, %v1660
        %v1723 = vadd.f32 %v1602, %v1663
        %v1724 = vadd.f32 %v1603, %v1668
        %v1725 = vadd.f32 %v1604, %v1671
        %v1726 = vadd.f32 %v1605, %v1676
        %v1727 = vadd.f32 %v1606, %v1679
        %v1728 = vadd.f32 %v1607, %v1684
        %v1729 = vadd.f32 %v1608, %v1687
        %v1730 = vadd.f32 %v1609, %v1692
        %v1731 = vadd.f32 %v1610, %v1695
        %v1732 = vadd.f32 %v1611, %v1700
        %v1733 = vadd.f32 %v1612, %v1703
        %v1734 = vadd.f32 %v1613, %v1708
        %v1735 = vadd.f32 %v1614, %v1711
        %v1736 = vadd.f32 %v1615, %v1716
        %v1737 = vadd.f32 %v1616, %v1719
        %1738 = vst.msk [vmem:[#allocation6] sm:$0xff] %vm939, %v1722
        %1739 = vst.msk [vmem:[#allocation6 + $0x8] sm:$0xff] %vm939, %v1723
        %1740 = vst.msk [vmem:[#allocation6 + $0x10] sm:$0xff] %vm939, %v1724
        %1741 = vst.msk [vmem:[#allocation6 + $0x18] sm:$0xff] %vm939, %v1725
        %1742 = vst.msk [vmem:[#allocation6 + $0x20] sm:$0xff] %vm939, %v1726
        %1743 = vst.msk [vmem:[#allocation6 + $0x28] sm:$0xff] %vm939, %v1727
        %1744 = vst.msk [vmem:[#allocation6 + $0x30] sm:$0xff] %vm939, %v1728
        %1745 = vst.msk [vmem:[#allocation6 + $0x38] sm:$0xff] %vm939, %v1729
        %1746 = vst.msk [vmem:[#allocation6 + $0x40] sm:$0xff] %vm939, %v1730
        %1747 = vst.msk [vmem:[#allocation6 + $0x48] sm:$0xff] %vm939, %v1731
        %1748 = vst.msk [vmem:[#allocation6 + $0x50] sm:$0xff] %vm939, %v1732
        %1749 = vst.msk [vmem:[#allocation6 + $0x58] sm:$0xff] %vm939, %v1733
        %1750 = vst.msk [vmem:[#allocation6 + $0x60] sm:$0xff] %vm939, %v1734
        %1751 = vst.msk [vmem:[#allocation6 + $0x68] sm:$0xff] %vm939, %v1735
        %1752 = vst.msk [vmem:[#allocation6 + $0x70] sm:$0xff] %vm939, %v1736
        %1753 = vst.msk [vmem:[#allocation6 + $0x78] sm:$0xff] %vm939, %v1737
        %1754 = vst.msk [vmem:[#allocation4] sm:$0xff] %vm1488, %v1216
        %1755 = vst.msk [vmem:[#allocation4 + $0x8] sm:$0xff] %vm1488, %v1217
        %1756 = vst.msk [vmem:[#allocation4 + $0x10] sm:$0xff] %vm1488, %v1218
        %1757 = vst.msk [vmem:[#allocation4 + $0x18] sm:$0xff] %vm1488, %v1219
        %1758 = vst.msk [vmem:[#allocation4 + $0x20] sm:$0xff] %vm1488, %v1220
        %1759 = vst.msk [vmem:[#allocation4 + $0x28] sm:$0xff] %vm1488, %v1221
        %1760 = vst.msk [vmem:[#allocation4 + $0x30] sm:$0xff] %vm1488, %v1222
        %1761 = vst.msk [vmem:[#allocation4 + $0x38] sm:$0xff] %vm1488, %v1223
        %1762 = vst.msk [vmem:[#allocation4 + $0x40] sm:$0xff] %vm1488, %v1224
        %1763 = vst.msk [vmem:[#allocation4 + $0x48] sm:$0xff] %vm1488, %v1225
        %1764 = vst.msk [vmem:[#allocation4 + $0x50] sm:$0xff] %vm1488, %v1226
        %1765 = vst.msk [vmem:[#allocation4 + $0x58] sm:$0xff] %vm1488, %v1227
        %1766 = vst.msk [vmem:[#allocation4 + $0x60] sm:$0xff] %vm1488, %v1228
        %1767 = vst.msk [vmem:[#allocation4 + $0x68] sm:$0xff] %vm1488, %v1229
        %1768 = vst.msk [vmem:[#allocation4 + $0x70] sm:$0xff] %vm1488, %v1230
        %1769 = vst.msk [vmem:[#allocation4 + $0x78] sm:$0xff] %vm1488, %v1231
        %p1770 = scmp.eq.s32.totalorder %s24, 1
        // Predicated region
        $region117: #{pdflab_net_forward.1} parent=103 // pred_check
          %p1771 = pneg %p1770
        $region118: #{pdflab_net_forward.1} parent=103 // pred_check_branch
          %1773 = sbr.rel (%p1771) target = $region120
        $region119: #{pdflab_net_forward.1} parent=103 // pred_region
          %v1774 = vld [vmem:[#allocation6] sm:$0xff]
          %v1775 = vld [vmem:[#allocation6 + $0x8] sm:$0xff]
          %v1776 = vld [vmem:[#allocation6 + $0x10] sm:$0xff]
          %v1777 = vld [vmem:[#allocation6 + $0x18] sm:$0xff]
          %v1778 = vld [vmem:[#allocation6 + $0x20] sm:$0xff]
          %v1779 = vld [vmem:[#allocation6 + $0x28] sm:$0xff]
          %v1780 = vld [vmem:[#allocation6 + $0x30] sm:$0xff]
          %v1781 = vld [vmem:[#allocation6 + $0x38] sm:$0xff]
          %v1782 = vld [vmem:[#allocation6 + $0x40] sm:$0xff]
          %v1783 = vld [vmem:[#allocation6 + $0x48] sm:$0xff]
          %v1784 = vld [vmem:[#allocation6 + $0x50] sm:$0xff]
          %v1785 = vld [vmem:[#allocation6 + $0x58] sm:$0xff]
          %v1786 = vld [vmem:[#allocation6 + $0x60] sm:$0xff]
          %v1787 = vld [vmem:[#allocation6 + $0x68] sm:$0xff]
          %v1788 = vld [vmem:[#allocation6 + $0x70] sm:$0xff]
          %v1789 = vld [vmem:[#allocation6 + $0x78] sm:$0xff]
          %v1790 = vld [vmem:[#allocation5] sm:$0xff]
          %v1791 = vld [vmem:[#allocation5 + $0x8] sm:$0xff]
          %v1792 = vld [vmem:[#allocation5 + $0x10] sm:$0xff]
          %v1793 = vld [vmem:[#allocation5 + $0x18] sm:$0xff]
          %v1794 = vld [vmem:[#allocation5 + $0x20] sm:$0xff]
          %v1795 = vld [vmem:[#allocation5 + $0x28] sm:$0xff]
          %v1796 = vld [vmem:[#allocation5 + $0x30] sm:$0xff]
          %v1797 = vld [vmem:[#allocation5 + $0x38] sm:$0xff]
          %v1798 = vld [vmem:[#allocation5 + $0x40] sm:$0xff]
          %v1799 = vld [vmem:[#allocation5 + $0x48] sm:$0xff]
          %v1800 = vld [vmem:[#allocation5 + $0x50] sm:$0xff]
          %v1801 = vld [vmem:[#allocation5 + $0x58] sm:$0xff]
          %v1802 = vld [vmem:[#allocation5 + $0x60] sm:$0xff]
          %v1803 = vld [vmem:[#allocation5 + $0x68] sm:$0xff]
          %v1804 = vld [vmem:[#allocation5 + $0x70] sm:$0xff]
          %v1805 = vld [vmem:[#allocation5 + $0x78] sm:$0xff]
          %v1806 = vrcp.pop %v1790
          %v1807 = vrcp.pop %v1791
          %v1808 = vrcp.pop %v1792
          %v1809 = vrcp.pop %v1793
          %v1810 = vrcp.pop %v1794
          %v1811 = vrcp.pop %v1795
          %v1812 = vrcp.pop %v1796
          %v1813 = vrcp.pop %v1797
          %v1814 = vrcp.pop %v1798
          %v1815 = vrcp.pop %v1799
          %v1816 = vrcp.pop %v1800
          %v1817 = vrcp.pop %v1801
          %v1818 = vrcp.pop %v1802
          %v1819 = vrcp.pop %v1803
          %v1820 = vrcp.pop %v1804
          %v1821 = vrcp.pop %v1805
          %1823 = vset.pattern.permute.xlu0 0
          %1824 = vperm.xlu0 %1823, %v1806
          %v1825 = vpop.permute.xlu0 %1824
          %1828 = vset.pattern.permute.xlu0 0
          %1829 = vperm.xlu0 %1828, %v1807
          %v1830 = vpop.permute.xlu0 %1829
          %1833 = vset.pattern.permute.xlu0 0
          %1834 = vperm.xlu0 %1833, %v1808
          %v1835 = vpop.permute.xlu0 %1834
          %1838 = vset.pattern.permute.xlu0 0
          %1839 = vperm.xlu0 %1838, %v1809
          %v1840 = vpop.permute.xlu0 %1839
          %1843 = vset.pattern.permute.xlu0 0
          %1844 = vperm.xlu0 %1843, %v1810
          %v1845 = vpop.permute.xlu0 %1844
          %1848 = vset.pattern.permute.xlu0 0
          %1849 = vperm.xlu0 %1848, %v1811
          %v1850 = vpop.permute.xlu0 %1849
          %1853 = vset.pattern.permute.xlu0 0
          %1854 = vperm.xlu0 %1853, %v1812
          %v1855 = vpop.permute.xlu0 %1854
          %1858 = vset.pattern.permute.xlu0 0
          %1859 = vperm.xlu0 %1858, %v1813
          %v1860 = vpop.permute.xlu0 %1859
          %1863 = vset.pattern.permute.xlu0 0
          %1864 = vperm.xlu0 %1863, %v1814
          %v1865 = vpop.permute.xlu0 %1864
          %1868 = vset.pattern.permute.xlu0 0
          %1869 = vperm.xlu0 %1868, %v1815
          %v1870 = vpop.permute.xlu0 %1869
          %1873 = vset.pattern.permute.xlu0 0
          %1874 = vperm.xlu0 %1873, %v1816
          %v1875 = vpop.permute.xlu0 %1874
          %1878 = vset.pattern.permute.xlu0 0
          %1879 = vperm.xlu0 %1878, %v1817
          %v1880 = vpop.permute.xlu0 %1879
          %1883 = vset.pattern.permute.xlu0 0
          %1884 = vperm.xlu0 %1883, %v1818
          %v1885 = vpop.permute.xlu0 %1884
          %1888 = vset.pattern.permute.xlu0 0
          %1889 = vperm.xlu0 %1888, %v1819
          %v1890 = vpop.permute.xlu0 %1889
          %1893 = vset.pattern.permute.xlu0 0
          %1894 = vperm.xlu0 %1893, %v1820
          %v1895 = vpop.permute.xlu0 %1894
          %1898 = vset.pattern.permute.xlu0 0
          %1899 = vperm.xlu0 %1898, %v1821
          %v1900 = vpop.permute.xlu0 %1899
          %v1902 = vmul.f32 %v1774, %v1825
          %v1903 = vmul.f32 %v1775, %v1830
          %v1904 = vmul.f32 %v1776, %v1835
          %v1905 = vmul.f32 %v1777, %v1840
          %v1906 = vmul.f32 %v1778, %v1845
          %v1907 = vmul.f32 %v1779, %v1850
          %v1908 = vmul.f32 %v1780, %v1855
          %v1909 = vmul.f32 %v1781, %v1860
          %v1910 = vmul.f32 %v1782, %v1865
          %v1911 = vmul.f32 %v1783, %v1870
          %v1912 = vmul.f32 %v1784, %v1875
          %v1913 = vmul.f32 %v1785, %v1880
          %v1914 = vmul.f32 %v1786, %v1885
          %v1915 = vmul.f32 %v1787, %v1890
          %v1916 = vmul.f32 %v1788, %v1895
          %v1917 = vmul.f32 %v1789, %v1900
          %1919 = vset.pattern.permute.xlu0 0
          %1920 = vperm.xlu0 %1919, %v407
          %v1921 = vpop.permute.xlu0 %1920
          %1924 = vset.pattern.permute.xlu0 0
          %1925 = vperm.xlu0 %1924, %v408
          %v1926 = vpop.permute.xlu0 %1925
          %v1929 = vsel %vm939, %v386, 0
          %v1932 = vsel %vm939, %v387, 0
          %v1935 = vsel %vm939, %v1902, 0
          %v1938 = vsel %vm939, %v1903, 0
          %v1941 = vsel %vm939, %v1904, 0
          %v1944 = vsel %vm939, %v1905, 0
          %v1947 = vsel %vm939, %v1906, 0
          %v1950 = vsel %vm939, %v1907, 0
          %v1953 = vsel %vm939, %v1908, 0
          %v1956 = vsel %vm939, %v1909, 0
          %v1959 = vsel %vm939, %v1910, 0
          %v1962 = vsel %vm939, %v1911, 0
          %v1965 = vsel %vm939, %v1912, 0
          %v1968 = vsel %vm939, %v1913, 0
          %v1971 = vsel %vm939, %v1914, 0
          %v1974 = vsel %vm939, %v1915, 0
          %v1977 = vsel %vm939, %v1916, 0
          %v1980 = vsel %vm939, %v1917, 0
          %1982 = vmatprep.subr.mxu0 0.0
          %1983 = vmatpush1.xpose.msra.mxu0 %v1935
          %1984 = vmatprep.subr.mxu0 0.0
          %1985 = vmatpush1.xpose.msra.mxu0 %v1938
          %1986 = vmatprep.subr.mxu0 0.0
          %1987 = vmatpush1.xpose.msra.mxu0 %v1941
          %1988 = vmatprep.subr.mxu0 0.0
          %1989 = vmatpush1.xpose.msra.mxu0 %v1944
          %1990 = vmatprep.subr.mxu0 0.0
          %1991 = vmatpush1.xpose.msra.mxu0 %v1947
          %1992 = vmatprep.subr.mxu0 0.0
          %1993 = vmatpush1.xpose.msra.mxu0 %v1950
          %1994 = vmatprep.subr.mxu0 0.0
          %1995 = vmatpush1.xpose.msra.mxu0 %v1953
          %1996 = vmatprep.subr.mxu0 0.0
          %1997 = vmatpush1.xpose.msra.mxu0 %v1956
          %1998 = vmatprep.subr.mxu0 0.0
          %1999 = vmatpush1.xpose.msra.mxu0 %v1959
          %2000 = vmatprep.subr.mxu0 0.0
          %2001 = vmatpush1.xpose.msra.mxu0 %v1962
          %2002 = vmatprep.subr.mxu0 0.0
          %2003 = vmatpush1.xpose.msra.mxu0 %v1965
          %2004 = vmatprep.subr.mxu0 0.0
          %2005 = vmatpush1.xpose.msra.mxu0 %v1968
          %2006 = vmatprep.subr.mxu0 0.0
          %2007 = vmatpush1.xpose.msra.mxu0 %v1971
          %2008 = vmatprep.subr.mxu0 0.0
          %2009 = vmatpush1.xpose.msra.mxu0 %v1974
          %2010 = vmatprep.subr.mxu0 0.0
          %2011 = vmatpush1.xpose.msra.mxu0 %v1977
          %2012 = vmatprep.subr.mxu0 0.0
          %2013 = vmatpush1.xpose.msra.mxu0 %v1980
          %2014 = vmatprep.subr.mxu0 0.0
          %2015 = vmatpush1.xpose.msra.mxu0 0.0
          %2016 = vmatprep.subr.mxu0 0.0
          %2017 = vmatpush1.xpose.msra.mxu0 0.0
          %2018 = vmatprep.subr.mxu0 0.0
          %2019 = vmatpush1.xpose.msra.mxu0 0.0
          %2020 = vmatprep.subr.mxu0 0.0
          %2021 = vmatpush1.xpose.msra.mxu0 0.0
          %2022 = vmatprep.subr.mxu0 0.0
          %2023 = vmatpush1.xpose.msra.mxu0 0.0
          %2024 = vmatprep.subr.mxu0 0.0
          %2025 = vmatpush1.xpose.msra.mxu0 0.0
          %2026 = vmatprep.subr.mxu0 0.0
          %2027 = vmatpush1.xpose.msra.mxu0 0.0
          %2028 = vmatprep.subr.mxu0 0.0
          %2029 = vmatpush1.xpose.msra.mxu0 0.0
          %2030 = vmatprep.subr.mxu0 0.0
          %2031 = vmatpush1.xpose.msra.mxu0 0.0
          %2032 = vmatprep.subr.mxu0 0.0
          %2033 = vmatpush1.xpose.msra.mxu0 0.0
          %2034 = vmatprep.subr.mxu0 0.0
          %2035 = vmatpush1.xpose.msra.mxu0 0.0
          %2036 = vmatprep.subr.mxu0 0.0
          %2037 = vmatpush1.xpose.msra.mxu0 0.0
          %2038 = vmatprep.subr.mxu0 0.0
          %2039 = vmatpush1.xpose.msra.mxu0 0.0
          %2040 = vmatprep.subr.mxu0 0.0
          %2041 = vmatpush1.xpose.msra.mxu0 0.0
          %2042 = vmatprep.subr.mxu0 0.0
          %2043 = vmatpush1.xpose.msra.mxu0 0.0
          %2044 = vmatprep.subr.mxu0 0.0
          %2045 = vmatpush1.xpose.msra.mxu0 0.0
          %2046 = vmatprep.mubr.f32.mxu0 0.0
          %2047 = vmatmul.mubr.f32.gmra.mrb[0].mxu0 %v1929
          %v2048 = vpop.f32.mrb[0].mxu0
          %v2049 = vadd.f32 %v1921, %v2048
          %v2050 = vpop.f32.mrb[0].mxu0
          %2051 = vmatprep.mubr.f32.mxu0 0.0
          %2052 = vmatmul.mubr.f32.gmra.mrb[0].mxu0 %v1932
          %v2053 = vpop.f32.mrb[0].mxu0
          %v2054 = vadd.f32 %v1926, %v2053
          %v2055 = vpop.f32.mrb[0].mxu0
          %2056 = vdwg.mxu0
          %v2057 = vld [vmem:[#allocation2] sm:$0xff]
          %v2058 = vld [vmem:[#allocation2 + $0x8] sm:$0xff]
          %v2059 = vadd.f32 %v2057, %v2049
          %v2060 = vadd.f32 %v2058, %v2054
          %v2061 = vadd.f32 %v2059, %v2060
          %v2062 = vrot.slane %v2061, 4
          %v2063 = vadd.f32 %v2061, %v2062
          %v2064 = vrot.slane %v2063, 2
          %v2065 = vadd.f32 %v2063, %v2064
          %v2066 = vrot.slane %v2065, 1
          %v2067 = vadd.f32 %v2065, %v2066
          %v2068 = vmul.f32 %v2067, %v877
          %v2069 = vsub.f32 %v2059, %v2068
          %v2070 = vsub.f32 %v2060, %v2068
          %v2071 = vmul.f32 %v2069, %v2069
          %v2072 = vmul.f32 %v2070, %v2070
          %v2073 = vadd.f32 %v2071, %v2072
          %v2074 = vrot.slane %v2073, 4
          %v2075 = vadd.f32 %v2073, %v2074
          %v2076 = vrot.slane %v2075, 2
          %v2077 = vadd.f32 %v2075, %v2076
          %v2078 = vrot.slane %v2077, 1
          %v2079 = vadd.f32 %v2077, %v2078
          %v2080 = vmul.f32 %v2079, %v877
          %v2081 = vadd.f32 %v2080, 1e-05
          %v2082 = vrsqrt.pop %v2081
          %v2083 = vmul.f32 %v2069, %v2082
          %v2084 = vmul.f32 %v2070, %v2082
          %2086 = vset.pattern.permute.xlu0 0
          %2087 = vperm.xlu0 %2086, %v424
          %v2088 = vpop.permute.xlu0 %2087
          %2091 = vset.pattern.permute.xlu0 0
          %2092 = vperm.xlu0 %2091, %v425
          %v2093 = vpop.permute.xlu0 %2092
          %v2095 = vmul.f32 %v2083, %v2088
          %v2096 = vmul.f32 %v2084, %v2093
          %2098 = vset.pattern.permute.xlu0 0
          %2099 = vperm.xlu0 %2098, %v426
          %v2100 = vpop.permute.xlu0 %2099
          %2103 = vset.pattern.permute.xlu0 0
          %2104 = vperm.xlu0 %2103, %v427
          %v2105 = vpop.permute.xlu0 %2104
          %v2107 = vadd.f32 %v2095, %v2100
          %v2108 = vadd.f32 %v2096, %v2105
          %2110 = vset.pattern.permute.xlu0 0
          %2111 = vperm.xlu0 %2110, %v409
          %v2112 = vpop.permute.xlu0 %2111
          %2115 = vset.pattern.permute.xlu0 0
          %2116 = vperm.xlu0 %2115, %v410
          %v2117 = vpop.permute.xlu0 %2116
          %2120 = vset.pattern.permute.xlu0 0
          %2121 = vperm.xlu0 %2120, %v411
          %v2122 = vpop.permute.xlu0 %2121
          %2125 = vset.pattern.permute.xlu0 0
          %2126 = vperm.xlu0 %2125, %v412
          %v2127 = vpop.permute.xlu0 %2126
          %2130 = vset.pattern.permute.xlu0 0
          %2131 = vperm.xlu0 %2130, %v413
          %v2132 = vpop.permute.xlu0 %2131
          %2135 = vset.pattern.permute.xlu0 0
          %2136 = vperm.xlu0 %2135, %v414
          %v2137 = vpop.permute.xlu0 %2136
          %2140 = vset.pattern.permute.xlu0 0
          %2141 = vperm.xlu0 %2140, %v415
          %v2142 = vpop.permute.xlu0 %2141
          %2145 = vset.pattern.permute.xlu0 0
          %2146 = vperm.xlu0 %2145, %v416
          %v2147 = vpop.permute.xlu0 %2146
          %v2150 = vsel %vm939, %v388, 0
          %v2153 = vsel %vm939, %v389, 0
          %v2156 = vsel %vm939, %v390, 0
          %v2159 = vsel %vm939, %v391, 0
          %v2162 = vsel %vm939, %v392, 0
          %v2165 = vsel %vm939, %v393, 0
          %v2168 = vsel %vm939, %v394, 0
          %v2171 = vsel %vm939, %v395, 0
          %2173 = vmatprep.subr.mxu0 0.0
          %2174 = vmatpush1.msra.mxu0 %v2107
          %2175 = vmatprep.subr.mxu0 0.0
          %2176 = vmatpush1.msra.mxu0 %v2108
          %2177 = vmatprep.subr.mxu0 0.0
          %2178 = vmatpush1.msra.mxu0 0.0
          %2179 = vmatprep.subr.mxu0 0.0
          %2180 = vmatpush1.msra.mxu0 0.0
          %2181 = vmatprep.subr.mxu0 0.0
          %2182 = vmatpush1.msra.mxu0 0.0
          %2183 = vmatprep.subr.mxu0 0.0
          %2184 = vmatpush1.msra.mxu0 0.0
          %2185 = vmatprep.subr.mxu0 0.0
          %2186 = vmatpush1.msra.mxu0 0.0
          %2187 = vmatprep.subr.mxu0 0.0
          %2188 = vmatpush1.msra.mxu0 0.0
          %2189 = vmatprep.subr.mxu0 0.0
          %2190 = vmatpush1.msra.mxu0 0.0
          %2191 = vmatprep.subr.mxu0 0.0
          %2192 = vmatpush1.msra.mxu0 0.0
          %2193 = vmatprep.subr.mxu0 0.0
          %2194 = vmatpush1.msra.mxu0 0.0
          %2195 = vmatprep.subr.mxu0 0.0
          %2196 = vmatpush1.msra.mxu0 0.0
          %2197 = vmatprep.subr.mxu0 0.0
          %2198 = vmatpush1.msra.mxu0 0.0
          %2199 = vmatprep.subr.mxu0 0.0
          %2200 = vmatpush1.msra.mxu0 0.0
          %2201 = vmatprep.subr.mxu0 0.0
          %2202 = vmatpush1.msra.mxu0 0.0
          %2203 = vmatprep.subr.mxu0 0.0
          %2204 = vmatpush1.msra.mxu0 0.0
          %2205 = vmatprep.subr.mxu0 0.0
          %2206 = vmatpush1.msra.mxu0 0.0
          %2207 = vmatprep.subr.mxu0 0.0
          %2208 = vmatpush1.msra.mxu0 0.0
          %2209 = vmatprep.subr.mxu0 0.0
          %2210 = vmatpush1.msra.mxu0 0.0
          %2211 = vmatprep.subr.mxu0 0.0
          %2212 = vmatpush1.msra.mxu0 0.0
          %2213 = vmatprep.subr.mxu0 0.0
          %2214 = vmatpush1.msra.mxu0 0.0
          %2215 = vmatprep.subr.mxu0 0.0
          %2216 = vmatpush1.msra.mxu0 0.0
          %2217 = vmatprep.subr.mxu0 0.0
          %2218 = vmatpush1.msra.mxu0 0.0
          %2219 = vmatprep.subr.mxu0 0.0
          %2220 = vmatpush1.msra.mxu0 0.0
          %2221 = vmatprep.subr.mxu0 0.0
          %2222 = vmatpush1.msra.mxu0 0.0
          %2223 = vmatprep.subr.mxu0 0.0
          %2224 = vmatpush1.msra.mxu0 0.0
          %2225 = vmatprep.subr.mxu0 0.0
          %2226 = vmatpush1.msra.mxu0 0.0
          %2227 = vmatprep.subr.mxu0 0.0
          %2228 = vmatpush1.msra.mxu0 0.0
          %2229 = vmatprep.subr.mxu0 0.0
          %2230 = vmatpush1.msra.mxu0 0.0
          %2231 = vmatprep.subr.mxu0 0.0
          %2232 = vmatpush1.msra.mxu0 0.0
          %2233 = vmatprep.subr.mxu0 0.0
          %2234 = vmatpush1.msra.mxu0 0.0
          %2235 = vmatprep.subr.mxu0 0.0
          %2236 = vmatpush1.msra.mxu0 0.0
          %2237 = vmatprep.mubr.f32.mxu0 0.0
          %2238 = vmatmul.mubr.f32.gmra.mrb[0].mxu0 %v2150
          %v2239 = vpop.f32.mrb[0].mxu0
          %v2240 = vadd.f32 %v2112, %v2239
          %v2241 = vpop.f32.mrb[0].mxu0
          %2242 = vmatprep.mubr.f32.mxu0 0.0
          %2243 = vmatmul.mubr.f32.gmra.mrb[0].mxu0 %v2153
          %v2244 = vpop.f32.mrb[0].mxu0
          %v2245 = vadd.f32 %v2117, %v2244
          %v2246 = vpop.f32.mrb[0].mxu0
          %2247 = vmatprep.mubr.f32.mxu0 0.0
          %2248 = vmatmul.mubr.f32.gmra.mrb[0].mxu0 %v2156
          %v2249 = vpop.f32.mrb[0].mxu0
          %v2250 = vadd.f32 %v2122, %v2249
          %v2251 = vpop.f32.mrb[0].mxu0
          %2252 = vmatprep.mubr.f32.mxu0 0.0
          %2253 = vmatmul.mubr.f32.gmra.mrb[0].mxu0 %v2159
          %v2254 = vpop.f32.mrb[0].mxu0
          %v2255 = vadd.f32 %v2127, %v2254
          %v2256 = vpop.f32.mrb[0].mxu0
          %2257 = vmatprep.mubr.f32.mxu0 0.0
          %2258 = vmatmul.mubr.f32.gmra.mrb[0].mxu0 %v2162
          %v2259 = vpop.f32.mrb[0].mxu0
          %v2260 = vadd.f32 %v2132, %v2259
          %v2261 = vpop.f32.mrb[0].mxu0
          %2262 = vmatprep.mubr.f32.mxu0 0.0
          %2263 = vmatmul.mubr.f32.gmra.mrb[0].mxu0 %v2165
          %v2264 = vpop.f32.mrb[0].mxu0
          %v2265 = vadd.f32 %v2137, %v2264
          %v2266 = vpop.f32.mrb[0].mxu0
          %2267 = vmatprep.mubr.f32.mxu0 0.0
          %2268 = vmatmul.mubr.f32.gmra.mrb[0].mxu0 %v2168
          %v2269 = vpop.f32.mrb[0].mxu0
          %v2270 = vadd.f32 %v2142, %v2269
          %v2271 = vpop.f32.mrb[0].mxu0
          %2272 = vmatprep.mubr.f32.mxu0 0.0
          %2273 = vmatmul.mubr.f32.gmra.mrb[0].mxu0 %v2171
          %v2274 = vpop.f32.mrb[0].mxu0
          %v2275 = vadd.f32 %v2147, %v2274
          %v2276 = vpop.f32.mrb[0].mxu0
          %2277 = vdwg.mxu0
          %v2278 = vmul.f32 %v2240, %v2240
          %v2279 = vmul.f32 %v2245, %v2245
          %v2280 = vmul.f32 %v2250, %v2250
          %v2281 = vmul.f32 %v2255, %v2255
          %v2282 = vmul.f32 %v2260, %v2260
          %v2283 = vmul.f32 %v2265, %v2265
          %v2284 = vmul.f32 %v2270, %v2270
          %v2285 = vmul.f32 %v2275, %v2275
          %v2286 = vmul.f32 %v2240, %v2278
          %v2287 = vmul.f32 %v2245, %v2279
          %v2288 = vmul.f32 %v2250, %v2280
          %v2289 = vmul.f32 %v2255, %v2281
          %v2290 = vmul.f32 %v2260, %v2282
          %v2291 = vmul.f32 %v2265, %v2283
          %v2292 = vmul.f32 %v2270, %v2284
          %v2293 = vmul.f32 %v2275, %v2285
          %v2294 = vmul.f32 %v2286, 0.044715
          %v2295 = vmul.f32 %v2287, 0.044715
          %v2296 = vmul.f32 %v2288, 0.044715
          %v2297 = vmul.f32 %v2289, 0.044715
          %v2298 = vmul.f32 %v2290, 0.044715
          %v2299 = vmul.f32 %v2291, 0.044715
          %v2300 = vmul.f32 %v2292, 0.044715
          %v2301 = vmul.f32 %v2293, 0.044715
          %v2302 = vadd.f32 %v2240, %v2294
          %v2303 = vadd.f32 %v2245, %v2295
          %v2304 = vadd.f32 %v2250, %v2296
          %v2305 = vadd.f32 %v2255, %v2297
          %v2306 = vadd.f32 %v2260, %v2298
          %v2307 = vadd.f32 %v2265, %v2299
          %v2308 = vadd.f32 %v2270, %v2300
          %v2309 = vadd.f32 %v2275, %v2301
          %v2310 = vmul.f32 %v2302, 0.7978846
          %v2311 = vmul.f32 %v2303, 0.7978846
          %v2312 = vmul.f32 %v2304, 0.7978846
          %v2313 = vmul.f32 %v2305, 0.7978846
          %v2314 = vmul.f32 %v2306, 0.7978846
          %v2315 = vmul.f32 %v2307, 0.7978846
          %v2316 = vmul.f32 %v2308, 0.7978846
          %v2317 = vmul.f32 %v2309, 0.7978846
          %v2318 = vtanh.pop %v2310
          %v2319 = vtanh.pop %v2311
          %v2320 = vtanh.pop %v2312
          %v2321 = vtanh.pop %v2313
          %v2322 = vtanh.pop %v2314
          %v2323 = vtanh.pop %v2315
          %v2324 = vtanh.pop %v2316
          %v2325 = vtanh.pop %v2317
          %v2326 = vadd.f32 %v2318, 1.0
          %v2327 = vadd.f32 %v2319, 1.0
          %v2328 = vadd.f32 %v2320, 1.0
          %v2329 = vadd.f32 %v2321, 1.0
          %v2330 = vadd.f32 %v2322, 1.0
          %v2331 = vadd.f32 %v2323, 1.0
          %v2332 = vadd.f32 %v2324, 1.0
          %v2333 = vadd.f32 %v2325, 1.0
          %v2334 = vmul.f32 %v2326, 0.5
          %v2335 = vmul.f32 %v2327, 0.5
          %v2336 = vmul.f32 %v2328, 0.5
          %v2337 = vmul.f32 %v2329, 0.5
          %v2338 = vmul.f32 %v2330, 0.5
          %v2339 = vmul.f32 %v2331, 0.5
          %v2340 = vmul.f32 %v2332, 0.5
          %v2341 = vmul.f32 %v2333, 0.5
          %v2342 = vmul.f32 %v2240, %v2334
          %v2343 = vmul.f32 %v2245, %v2335
          %v2344 = vmul.f32 %v2250, %v2336
          %v2345 = vmul.f32 %v2255, %v2337
          %v2346 = vmul.f32 %v2260, %v2338
          %v2347 = vmul.f32 %v2265, %v2339
          %v2348 = vmul.f32 %v2270, %v2340
          %v2349 = vmul.f32 %v2275, %v2341
          %2351 = vset.pattern.permute.xlu0 0
          %2352 = vperm.xlu0 %2351, %v417
          %v2353 = vpop.permute.xlu0 %2352
          %2356 = vset.pattern.permute.xlu0 0
          %2357 = vperm.xlu0 %2356, %v418
          %v2358 = vpop.permute.xlu0 %2357
          %vm2360 = vcmask 523264
          %v2362 = vsel %vm2360, %v396, 0
          %v2365 = vsel %vm2360, %v397, 0
          %2367 = vmatprep.subr.mxu0 0.0
          %2368 = vmatpush1.msra.mxu0 %v2342
          %2369 = vmatprep.subr.mxu0 0.0
          %2370 = vmatpush1.msra.mxu0 %v2343
          %2371 = vmatprep.subr.mxu0 0.0
          %2372 = vmatpush1.msra.mxu0 %v2344
          %2373 = vmatprep.subr.mxu0 0.0
          %2374 = vmatpush1.msra.mxu0 %v2345
          %2375 = vmatprep.subr.mxu0 0.0
          %2376 = vmatpush1.msra.mxu0 %v2346
          %2377 = vmatprep.subr.mxu0 0.0
          %2378 = vmatpush1.msra.mxu0 %v2347
          %2379 = vmatprep.subr.mxu0 0.0
          %2380 = vmatpush1.msra.mxu0 %v2348
          %2381 = vmatprep.subr.mxu0 0.0
          %2382 = vmatpush1.msra.mxu0 %v2349
          %2383 = vmatprep.subr.mxu0 0.0
          %2384 = vmatpush1.msra.mxu0 0.0
          %2385 = vmatprep.subr.mxu0 0.0
          %2386 = vmatpush1.msra.mxu0 0.0
          %2387 = vmatprep.subr.mxu0 0.0
          %2388 = vmatpush1.msra.mxu0 0.0
          %2389 = vmatprep.subr.mxu0 0.0
          %2390 = vmatpush1.msra.mxu0 0.0
          %2391 = vmatprep.subr.mxu0 0.0
          %2392 = vmatpush1.msra.mxu0 0.0
          %2393 = vmatprep.subr.mxu0 0.0
          %2394 = vmatpush1.msra.mxu0 0.0
          %2395 = vmatprep.subr.mxu0 0.0
          %2396 = vmatpush1.msra.mxu0 0.0
          %2397 = vmatprep.subr.mxu0 0.0
          %2398 = vmatpush1.msra.mxu0 0.0
          %2399 = vmatprep.subr.mxu0 0.0
          %2400 = vmatpush1.msra.mxu0 0.0
          %2401 = vmatprep.subr.mxu0 0.0
          %2402 = vmatpush1.msra.mxu0 0.0
          %2403 = vmatprep.subr.mxu0 0.0
          %2404 = vmatpush1.msra.mxu0 0.0
          %2405 = vmatprep.subr.mxu0 0.0
          %2406 = vmatpush1.msra.mxu0 0.0
          %2407 = vmatprep.subr.mxu0 0.0
          %2408 = vmatpush1.msra.mxu0 0.0
          %2409 = vmatprep.subr.mxu0 0.0
          %2410 = vmatpush1.msra.mxu0 0.0
          %2411 = vmatprep.subr.mxu0 0.0
          %2412 = vmatpush1.msra.mxu0 0.0
          %2413 = vmatprep.subr.mxu0 0.0
          %2414 = vmatpush1.msra.mxu0 0.0
          %2415 = vmatprep.subr.mxu0 0.0
          %2416 = vmatpush1.msra.mxu0 0.0
          %2417 = vmatprep.subr.mxu0 0.0
          %2418 = vmatpush1.msra.mxu0 0.0
          %2419 = vmatprep.subr.mxu0 0.0
          %2420 = vmatpush1.msra.mxu0 0.0
          %2421 = vmatprep.subr.mxu0 0.0
          %2422 = vmatpush1.msra.mxu0 0.0
          %2423 = vmatprep.subr.mxu0 0.0
          %2424 = vmatpush1.msra.mxu0 0.0
          %2425 = vmatprep.subr.mxu0 0.0
          %2426 = vmatpush1.msra.mxu0 0.0
          %2427 = vmatprep.subr.mxu0 0.0
          %2428 = vmatpush1.msra.mxu0 0.0
          %2429 = vmatprep.subr.mxu0 0.0
          %2430 = vmatpush1.msra.mxu0 0.0
          %2431 = vmatprep.mubr.f32.mxu0 0.0
          %2432 = vmatmul.mubr.f32.gmra.mrb[0].mxu0 %v2362
          %v2433 = vpop.f32.mrb[0].mxu0
          %v2434 = vadd.f32 %v2353, %v2433
          %v2435 = vpop.f32.mrb[0].mxu0
          %2436 = vmatprep.mubr.f32.mxu0 0.0
          %2437 = vmatmul.mubr.f32.gmra.mrb[0].mxu0 %v2365
          %v2438 = vpop.f32.mrb[0].mxu0
          %v2439 = vadd.f32 %v2358, %v2438
          %v2440 = vpop.f32.mrb[0].mxu0
          %2441 = vdwg.mxu0
          %v2442 = vadd.f32 %v2059, %v2434
          %v2443 = vadd.f32 %v2060, %v2439
          %2445 = vset.pattern.permute.xlu0 0
          %2446 = vperm.xlu0 %2445, %v419
          %v2447 = vpop.permute.xlu0 %2446
          %v2450 = vsel %vm939, %v398, 0
          %2452 = vmatprep.subr.mxu0 0.0
          %2453 = vmatpush1.msra.mxu0 %v2442
          %2454 = vmatprep.subr.mxu0 0.0
          %2455 = vmatpush1.msra.mxu0 %v2443
          %2456 = vmatprep.subr.mxu0 0.0
          %2457 = vmatpush1.msra.mxu0 0.0
          %2458 = vmatprep.subr.mxu0 0.0
          %2459 = vmatpush1.msra.mxu0 0.0
          %2460 = vmatprep.subr.mxu0 0.0
          %2461 = vmatpush1.msra.mxu0 0.0
          %2462 = vmatprep.subr.mxu0 0.0
          %2463 = vmatpush1.msra.mxu0 0.0
          %2464 = vmatprep.subr.mxu0 0.0
          %2465 = vmatpush1.msra.mxu0 0.0
          %2466 = vmatprep.subr.mxu0 0.0
          %2467 = vmatpush1.msra.mxu0 0.0
          %2468 = vmatprep.subr.mxu0 0.0
          %2469 = vmatpush1.msra.mxu0 0.0
          %2470 = vmatprep.subr.mxu0 0.0
          %2471 = vmatpush1.msra.mxu0 0.0
          %2472 = vmatprep.subr.mxu0 0.0
          %2473 = vmatpush1.msra.mxu0 0.0
          %2474 = vmatprep.subr.mxu0 0.0
          %2475 = vmatpush1.msra.mxu0 0.0
          %2476 = vmatprep.subr.mxu0 0.0
          %2477 = vmatpush1.msra.mxu0 0.0
          %2478 = vmatprep.subr.mxu0 0.0
          %2479 = vmatpush1.msra.mxu0 0.0
          %2480 = vmatprep.subr.mxu0 0.0
          %2481 = vmatpush1.msra.mxu0 0.0
          %2482 = vmatprep.subr.mxu0 0.0
          %2483 = vmatpush1.msra.mxu0 0.0
          %2484 = vmatprep.subr.mxu0 0.0
          %2485 = vmatpush1.msra.mxu0 0.0
          %2486 = vmatprep.subr.mxu0 0.0
          %2487 = vmatpush1.msra.mxu0 0.0
          %2488 = vmatprep.subr.mxu0 0.0
          %2489 = vmatpush1.msra.mxu0 0.0
          %2490 = vmatprep.subr.mxu0 0.0
          %2491 = vmatpush1.msra.mxu0 0.0
          %2492 = vmatprep.subr.mxu0 0.0
          %2493 = vmatpush1.msra.mxu0 0.0
          %2494 = vmatprep.subr.mxu0 0.0
          %2495 = vmatpush1.msra.mxu0 0.0
          %2496 = vmatprep.subr.mxu0 0.0
          %2497 = vmatpush1.msra.mxu0 0.0
          %2498 = vmatprep.subr.mxu0 0.0
          %2499 = vmatpush1.msra.mxu0 0.0
          %2500 = vmatprep.subr.mxu0 0.0
          %2501 = vmatpush1.msra.mxu0 0.0
          %2502 = vmatprep.subr.mxu0 0.0
          %2503 = vmatpush1.msra.mxu0 0.0
          %2504 = vmatprep.subr.mxu0 0.0
          %2505 = vmatpush1.msra.mxu0 0.0
          %2506 = vmatprep.subr.mxu0 0.0
          %2507 = vmatpush1.msra.mxu0 0.0
          %2508 = vmatprep.subr.mxu0 0.0
          %2509 = vmatpush1.msra.mxu0 0.0
          %2510 = vmatprep.subr.mxu0 0.0
          %2511 = vmatpush1.msra.mxu0 0.0
          %2512 = vmatprep.subr.mxu0 0.0
          %2513 = vmatpush1.msra.mxu0 0.0
          %2514 = vmatprep.subr.mxu0 0.0
          %2515 = vmatpush1.msra.mxu0 0.0
          %2516 = vmatprep.mubr.f32.mxu0 0.0
          %2517 = vmatmul.mubr.f32.gmra.mrb[0].mxu0 %v2450
          %v2518 = vpop.f32.mrb[0].mxu0
          %v2519 = vadd.f32 %v2447, %v2518
          %v2520 = vpop.f32.mrb[0].mxu0
          %2521 = vdwg.mxu0
          %vm2522 = vcmask 1042432
          %v2523 = vsel %vm2522, %v2519, -inf
          %v2524 = vrot.slane %v2523, 4
          %v2525 = vmax.f32 %v2523, %v2524
          %v2526 = vrot.slane %v2525, 2
          %v2527 = vmax.f32 %v2525, %v2526
          %v2528 = vrot.slane %v2527, 1
          %v2529 = vmax.f32 %v2527, %v2528
          %v2530 = vsub.f32 %v2519, %v2529
          %v2531 = vmul.f32 %v2530, 1.442695
          %v2532 = vpow.pop %v2531
          %v2533 = vsel %vm2522, %v2532, 0.0
          %v2534 = vrot.slane %v2533, 4
          %v2535 = vadd.f32 %v2533, %v2534
          %v2536 = vrot.slane %v2535, 2
          %v2537 = vadd.f32 %v2535, %v2536
          %v2538 = vrot.slane %v2537, 1
          %v2539 = vadd.f32 %v2537, %v2538
          %v2540 = vrcp.pop %v2539
          %v2541 = vmul.f32 %v2532, %v2540
          %v2542 = vld [vmem:[%s314] sm:$0xff]
          %v2543 = vld [vmem:[%s314 + $0x8] sm:$0x1]
          %v2544 = vlaneseq
          %v2545 = vshrl.u32 %v2544, 7
          %v2546 = vsub.s32 0, %v2545
          %v2547 = vrot.slane %v2541, %v2546
          %v2548 = vmul.f32 %v2547, %v2542
          %v2549 = vlaneseq
          %v2550 = vshrl.u32 %v2549, 7
          %v2551 = vsub.s32 1, %v2550
          %v2552 = vrot.slane %v2541, %v2551
          %v2553 = vmul.f32 %v2552, %v2542
          %v2555 = vrot.slane %v2553, 3
          %v2557 = vadd.f32 %v2548, %v2555
          %v2558 = vlaneseq
          %v2559 = vshrl.u32 %v2558, 7
          %v2560 = vsub.s32 2, %v2559
          %v2561 = vrot.slane %v2541, %v2560
          %v2562 = vmul.f32 %v2561, %v2542
          %v2563 = vmul.f32 %v2561, %v2543
          %vm2566 = vcmask 1041408
          %v2567 = vrot.slane %v2562, 6
          %v2568 = vrot.slane %v2563, 6
          %v2569 = vsel %vm2566, %v2567, %v2568
          %v2571 = vadd.f32 %v2557, %v2569
          %2572 = vst [vmem:[%s368] sm:$0x7] %v2571
          %2573 = vst [vmem:[%s376] sm:$0x7] %v2541
        $region120: #{pdflab_net_forward.1} parent=103 // pred_fallthru
          _
        %p2574 = scmp.lt.s32.totalorder %s22, 1
        %s2575 = scalar_select %p2574, %s22, 1
        %p2576 = scmp.lt.s32.totalorder %s23, 1
        %s2577 = scalar_select %p2576, %s23, 1
        %s2578 = smul.addr %s2575, 2
        %s2579 = sadd.s32 %s2577, %s2578
        %s2580 = smul.addr %s2579, 4
        %s2581 = scalar_lea.vmem %s4, %s2580
        %p2582 = scmp.lt.s32.totalorder %s22, 1
        %s2583 = scalar_select %p2582, %s22, 1
        %p2584 = scmp.lt.s32.totalorder %s23, 1
        %s2585 = scalar_select %p2584, %s23, 1
        %s2586 = smul.addr %s2583, 2
        %s2587 = sadd.s32 %s2585, %s2586
        %s2588 = smul.addr %s2587, 4
        %s2589 = scalar_lea.vmem %s5, %s2588
        // Predicated region
        $region121: #{pdflab_net_forward.1} parent=103 // pred_check
          %p2590 = pneg %p154
        $region122: #{pdflab_net_forward.1} parent=103 // pred_check_branch
          %2592 = sbr.rel (%p2590) target = $region124
        $region123: #{pdflab_net_forward.1} parent=103 // pred_region
          _
        $region124: #{pdflab_net_forward.1} parent=103 // pred_fallthru
          _
        // Predicated region
        $region125: #{pdflab_net_forward.1} parent=103 // pred_check
          %p2593 = pneg %p182
        $region126: #{pdflab_net_forward.1} parent=103 // pred_check_branch
          %2595 = sbr.rel (%p2593) target = $region128
        $region127: #{pdflab_net_forward.1} parent=103 // pred_region
          _
        $region128: #{pdflab_net_forward.1} parent=103 // pred_fallthru
          _
      $region104: #{pdflab_net_forward.1} parent=5 // pred_fallthru
        _
      %p2596 = scmp.le.s32.totalorder 2, %s12
      // Predicated region
      $region129: #{pdflab_net_forward.1} parent=5 // pred_check
        %p2597 = pneg %p2596
      $region130: #{pdflab_net_forward.1} parent=5 // pred_check_branch
        %2599 = sbr.rel (%p2597) target = $region132
      $region131: #{pdflab_net_forward.1} parent=5 // pred_region
        %s2600 = ssub.s32 %s12, 2
        // Predicated region
        $region133: #{pdflab_net_forward.1} parent=131 // pred_check
          %p2601 = pneg %p160
        $region134: #{pdflab_net_forward.1} parent=131 // pred_check_branch
          %2603 = sbr.rel (%p2601) target = $region136
        $region135: #{pdflab_net_forward.1} parent=131 // pred_region
          %p2604 = scmp.lt.s32.totalorder %s25, 1
          %s2605 = scalar_select %p2604, %s25, 1
          %p2606 = scmp.lt.s32.totalorder %s26, 1
          %s2607 = scalar_select %p2606, %s26, 1
          %s2608 = smul.addr %s2605, 2
          %s2609 = sadd.s32 %s2607, %s2608
          %s2610 = smul.addr %s2609, 4
          %s2611 = scalar_lea.vmem %s4, %s2610
        $region136: #{pdflab_net_forward.1} parent=131 // pred_fallthru
          _
        // Predicated region
        $region137: #{pdflab_net_forward.1} parent=131 // pred_check
          %p2612 = pneg %p188
        $region138: #{pdflab_net_forward.1} parent=131 // pred_check_branch
          %2614 = sbr.rel (%p2612) target = $region140
        $region139: #{pdflab_net_forward.1} parent=131 // pred_region
          %p2615 = scmp.lt.s32.totalorder %s25, 1
          %s2616 = scalar_select %p2615, %s25, 1
          %p2617 = scmp.lt.s32.totalorder %s26, 1
          %s2618 = scalar_select %p2617, %s26, 1
          %s2619 = smul.addr %s2616, 2
          %s2620 = sadd.s32 %s2618, %s2619
          %s2621 = smul.addr %s2620, 4
          %s2622 = scalar_lea.vmem %s5, %s2621
        $region140: #{pdflab_net_forward.1} parent=131 // pred_fallthru
          _
      $region132: #{pdflab_net_forward.1} parent=5 // pred_fallthru
        _
    $region6: #{pdflab_net_forward.1} parent=1 // loop_footer
      %s16 = sadd.s32 1, %s12
    $region7: #{pdflab_net_forward.1} parent=1 // loop_footer_branch
      %11 = sbr.rel target = $region3
    $region8: #{pdflab_net_forward.1} parent=1 // loop_exit
      _

</llo_original>
